<compile_context>
chip_gen: v7x
topology: tpu7x:2x2x1
jax: 0.10.0
libtpu: 0.0.40
codegen_flags: <defaults>
</compile_context>

<pallas_src>
import jax
import jax.numpy as jnp
from jax.experimental import pallas as pl
from jax.experimental.pallas import tpu as pltpu


# ---------------------------------------------------------------------------
# In-kernel helpers.
# ---------------------------------------------------------------------------
def _shift_flat(a, delta, size):
    """out[..., n] = a[..., (n + delta) % size]  (lane rotation via slice+concat).

    Wrapped-in values are always multiplied by a zero border mask afterwards,
    so only the non-wrapping part carries meaning.
    """
    s = delta % size
    if s == 0:
        return a
    return jnp.concatenate([a[:, s:], a[:, :s]], axis=1)


def _make_kernel(C, Np, deltas):
    M1 = 2 * C + 4  # packed rows: [q (C); k (C); xg_from_x (2); pg_from_p (2)]

    def kernel(x_ref, p_ref, mask_ref, w1_ref, bqk_ref, w2_ref, bg_ref,
               xout_ref, pout_ref):
        f32 = jnp.float32
        x = x_ref[0]                                 # (C, Np) f32
        p = p_ref[0]                                 # (C, Np) f32
        masks = mask_ref[...]                        # (9, Np) f32 border masks
        xp = jnp.concatenate([x, p], axis=0)         # (2C, Np)

        # --- Phase 1: per-tap block-diagonal matmul accumulates q, k and the
        #     x / p halves of both gamma convs in one MXU dot per tap. -------
        acc1 = jnp.zeros((M1, Np), f32)
        for t in range(9):
            rhs = (_shift_flat(xp, deltas[t], Np)
                   * masks[t:t + 1, :]).astype(jnp.bfloat16)
            acc1 = acc1 + jnp.dot(w1_ref[t], rhs, preferred_element_type=f32)

        bqk = bqk_ref[...]                           # (2C, 1) f32
        q = acc1[0:C] + bqk[0:C]
        k = acc1[C:2 * C] + bqk[C:2 * C]
        xg_x = acc1[2 * C:2 * C + 2]                 # gamma1 applied to x half
        pg_p = acc1[2 * C + 2:2 * C + 4]             # gamma2 applied to p half

        att = 1.0 / (1.0 + jnp.exp(-(q * k)))        # f32 sigmoid (EUP exp)
        ax = x * att
        ap = p * att

        # --- Phase 2: gamma convs on the ax/ap halves, one packed dot/tap. --
        aap = jnp.concatenate([ax, ap], axis=0)      # (2C, Np) f32
        acc2 = jnp.zeros((4, Np), f32)
        for t in range(9):
            rhs = (_shift_flat(aap, deltas[t], Np)
                   * masks[t:t + 1, :]).astype(jnp.bfloat16)
            acc2 = acc2 + jnp.dot(w2_ref[t], rhs, preferred_element_type=f32)

        bg = bg_ref[...]                             # (4, 1) f32
        xg = xg_x + acc2[0:2] + bg[0:2]              # (2, Np)
        pg = pg_p + acc2[2:4] + bg[2:4]              # (2, Np)

        xout_ref[0] = (x * xg[0:1] + ax * xg[1:2]).astype(xout_ref.dtype)
        pout_ref[0] = (p * pg[0:1] + ap * pg[1:2]).astype(pout_ref.dtype)

    return kernel


# ---------------------------------------------------------------------------
# Wrapper-side packing (weights, biases, border masks).
# ---------------------------------------------------------------------------
def _pack_params(params, C, compute_dtype):
    wq, bq, wk, bk, wg1, bg1, wg2, bg2 = params
    M1 = 2 * C + 4
    w1 = jnp.zeros((9, M1, 2 * C), jnp.float32)
    w2 = jnp.zeros((9, 4, 2 * C), jnp.float32)
    for t in range(9):
        ky, kx = t // 3, t % 3
        w1 = w1.at[t, 0:C, 0:C].set(wq[:, :, ky, kx])
        w1 = w1.at[t, C:2 * C, C:2 * C].set(wk[:, :, ky, kx])
        w1 = w1.at[t, 2 * C:2 * C + 2, 0:C].set(wg1[:, :C, ky, kx])
        w1 = w1.at[t, 2 * C + 2:2 * C + 4, C:2 * C].set(wg2[:, :C, ky, kx])
        w2 = w2.at[t, 0:2, 0:C].set(wg1[:, C:, ky, kx])
        w2 = w2.at[t, 2:4, C:2 * C].set(wg2[:, C:, ky, kx])
    bqk = jnp.concatenate([bq, bk]).reshape(2 * C, 1).astype(jnp.float32)
    bg = jnp.concatenate([bg1, bg2]).reshape(4, 1).astype(jnp.float32)
    return w1.astype(compute_dtype), bqk, w2.astype(compute_dtype), bg


def _make_masks(H, W, Np):
    """masks[t, n] = 1 iff the tap-t neighbour of flat position n is in-bounds."""
    N = H * W
    n = jnp.arange(Np)
    hh = n // W
    ww = n % W
    valid = n < N
    rows = []
    for t in range(9):
        dy, dx = t // 3 - 1, t % 3 - 1
        m = (valid & (hh + dy >= 0) & (hh + dy < H)
             & (ww + dx >= 0) & (ww + dx < W))
        rows.append(m)
    return jnp.stack(rows, axis=0).astype(jnp.float32)    # (9, Np)


# ---------------------------------------------------------------------------
# Forward pass.
# ---------------------------------------------------------------------------
def fuse_forward(x, prior, params, *, compute_dtype=jnp.bfloat16):
    """x, prior: (B, C, H, W) float32 -> (x_out, prior_out) same shape."""
    B, C, H, W = x.shape
    N = H * W
    Np = max(128, ((N + 127) // 128) * 128)       # lane-dense flattened extent
    pad = Np - N
    f32 = jnp.float32

    xf = jnp.pad(x.reshape(B, C, N).astype(f32), ((0, 0), (0, 0), (0, pad)))
    pf = jnp.pad(prior.reshape(B, C, N).astype(f32), ((0, 0), (0, 0), (0, pad)))

    masks = _make_masks(H, W, Np)
    w1, bqk, w2, bg = _pack_params(params, C, compute_dtype)
    deltas = tuple((t // 3 - 1) * W + (t % 3 - 1) for t in range(9))
    M1 = 2 * C + 4

    kernel = _make_kernel(C, Np, deltas)

    io_spec = pl.BlockSpec((1, C, Np), lambda b: (b, 0, 0))

    def const_spec(shape):
        return pl.BlockSpec(shape, lambda b, _s=shape: (0,) * len(_s))

    # VMEM-aware scoped limit (only raised when the defaults would be short).
    vmem_est = (4 * 2 * C * Np * 4                 # in/out blocks, double-buffered
                + (12 * C + M1 + 16) * Np * 4)     # live in-kernel temporaries
    cparams = dict(dimension_semantics=("parallel",))
    if vmem_est > 24 * 1024 * 1024:
        cparams["vmem_limit_bytes"] = min(int(1.5 * vmem_est), 96 * 1024 * 1024)

    x_out, p_out = pl.pallas_call(
        kernel,
        out_shape=(jax.ShapeDtypeStruct((B, C, Np), f32),
                   jax.ShapeDtypeStruct((B, C, Np), f32)),
        grid_spec=pltpu.PrefetchScalarGridSpec(
            num_scalar_prefetch=0,
            grid=(B,),
            in_specs=[io_spec, io_spec,
                      const_spec((9, Np)),
                      const_spec((9, M1, 2 * C)),
                      const_spec((2 * C, 1)),
                      const_spec((9, 4, 2 * C)),
                      const_spec((4, 1))],
            out_specs=[io_spec, io_spec],
        ),
        compiler_params=pltpu.CompilerParams(**cparams),
    )(xf, pf, masks, w1, bqk, w2, bg)

    x_out = x_out[:, :, :N].reshape(B, C, H, W)
    p_out = p_out[:, :, :N].reshape(B, C, H, W)
    return x_out, p_out


# ---------------------------------------------------------------------------
# Pure-JAX reference (mirrors the kernel's precision: bf16 conv operands,
# f32 accumulation, f32 elementwise), matching FuseModule semantics.
# ---------------------------------------------------------------------------
def _im2col(x):
    B, C, H, W = x.shape
    xp = jnp.pad(x, ((0, 0), (0, 0), (1, 1), (1, 1)))
    cols = [xp[:, :, dy:dy + H, dx:dx + W] for dy in range(3) for dx in range(3)]
    return jnp.stack(cols, axis=1).reshape(B, 9 * C, H * W)


def _flatten_w(w):
    return jnp.transpose(w, (0, 2, 3, 1)).reshape(w.shape[0], -1)


def ref_forward(x, prior, params, *, compute_dtype=jnp.bfloat16):
    wq, bq, wk, bk, wg1, bg1, wg2, bg2 = params

    def conv3x3(inp, w, b):
        Bn, _, H, W = inp.shape
        col = _im2col(inp).astype(compute_dtype)
        wf = _flatten_w(w).astype(compute_dtype)
        y = jnp.einsum('ok,bkn->bon', wf, col, preferred_element_type=jnp.float32)
        y = y + b.astype(jnp.float32)[None, :, None]
        return y.reshape(Bn, w.shape[0], H, W)

    xq = conv3x3(x, wq, bq)
    pk = conv3x3(prior, wk, bk)
    att = 1.0 / (1.0 + jnp.exp(-(xq * pk)))
    ax = x * att
    ap = prior * att
    xg = conv3x3(jnp.concatenate([x, ax], axis=1), wg1, bg1)
    pg = conv3x3(jnp.concatenate([prior, ap], axis=1), wg2, bg2)
    x_out = x * xg[:, 0:1] + ax * xg[:, 1:2]
    p_out = prior * pg[:, 0:1] + ap * pg[:, 1:2]
    return x_out, p_out


def init_params(key, in_dim):
    """Deterministic synthetic Conv2d(k=3, pad=1) weights, PyTorch layout."""
    ks = jax.random.split(key, 8)

    def conv_w(k, o, i):
        return jax.random.normal(k, (o, i, 3, 3), jnp.float32) / jnp.sqrt(jnp.float32(i * 9))

    def conv_b(k, o):
        return jax.random.normal(k, (o,), jnp.float32) * 0.1

    wq, bq = conv_w(ks[0], in_dim, in_dim), conv_b(ks[1], in_dim)
    wk, bk = conv_w(ks[2], in_dim, in_dim), conv_b(ks[3], in_dim)
    wg1, bg1 = conv_w(ks[4], 2, 2 * in_dim), conv_b(ks[5], 2)
    wg2, bg2 = conv_w(ks[6], 2, 2 * in_dim), conv_b(ks[7], 2)
    return (wq, bq, wk, bk, wg1, bg1, wg2, bg2)


if __name__ == "__main__":
    key = jax.random.PRNGKey(0)

    def run_case(case_key, Bn, C, H, W):
        kx, kp, kw = jax.random.split(case_key, 3)
        x = jax.random.normal(kx, (Bn, C, H, W), jnp.float32)
        prior = jax.random.normal(kp, (Bn, C, H, W), jnp.float32)
        params = init_params(kw, C)

        out = jax.block_until_ready(fuse_forward(x, prior, params))
        ref = jax.block_until_ready(ref_forward(x, prior, params))

        for o, r, name in zip(out, ref, ("x_out", "prior_out")):
            assert o.shape == (Bn, C, H, W)
            assert jnp.allclose(o, r, atol=2e-3, rtol=2e-3), f"{name} mismatch vs reference"

    k1, k2 = jax.random.split(key)
    run_case(k1, 2, 32, 16, 16)   # primary shape
    run_case(k2, 2, 16, 7, 9)     # non-multiple-of-128 spatial (padding/mask path)

    print("KERNEL_OK")
</pallas_src>

<mosaic_0001>
module attributes {stable_mosaic.version = 11 : i64} {
  func.func @kernel(%arg0: i32, %arg1: memref<1x32x256xf32, #tpu.memory_space<vmem>>, %arg2: memref<1x32x256xf32, #tpu.memory_space<vmem>>, %arg3: memref<9x256xf32, #tpu.memory_space<vmem>>, %arg4: memref<9x68x64xbf16, #tpu.memory_space<vmem>>, %arg5: memref<64x1xf32, #tpu.memory_space<vmem>>, %arg6: memref<9x4x64xbf16, #tpu.memory_space<vmem>>, %arg7: memref<4x1xf32, #tpu.memory_space<vmem>>, %arg8: memref<1x32x256xf32, #tpu.memory_space<vmem>>, %arg9: memref<1x32x256xf32, #tpu.memory_space<vmem>>) attributes {dimension_semantics = [#tpu.dimension_semantics<parallel>], iteration_bounds = array<i64: 2>, scalar_prefetch = 0 : i64, scratch_operands = 0 : i64, tpu.core_type = #tpu.core_type<tc>, window_params = [{transform_indices = @transform_0, window_bounds = array<i64: 1, 32, 256>}, {transform_indices = @transform_1, window_bounds = array<i64: 1, 32, 256>}, {pipeline_mode = #tpu.pipeline_mode<synchronous>, transform_indices = @transform_2, window_bounds = array<i64: 9, 256>}, {pipeline_mode = #tpu.pipeline_mode<synchronous>, transform_indices = @transform_3, window_bounds = array<i64: 9, 68, 64>}, {pipeline_mode = #tpu.pipeline_mode<synchronous>, transform_indices = @transform_4, window_bounds = array<i64: 64, 1>}, {pipeline_mode = #tpu.pipeline_mode<synchronous>, transform_indices = @transform_5, window_bounds = array<i64: 9, 4, 64>}, {pipeline_mode = #tpu.pipeline_mode<synchronous>, transform_indices = @transform_6, window_bounds = array<i64: 4, 1>}, {transform_indices = @transform_7, window_bounds = array<i64: 1, 32, 256>}, {transform_indices = @transform_8, window_bounds = array<i64: 1, 32, 256>}]} {
    %c0 = arith.constant 0 : index
    %c0_0 = arith.constant 0 : index
    %c0_1 = arith.constant 0 : index
    %0 = vector.load %arg1[%c0, %c0_0, %c0_1] : memref<1x32x256xf32, #tpu.memory_space<vmem>>, vector<1x32x256xf32>
    %1 = vector.shape_cast %0 : vector<1x32x256xf32> to vector<32x256xf32>
    %c0_2 = arith.constant 0 : index
    %c0_3 = arith.constant 0 : index
    %c0_4 = arith.constant 0 : index
    %2 = vector.load %arg2[%c0_2, %c0_3, %c0_4] : memref<1x32x256xf32, #tpu.memory_space<vmem>>, vector<1x32x256xf32>
    %3 = vector.shape_cast %2 : vector<1x32x256xf32> to vector<32x256xf32>
    %c0_5 = arith.constant 0 : index
    %c0_6 = arith.constant 0 : index
    %4 = vector.load %arg3[%c0_5, %c0_6] : memref<9x256xf32, #tpu.memory_space<vmem>>, vector<9x256xf32>
    %5 = tpu.concatenate %1, %3 in 0 : vector<32x256xf32>, vector<32x256xf32> -> vector<64x256xf32>
    %cst = arith.constant 0.000000e+00 : f32
    %6 = vector.broadcast %cst : f32 to vector<68x256xf32>
    %7 = vector.extract_strided_slice %5 {offsets = [0, 239], sizes = [64, 17], strides = [1, 1]} : vector<64x256xf32> to vector<64x17xf32>
    %8 = vector.extract_strided_slice %5 {offsets = [0, 0], sizes = [64, 239], strides = [1, 1]} : vector<64x256xf32> to vector<64x239xf32>
    %9 = tpu.concatenate %7, %8 in 1 : vector<64x17xf32>, vector<64x239xf32> -> vector<64x256xf32>
    %10 = vector.extract_strided_slice %4 {offsets = [0, 0], sizes = [1, 256], strides = [1, 1]} : vector<9x256xf32> to vector<1x256xf32>
    %11 = vector.broadcast %10 : vector<1x256xf32> to vector<64x256xf32>
    %12 = arith.mulf %9, %11 : vector<64x256xf32>
    %13 = arith.truncf %12 : vector<64x256xf32> to vector<64x256xbf16>
    %c0_7 = arith.constant 0 : index
    %c0_8 = arith.constant 0 : index
    %c0_9 = arith.constant 0 : index
    %14 = vector.load %arg4[%c0_7, %c0_8, %c0_9] : memref<9x68x64xbf16, #tpu.memory_space<vmem>>, vector<1x68x64xbf16>
    %15 = vector.shape_cast %14 : vector<1x68x64xbf16> to vector<68x64xbf16>
    %cst_10 = arith.constant dense<0.000000e+00> : vector<68x256xf32>
    %16 = tpu.matmul %15, %13, %cst_10 {dimension_numbers = #tpu.dot_dimension_numbers<[1], [0], [0], [1], [0, 0, 1, 1], [], []>} : vector<68x64xbf16>, vector<64x256xbf16>, vector<68x256xf32> -> vector<68x256xf32>
    %17 = arith.addf %6, %16 : vector<68x256xf32>
    %18 = vector.extract_strided_slice %5 {offsets = [0, 240], sizes = [64, 16], strides = [1, 1]} : vector<64x256xf32> to vector<64x16xf32>
    %19 = vector.extract_strided_slice %5 {offsets = [0, 0], sizes = [64, 240], strides = [1, 1]} : vector<64x256xf32> to vector<64x240xf32>
    %20 = tpu.concatenate %18, %19 in 1 : vector<64x16xf32>, vector<64x240xf32> -> vector<64x256xf32>
    %21 = vector.extract_strided_slice %4 {offsets = [1, 0], sizes = [1, 256], strides = [1, 1]} : vector<9x256xf32> to vector<1x256xf32>
    %22 = vector.broadcast %21 : vector<1x256xf32> to vector<64x256xf32>
    %23 = arith.mulf %20, %22 : vector<64x256xf32>
    %24 = arith.truncf %23 : vector<64x256xf32> to vector<64x256xbf16>
    %c1 = arith.constant 1 : index
    %c0_11 = arith.constant 0 : index
    %c0_12 = arith.constant 0 : index
    %25 = vector.load %arg4[%c1, %c0_11, %c0_12] : memref<9x68x64xbf16, #tpu.memory_space<vmem>>, vector<1x68x64xbf16>
    %26 = vector.shape_cast %25 : vector<1x68x64xbf16> to vector<68x64xbf16>
    %cst_13 = arith.constant dense<0.000000e+00> : vector<68x256xf32>
    %27 = tpu.matmul %26, %24, %cst_13 {dimension_numbers = #tpu.dot_dimension_numbers<[1], [0], [0], [1], [0, 0, 1, 1], [], []>} : vector<68x64xbf16>, vector<64x256xbf16>, vector<68x256xf32> -> vector<68x256xf32>
    %28 = arith.addf %17, %27 : vector<68x256xf32>
    %29 = vector.extract_strided_slice %5 {offsets = [0, 241], sizes = [64, 15], strides = [1, 1]} : vector<64x256xf32> to vector<64x15xf32>
    %30 = vector.extract_strided_slice %5 {offsets = [0, 0], sizes = [64, 241], strides = [1, 1]} : vector<64x256xf32> to vector<64x241xf32>
    %31 = tpu.concatenate %29, %30 in 1 : vector<64x15xf32>, vector<64x241xf32> -> vector<64x256xf32>
    %32 = vector.extract_strided_slice %4 {offsets = [2, 0], sizes = [1, 256], strides = [1, 1]} : vector<9x256xf32> to vector<1x256xf32>
    %33 = vector.broadcast %32 : vector<1x256xf32> to vector<64x256xf32>
    %34 = arith.mulf %31, %33 : vector<64x256xf32>
    %35 = arith.truncf %34 : vector<64x256xf32> to vector<64x256xbf16>
    %c2 = arith.constant 2 : index
    %c0_14 = arith.constant 0 : index
    %c0_15 = arith.constant 0 : index
    %36 = vector.load %arg4[%c2, %c0_14, %c0_15] : memref<9x68x64xbf16, #tpu.memory_space<vmem>>, vector<1x68x64xbf16>
    %37 = vector.shape_cast %36 : vector<1x68x64xbf16> to vector<68x64xbf16>
    %cst_16 = arith.constant dense<0.000000e+00> : vector<68x256xf32>
    %38 = tpu.matmul %37, %35, %cst_16 {dimension_numbers = #tpu.dot_dimension_numbers<[1], [0], [0], [1], [0, 0, 1, 1], [], []>} : vector<68x64xbf16>, vector<64x256xbf16>, vector<68x256xf32> -> vector<68x256xf32>
    %39 = arith.addf %28, %38 : vector<68x256xf32>
    %40 = vector.extract_strided_slice %5 {offsets = [0, 255], sizes = [64, 1], strides = [1, 1]} : vector<64x256xf32> to vector<64x1xf32>
    %41 = vector.extract_strided_slice %5 {offsets = [0, 0], sizes = [64, 255], strides = [1, 1]} : vector<64x256xf32> to vector<64x255xf32>
    %42 = tpu.concatenate %40, %41 in 1 : vector<64x1xf32>, vector<64x255xf32> -> vector<64x256xf32>
    %43 = vector.extract_strided_slice %4 {offsets = [3, 0], sizes = [1, 256], strides = [1, 1]} : vector<9x256xf32> to vector<1x256xf32>
    %44 = vector.broadcast %43 : vector<1x256xf32> to vector<64x256xf32>
    %45 = arith.mulf %42, %44 : vector<64x256xf32>
    %46 = arith.truncf %45 : vector<64x256xf32> to vector<64x256xbf16>
    %c3 = arith.constant 3 : index
    %c0_17 = arith.constant 0 : index
    %c0_18 = arith.constant 0 : index
    %47 = vector.load %arg4[%c3, %c0_17, %c0_18] : memref<9x68x64xbf16, #tpu.memory_space<vmem>>, vector<1x68x64xbf16>
    %48 = vector.shape_cast %47 : vector<1x68x64xbf16> to vector<68x64xbf16>
    %cst_19 = arith.constant dense<0.000000e+00> : vector<68x256xf32>
    %49 = tpu.matmul %48, %46, %cst_19 {dimension_numbers = #tpu.dot_dimension_numbers<[1], [0], [0], [1], [0, 0, 1, 1], [], []>} : vector<68x64xbf16>, vector<64x256xbf16>, vector<68x256xf32> -> vector<68x256xf32>
    %50 = arith.addf %39, %49 : vector<68x256xf32>
    %51 = vector.extract_strided_slice %4 {offsets = [4, 0], sizes = [1, 256], strides = [1, 1]} : vector<9x256xf32> to vector<1x256xf32>
    %52 = vector.broadcast %51 : vector<1x256xf32> to vector<64x256xf32>
    %53 = arith.mulf %5, %52 : vector<64x256xf32>
    %54 = arith.truncf %53 : vector<64x256xf32> to vector<64x256xbf16>
    %c4 = arith.constant 4 : index
    %c0_20 = arith.constant 0 : index
    %c0_21 = arith.constant 0 : index
    %55 = vector.load %arg4[%c4, %c0_20, %c0_21] : memref<9x68x64xbf16, #tpu.memory_space<vmem>>, vector<1x68x64xbf16>
    %56 = vector.shape_cast %55 : vector<1x68x64xbf16> to vector<68x64xbf16>
    %cst_22 = arith.constant dense<0.000000e+00> : vector<68x256xf32>
    %57 = tpu.matmul %56, %54, %cst_22 {dimension_numbers = #tpu.dot_dimension_numbers<[1], [0], [0], [1], [0, 0, 1, 1], [], []>} : vector<68x64xbf16>, vector<64x256xbf16>, vector<68x256xf32> -> vector<68x256xf32>
    %58 = arith.addf %50, %57 : vector<68x256xf32>
    %59 = vector.extract_strided_slice %5 {offsets = [0, 1], sizes = [64, 255], strides = [1, 1]} : vector<64x256xf32> to vector<64x255xf32>
    %60 = vector.extract_strided_slice %5 {offsets = [0, 0], sizes = [64, 1], strides = [1, 1]} : vector<64x256xf32> to vector<64x1xf32>
    %61 = tpu.concatenate %59, %60 in 1 : vector<64x255xf32>, vector<64x1xf32> -> vector<64x256xf32>
    %62 = vector.extract_strided_slice %4 {offsets = [5, 0], sizes = [1, 256], strides = [1, 1]} : vector<9x256xf32> to vector<1x256xf32>
    %63 = vector.broadcast %62 : vector<1x256xf32> to vector<64x256xf32>
    %64 = arith.mulf %61, %63 : vector<64x256xf32>
    %65 = arith.truncf %64 : vector<64x256xf32> to vector<64x256xbf16>
    %c5 = arith.constant 5 : index
    %c0_23 = arith.constant 0 : index
    %c0_24 = arith.constant 0 : index
    %66 = vector.load %arg4[%c5, %c0_23, %c0_24] : memref<9x68x64xbf16, #tpu.memory_space<vmem>>, vector<1x68x64xbf16>
    %67 = vector.shape_cast %66 : vector<1x68x64xbf16> to vector<68x64xbf16>
    %cst_25 = arith.constant dense<0.000000e+00> : vector<68x256xf32>
    %68 = tpu.matmul %67, %65, %cst_25 {dimension_numbers = #tpu.dot_dimension_numbers<[1], [0], [0], [1], [0, 0, 1, 1], [], []>} : vector<68x64xbf16>, vector<64x256xbf16>, vector<68x256xf32> -> vector<68x256xf32>
    %69 = arith.addf %58, %68 : vector<68x256xf32>
    %70 = vector.extract_strided_slice %5 {offsets = [0, 15], sizes = [64, 241], strides = [1, 1]} : vector<64x256xf32> to vector<64x241xf32>
    %71 = vector.extract_strided_slice %5 {offsets = [0, 0], sizes = [64, 15], strides = [1, 1]} : vector<64x256xf32> to vector<64x15xf32>
    %72 = tpu.concatenate %70, %71 in 1 : vector<64x241xf32>, vector<64x15xf32> -> vector<64x256xf32>
    %73 = vector.extract_strided_slice %4 {offsets = [6, 0], sizes = [1, 256], strides = [1, 1]} : vector<9x256xf32> to vector<1x256xf32>
    %74 = vector.broadcast %73 : vector<1x256xf32> to vector<64x256xf32>
    %75 = arith.mulf %72, %74 : vector<64x256xf32>
    %76 = arith.truncf %75 : vector<64x256xf32> to vector<64x256xbf16>
    %c6 = arith.constant 6 : index
    %c0_26 = arith.constant 0 : index
    %c0_27 = arith.constant 0 : index
    %77 = vector.load %arg4[%c6, %c0_26, %c0_27] : memref<9x68x64xbf16, #tpu.memory_space<vmem>>, vector<1x68x64xbf16>
    %78 = vector.shape_cast %77 : vector<1x68x64xbf16> to vector<68x64xbf16>
    %cst_28 = arith.constant dense<0.000000e+00> : vector<68x256xf32>
    %79 = tpu.matmul %78, %76, %cst_28 {dimension_numbers = #tpu.dot_dimension_numbers<[1], [0], [0], [1], [0, 0, 1, 1], [], []>} : vector<68x64xbf16>, vector<64x256xbf16>, vector<68x256xf32> -> vector<68x256xf32>
    %80 = arith.addf %69, %79 : vector<68x256xf32>
    %81 = vector.extract_strided_slice %5 {offsets = [0, 16], sizes = [64, 240], strides = [1, 1]} : vector<64x256xf32> to vector<64x240xf32>
    %82 = vector.extract_strided_slice %5 {offsets = [0, 0], sizes = [64, 16], strides = [1, 1]} : vector<64x256xf32> to vector<64x16xf32>
    %83 = tpu.concatenate %81, %82 in 1 : vector<64x240xf32>, vector<64x16xf32> -> vector<64x256xf32>
    %84 = vector.extract_strided_slice %4 {offsets = [7, 0], sizes = [1, 256], strides = [1, 1]} : vector<9x256xf32> to vector<1x256xf32>
    %85 = vector.broadcast %84 : vector<1x256xf32> to vector<64x256xf32>
    %86 = arith.mulf %83, %85 : vector<64x256xf32>
    %87 = arith.truncf %86 : vector<64x256xf32> to vector<64x256xbf16>
    %c7 = arith.constant 7 : index
    %c0_29 = arith.constant 0 : index
    %c0_30 = arith.constant 0 : index
    %88 = vector.load %arg4[%c7, %c0_29, %c0_30] : memref<9x68x64xbf16, #tpu.memory_space<vmem>>, vector<1x68x64xbf16>
    %89 = vector.shape_cast %88 : vector<1x68x64xbf16> to vector<68x64xbf16>
    %cst_31 = arith.constant dense<0.000000e+00> : vector<68x256xf32>
    %90 = tpu.matmul %89, %87, %cst_31 {dimension_numbers = #tpu.dot_dimension_numbers<[1], [0], [0], [1], [0, 0, 1, 1], [], []>} : vector<68x64xbf16>, vector<64x256xbf16>, vector<68x256xf32> -> vector<68x256xf32>
    %91 = arith.addf %80, %90 : vector<68x256xf32>
    %92 = vector.extract_strided_slice %5 {offsets = [0, 17], sizes = [64, 239], strides = [1, 1]} : vector<64x256xf32> to vector<64x239xf32>
    %93 = vector.extract_strided_slice %5 {offsets = [0, 0], sizes = [64, 17], strides = [1, 1]} : vector<64x256xf32> to vector<64x17xf32>
    %94 = tpu.concatenate %92, %93 in 1 : vector<64x239xf32>, vector<64x17xf32> -> vector<64x256xf32>
    %95 = vector.extract_strided_slice %4 {offsets = [8, 0], sizes = [1, 256], strides = [1, 1]} : vector<9x256xf32> to vector<1x256xf32>
    %96 = vector.broadcast %95 : vector<1x256xf32> to vector<64x256xf32>
    %97 = arith.mulf %94, %96 : vector<64x256xf32>
    %98 = arith.truncf %97 : vector<64x256xf32> to vector<64x256xbf16>
    %c8 = arith.constant 8 : index
    %c0_32 = arith.constant 0 : index
    %c0_33 = arith.constant 0 : index
    %99 = vector.load %arg4[%c8, %c0_32, %c0_33] : memref<9x68x64xbf16, #tpu.memory_space<vmem>>, vector<1x68x64xbf16>
    %100 = vector.shape_cast %99 : vector<1x68x64xbf16> to vector<68x64xbf16>
    %cst_34 = arith.constant dense<0.000000e+00> : vector<68x256xf32>
    %101 = tpu.matmul %100, %98, %cst_34 {dimension_numbers = #tpu.dot_dimension_numbers<[1], [0], [0], [1], [0, 0, 1, 1], [], []>} : vector<68x64xbf16>, vector<64x256xbf16>, vector<68x256xf32> -> vector<68x256xf32>
    %102 = arith.addf %91, %101 : vector<68x256xf32>
    %c0_35 = arith.constant 0 : index
    %c0_36 = arith.constant 0 : index
    %103 = vector.load %arg5[%c0_35, %c0_36] : memref<64x1xf32, #tpu.memory_space<vmem>>, vector<64x1xf32>
    %104 = vector.extract_strided_slice %102 {offsets = [0, 0], sizes = [32, 256], strides = [1, 1]} : vector<68x256xf32> to vector<32x256xf32>
    %105 = vector.extract_strided_slice %103 {offsets = [0, 0], sizes = [32, 1], strides = [1, 1]} : vector<64x1xf32> to vector<32x1xf32>
    %106 = vector.broadcast %105 : vector<32x1xf32> to vector<32x256xf32>
    %107 = arith.addf %104, %106 : vector<32x256xf32>
    %108 = vector.extract_strided_slice %102 {offsets = [32, 0], sizes = [32, 256], strides = [1, 1]} : vector<68x256xf32> to vector<32x256xf32>
    %109 = vector.extract_strided_slice %103 {offsets = [32, 0], sizes = [32, 1], strides = [1, 1]} : vector<64x1xf32> to vector<32x1xf32>
    %110 = vector.broadcast %109 : vector<32x1xf32> to vector<32x256xf32>
    %111 = arith.addf %108, %110 : vector<32x256xf32>
    %112 = vector.extract_strided_slice %102 {offsets = [64, 0], sizes = [2, 256], strides = [1, 1]} : vector<68x256xf32> to vector<2x256xf32>
    %113 = vector.extract_strided_slice %102 {offsets = [66, 0], sizes = [2, 256], strides = [1, 1]} : vector<68x256xf32> to vector<2x256xf32>
    %114 = arith.mulf %107, %111 : vector<32x256xf32>
    %cst_37 = arith.constant 0.000000e+00 : f32
    %115 = vector.broadcast %cst_37 : f32 to vector<32x256xf32>
    %116 = arith.subf %115, %114 : vector<32x256xf32>
    %117 = math.exp %116 : vector<32x256xf32>
    %cst_38 = arith.constant 1.000000e+00 : f32
    %118 = vector.broadcast %cst_38 : f32 to vector<32x256xf32>
    %119 = arith.addf %118, %117 : vector<32x256xf32>
    %cst_39 = arith.constant 1.000000e+00 : f32
    %120 = vector.broadcast %cst_39 : f32 to vector<32x256xf32>
    %121 = arith.divf %120, %119 : vector<32x256xf32>
    %122 = arith.mulf %1, %121 : vector<32x256xf32>
    %123 = arith.mulf %3, %121 : vector<32x256xf32>
    %124 = tpu.concatenate %122, %123 in 0 : vector<32x256xf32>, vector<32x256xf32> -> vector<64x256xf32>
    %cst_40 = arith.constant 0.000000e+00 : f32
    %125 = vector.broadcast %cst_40 : f32 to vector<4x256xf32>
    %126 = vector.extract_strided_slice %124 {offsets = [0, 239], sizes = [64, 17], strides = [1, 1]} : vector<64x256xf32> to vector<64x17xf32>
    %127 = vector.extract_strided_slice %124 {offsets = [0, 0], sizes = [64, 239], strides = [1, 1]} : vector<64x256xf32> to vector<64x239xf32>
    %128 = tpu.concatenate %126, %127 in 1 : vector<64x17xf32>, vector<64x239xf32> -> vector<64x256xf32>
    %129 = vector.extract_strided_slice %4 {offsets = [0, 0], sizes = [1, 256], strides = [1, 1]} : vector<9x256xf32> to vector<1x256xf32>
    %130 = vector.broadcast %129 : vector<1x256xf32> to vector<64x256xf32>
    %131 = arith.mulf %128, %130 : vector<64x256xf32>
    %132 = arith.truncf %131 : vector<64x256xf32> to vector<64x256xbf16>
    %c0_41 = arith.constant 0 : index
    %c0_42 = arith.constant 0 : index
    %c0_43 = arith.constant 0 : index
    %133 = vector.load %arg6[%c0_41, %c0_42, %c0_43] : memref<9x4x64xbf16, #tpu.memory_space<vmem>>, vector<1x4x64xbf16>
    %134 = vector.shape_cast %133 : vector<1x4x64xbf16> to vector<4x64xbf16>
    %cst_44 = arith.constant dense<0.000000e+00> : vector<4x256xf32>
    %135 = tpu.matmul %134, %132, %cst_44 {dimension_numbers = #tpu.dot_dimension_numbers<[1], [0], [0], [1], [0, 0, 1, 1], [], []>} : vector<4x64xbf16>, vector<64x256xbf16>, vector<4x256xf32> -> vector<4x256xf32>
    %136 = arith.addf %125, %135 : vector<4x256xf32>
    %137 = vector.extract_strided_slice %124 {offsets = [0, 240], sizes = [64, 16], strides = [1, 1]} : vector<64x256xf32> to vector<64x16xf32>
    %138 = vector.extract_strided_slice %124 {offsets = [0, 0], sizes = [64, 240], strides = [1, 1]} : vector<64x256xf32> to vector<64x240xf32>
    %139 = tpu.concatenate %137, %138 in 1 : vector<64x16xf32>, vector<64x240xf32> -> vector<64x256xf32>
    %140 = vector.extract_strided_slice %4 {offsets = [1, 0], sizes = [1, 256], strides = [1, 1]} : vector<9x256xf32> to vector<1x256xf32>
    %141 = vector.broadcast %140 : vector<1x256xf32> to vector<64x256xf32>
    %142 = arith.mulf %139, %141 : vector<64x256xf32>
    %143 = arith.truncf %142 : vector<64x256xf32> to vector<64x256xbf16>
    %c1_45 = arith.constant 1 : index
    %c0_46 = arith.constant 0 : index
    %c0_47 = arith.constant 0 : index
    %144 = vector.load %arg6[%c1_45, %c0_46, %c0_47] : memref<9x4x64xbf16, #tpu.memory_space<vmem>>, vector<1x4x64xbf16>
    %145 = vector.shape_cast %144 : vector<1x4x64xbf16> to vector<4x64xbf16>
    %cst_48 = arith.constant dense<0.000000e+00> : vector<4x256xf32>
    %146 = tpu.matmul %145, %143, %cst_48 {dimension_numbers = #tpu.dot_dimension_numbers<[1], [0], [0], [1], [0, 0, 1, 1], [], []>} : vector<4x64xbf16>, vector<64x256xbf16>, vector<4x256xf32> -> vector<4x256xf32>
    %147 = arith.addf %136, %146 : vector<4x256xf32>
    %148 = vector.extract_strided_slice %124 {offsets = [0, 241], sizes = [64, 15], strides = [1, 1]} : vector<64x256xf32> to vector<64x15xf32>
    %149 = vector.extract_strided_slice %124 {offsets = [0, 0], sizes = [64, 241], strides = [1, 1]} : vector<64x256xf32> to vector<64x241xf32>
    %150 = tpu.concatenate %148, %149 in 1 : vector<64x15xf32>, vector<64x241xf32> -> vector<64x256xf32>
    %151 = vector.extract_strided_slice %4 {offsets = [2, 0], sizes = [1, 256], strides = [1, 1]} : vector<9x256xf32> to vector<1x256xf32>
    %152 = vector.broadcast %151 : vector<1x256xf32> to vector<64x256xf32>
    %153 = arith.mulf %150, %152 : vector<64x256xf32>
    %154 = arith.truncf %153 : vector<64x256xf32> to vector<64x256xbf16>
    %c2_49 = arith.constant 2 : index
    %c0_50 = arith.constant 0 : index
    %c0_51 = arith.constant 0 : index
    %155 = vector.load %arg6[%c2_49, %c0_50, %c0_51] : memref<9x4x64xbf16, #tpu.memory_space<vmem>>, vector<1x4x64xbf16>
    %156 = vector.shape_cast %155 : vector<1x4x64xbf16> to vector<4x64xbf16>
    %cst_52 = arith.constant dense<0.000000e+00> : vector<4x256xf32>
    %157 = tpu.matmul %156, %154, %cst_52 {dimension_numbers = #tpu.dot_dimension_numbers<[1], [0], [0], [1], [0, 0, 1, 1], [], []>} : vector<4x64xbf16>, vector<64x256xbf16>, vector<4x256xf32> -> vector<4x256xf32>
    %158 = arith.addf %147, %157 : vector<4x256xf32>
    %159 = vector.extract_strided_slice %124 {offsets = [0, 255], sizes = [64, 1], strides = [1, 1]} : vector<64x256xf32> to vector<64x1xf32>
    %160 = vector.extract_strided_slice %124 {offsets = [0, 0], sizes = [64, 255], strides = [1, 1]} : vector<64x256xf32> to vector<64x255xf32>
    %161 = tpu.concatenate %159, %160 in 1 : vector<64x1xf32>, vector<64x255xf32> -> vector<64x256xf32>
    %162 = vector.extract_strided_slice %4 {offsets = [3, 0], sizes = [1, 256], strides = [1, 1]} : vector<9x256xf32> to vector<1x256xf32>
    %163 = vector.broadcast %162 : vector<1x256xf32> to vector<64x256xf32>
    %164 = arith.mulf %161, %163 : vector<64x256xf32>
    %165 = arith.truncf %164 : vector<64x256xf32> to vector<64x256xbf16>
    %c3_53 = arith.constant 3 : index
    %c0_54 = arith.constant 0 : index
    %c0_55 = arith.constant 0 : index
    %166 = vector.load %arg6[%c3_53, %c0_54, %c0_55] : memref<9x4x64xbf16, #tpu.memory_space<vmem>>, vector<1x4x64xbf16>
    %167 = vector.shape_cast %166 : vector<1x4x64xbf16> to vector<4x64xbf16>
    %cst_56 = arith.constant dense<0.000000e+00> : vector<4x256xf32>
    %168 = tpu.matmul %167, %165, %cst_56 {dimension_numbers = #tpu.dot_dimension_numbers<[1], [0], [0], [1], [0, 0, 1, 1], [], []>} : vector<4x64xbf16>, vector<64x256xbf16>, vector<4x256xf32> -> vector<4x256xf32>
    %169 = arith.addf %158, %168 : vector<4x256xf32>
    %170 = vector.extract_strided_slice %4 {offsets = [4, 0], sizes = [1, 256], strides = [1, 1]} : vector<9x256xf32> to vector<1x256xf32>
    %171 = vector.broadcast %170 : vector<1x256xf32> to vector<64x256xf32>
    %172 = arith.mulf %124, %171 : vector<64x256xf32>
    %173 = arith.truncf %172 : vector<64x256xf32> to vector<64x256xbf16>
    %c4_57 = arith.constant 4 : index
    %c0_58 = arith.constant 0 : index
    %c0_59 = arith.constant 0 : index
    %174 = vector.load %arg6[%c4_57, %c0_58, %c0_59] : memref<9x4x64xbf16, #tpu.memory_space<vmem>>, vector<1x4x64xbf16>
    %175 = vector.shape_cast %174 : vector<1x4x64xbf16> to vector<4x64xbf16>
    %cst_60 = arith.constant dense<0.000000e+00> : vector<4x256xf32>
    %176 = tpu.matmul %175, %173, %cst_60 {dimension_numbers = #tpu.dot_dimension_numbers<[1], [0], [0], [1], [0, 0, 1, 1], [], []>} : vector<4x64xbf16>, vector<64x256xbf16>, vector<4x256xf32> -> vector<4x256xf32>
    %177 = arith.addf %169, %176 : vector<4x256xf32>
    %178 = vector.extract_strided_slice %124 {offsets = [0, 1], sizes = [64, 255], strides = [1, 1]} : vector<64x256xf32> to vector<64x255xf32>
    %179 = vector.extract_strided_slice %124 {offsets = [0, 0], sizes = [64, 1], strides = [1, 1]} : vector<64x256xf32> to vector<64x1xf32>
    %180 = tpu.concatenate %178, %179 in 1 : vector<64x255xf32>, vector<64x1xf32> -> vector<64x256xf32>
    %181 = vector.extract_strided_slice %4 {offsets = [5, 0], sizes = [1, 256], strides = [1, 1]} : vector<9x256xf32> to vector<1x256xf32>
    %182 = vector.broadcast %181 : vector<1x256xf32> to vector<64x256xf32>
    %183 = arith.mulf %180, %182 : vector<64x256xf32>
    %184 = arith.truncf %183 : vector<64x256xf32> to vector<64x256xbf16>
    %c5_61 = arith.constant 5 : index
    %c0_62 = arith.constant 0 : index
    %c0_63 = arith.constant 0 : index
    %185 = vector.load %arg6[%c5_61, %c0_62, %c0_63] : memref<9x4x64xbf16, #tpu.memory_space<vmem>>, vector<1x4x64xbf16>
    %186 = vector.shape_cast %185 : vector<1x4x64xbf16> to vector<4x64xbf16>
    %cst_64 = arith.constant dense<0.000000e+00> : vector<4x256xf32>
    %187 = tpu.matmul %186, %184, %cst_64 {dimension_numbers = #tpu.dot_dimension_numbers<[1], [0], [0], [1], [0, 0, 1, 1], [], []>} : vector<4x64xbf16>, vector<64x256xbf16>, vector<4x256xf32> -> vector<4x256xf32>
    %188 = arith.addf %177, %187 : vector<4x256xf32>
    %189 = vector.extract_strided_slice %124 {offsets = [0, 15], sizes = [64, 241], strides = [1, 1]} : vector<64x256xf32> to vector<64x241xf32>
    %190 = vector.extract_strided_slice %124 {offsets = [0, 0], sizes = [64, 15], strides = [1, 1]} : vector<64x256xf32> to vector<64x15xf32>
    %191 = tpu.concatenate %189, %190 in 1 : vector<64x241xf32>, vector<64x15xf32> -> vector<64x256xf32>
    %192 = vector.extract_strided_slice %4 {offsets = [6, 0], sizes = [1, 256], strides = [1, 1]} : vector<9x256xf32> to vector<1x256xf32>
    %193 = vector.broadcast %192 : vector<1x256xf32> to vector<64x256xf32>
    %194 = arith.mulf %191, %193 : vector<64x256xf32>
    %195 = arith.truncf %194 : vector<64x256xf32> to vector<64x256xbf16>
    %c6_65 = arith.constant 6 : index
    %c0_66 = arith.constant 0 : index
    %c0_67 = arith.constant 0 : index
    %196 = vector.load %arg6[%c6_65, %c0_66, %c0_67] : memref<9x4x64xbf16, #tpu.memory_space<vmem>>, vector<1x4x64xbf16>
    %197 = vector.shape_cast %196 : vector<1x4x64xbf16> to vector<4x64xbf16>
    %cst_68 = arith.constant dense<0.000000e+00> : vector<4x256xf32>
    %198 = tpu.matmul %197, %195, %cst_68 {dimension_numbers = #tpu.dot_dimension_numbers<[1], [0], [0], [1], [0, 0, 1, 1], [], []>} : vector<4x64xbf16>, vector<64x256xbf16>, vector<4x256xf32> -> vector<4x256xf32>
    %199 = arith.addf %188, %198 : vector<4x256xf32>
    %200 = vector.extract_strided_slice %124 {offsets = [0, 16], sizes = [64, 240], strides = [1, 1]} : vector<64x256xf32> to vector<64x240xf32>
    %201 = vector.extract_strided_slice %124 {offsets = [0, 0], sizes = [64, 16], strides = [1, 1]} : vector<64x256xf32> to vector<64x16xf32>
    %202 = tpu.concatenate %200, %201 in 1 : vector<64x240xf32>, vector<64x16xf32> -> vector<64x256xf32>
    %203 = vector.extract_strided_slice %4 {offsets = [7, 0], sizes = [1, 256], strides = [1, 1]} : vector<9x256xf32> to vector<1x256xf32>
    %204 = vector.broadcast %203 : vector<1x256xf32> to vector<64x256xf32>
    %205 = arith.mulf %202, %204 : vector<64x256xf32>
    %206 = arith.truncf %205 : vector<64x256xf32> to vector<64x256xbf16>
    %c7_69 = arith.constant 7 : index
    %c0_70 = arith.constant 0 : index
    %c0_71 = arith.constant 0 : index
    %207 = vector.load %arg6[%c7_69, %c0_70, %c0_71] : memref<9x4x64xbf16, #tpu.memory_space<vmem>>, vector<1x4x64xbf16>
    %208 = vector.shape_cast %207 : vector<1x4x64xbf16> to vector<4x64xbf16>
    %cst_72 = arith.constant dense<0.000000e+00> : vector<4x256xf32>
    %209 = tpu.matmul %208, %206, %cst_72 {dimension_numbers = #tpu.dot_dimension_numbers<[1], [0], [0], [1], [0, 0, 1, 1], [], []>} : vector<4x64xbf16>, vector<64x256xbf16>, vector<4x256xf32> -> vector<4x256xf32>
    %210 = arith.addf %199, %209 : vector<4x256xf32>
    %211 = vector.extract_strided_slice %124 {offsets = [0, 17], sizes = [64, 239], strides = [1, 1]} : vector<64x256xf32> to vector<64x239xf32>
    %212 = vector.extract_strided_slice %124 {offsets = [0, 0], sizes = [64, 17], strides = [1, 1]} : vector<64x256xf32> to vector<64x17xf32>
    %213 = tpu.concatenate %211, %212 in 1 : vector<64x239xf32>, vector<64x17xf32> -> vector<64x256xf32>
    %214 = vector.extract_strided_slice %4 {offsets = [8, 0], sizes = [1, 256], strides = [1, 1]} : vector<9x256xf32> to vector<1x256xf32>
    %215 = vector.broadcast %214 : vector<1x256xf32> to vector<64x256xf32>
    %216 = arith.mulf %213, %215 : vector<64x256xf32>
    %217 = arith.truncf %216 : vector<64x256xf32> to vector<64x256xbf16>
    %c8_73 = arith.constant 8 : index
    %c0_74 = arith.constant 0 : index
    %c0_75 = arith.constant 0 : index
    %218 = vector.load %arg6[%c8_73, %c0_74, %c0_75] : memref<9x4x64xbf16, #tpu.memory_space<vmem>>, vector<1x4x64xbf16>
    %219 = vector.shape_cast %218 : vector<1x4x64xbf16> to vector<4x64xbf16>
    %cst_76 = arith.constant dense<0.000000e+00> : vector<4x256xf32>
    %220 = tpu.matmul %219, %217, %cst_76 {dimension_numbers = #tpu.dot_dimension_numbers<[1], [0], [0], [1], [0, 0, 1, 1], [], []>} : vector<4x64xbf16>, vector<64x256xbf16>, vector<4x256xf32> -> vector<4x256xf32>
    %221 = arith.addf %210, %220 : vector<4x256xf32>
    %c0_77 = arith.constant 0 : index
    %c0_78 = arith.constant 0 : index
    %222 = vector.load %arg7[%c0_77, %c0_78] : memref<4x1xf32, #tpu.memory_space<vmem>>, vector<4x1xf32>
    %223 = vector.extract_strided_slice %221 {offsets = [0, 0], sizes = [2, 256], strides = [1, 1]} : vector<4x256xf32> to vector<2x256xf32>
    %224 = arith.addf %112, %223 : vector<2x256xf32>
    %225 = vector.extract_strided_slice %222 {offsets = [0, 0], sizes = [2, 1], strides = [1, 1]} : vector<4x1xf32> to vector<2x1xf32>
    %226 = vector.broadcast %225 : vector<2x1xf32> to vector<2x256xf32>
    %227 = arith.addf %224, %226 : vector<2x256xf32>
    %228 = vector.extract_strided_slice %221 {offsets = [2, 0], sizes = [2, 256], strides = [1, 1]} : vector<4x256xf32> to vector<2x256xf32>
    %229 = arith.addf %113, %228 : vector<2x256xf32>
    %230 = vector.extract_strided_slice %222 {offsets = [2, 0], sizes = [2, 1], strides = [1, 1]} : vector<4x1xf32> to vector<2x1xf32>
    %231 = vector.broadcast %230 : vector<2x1xf32> to vector<2x256xf32>
    %232 = arith.addf %229, %231 : vector<2x256xf32>
    %233 = vector.extract_strided_slice %227 {offsets = [0, 0], sizes = [1, 256], strides = [1, 1]} : vector<2x256xf32> to vector<1x256xf32>
    %234 = vector.broadcast %233 : vector<1x256xf32> to vector<32x256xf32>
    %235 = arith.mulf %1, %234 : vector<32x256xf32>
    %236 = vector.extract_strided_slice %227 {offsets = [1, 0], sizes = [1, 256], strides = [1, 1]} : vector<2x256xf32> to vector<1x256xf32>
    %237 = vector.broadcast %236 : vector<1x256xf32> to vector<32x256xf32>
    %238 = arith.mulf %122, %237 : vector<32x256xf32>
    %239 = arith.addf %235, %238 : vector<32x256xf32>
    %c0_79 = arith.constant 0 : index
    %c0_80 = arith.constant 0 : index
    %c0_81 = arith.constant 0 : index
    %240 = vector.load %arg8[%c0_79, %c0_80, %c0_81] : memref<1x32x256xf32, #tpu.memory_space<vmem>>, vector<1x32x256xf32>
    %241 = vector.shape_cast %240 : vector<1x32x256xf32> to vector<32x256xf32>
    %242 = vector.shape_cast %239 : vector<32x256xf32> to vector<1x32x256xf32>
    tpu.vector_store %arg8[%c0_79, %c0_80, %c0_81], %242 {strides = array<i32>} : memref<1x32x256xf32, #tpu.memory_space<vmem>>, vector<1x32x256xf32>,
    %243 = vector.extract_strided_slice %232 {offsets = [0, 0], sizes = [1, 256], strides = [1, 1]} : vector<2x256xf32> to vector<1x256xf32>
    %244 = vector.broadcast %243 : vector<1x256xf32> to vector<32x256xf32>
    %245 = arith.mulf %3, %244 : vector<32x256xf32>
    %246 = vector.extract_strided_slice %232 {offsets = [1, 0], sizes = [1, 256], strides = [1, 1]} : vector<2x256xf32> to vector<1x256xf32>
    %247 = vector.broadcast %246 : vector<1x256xf32> to vector<32x256xf32>
    %248 = arith.mulf %123, %247 : vector<32x256xf32>
    %249 = arith.addf %245, %248 : vector<32x256xf32>
    %c0_82 = arith.constant 0 : index
    %c0_83 = arith.constant 0 : index
    %c0_84 = arith.constant 0 : index
    %250 = vector.load %arg9[%c0_82, %c0_83, %c0_84] : memref<1x32x256xf32, #tpu.memory_space<vmem>>, vector<1x32x256xf32>
    %251 = vector.shape_cast %250 : vector<1x32x256xf32> to vector<32x256xf32>
    %252 = vector.shape_cast %249 : vector<32x256xf32> to vector<1x32x256xf32>
    tpu.vector_store %arg9[%c0_82, %c0_83, %c0_84], %252 {strides = array<i32>} : memref<1x32x256xf32, #tpu.memory_space<vmem>>, vector<1x32x256xf32>,
    return
  }
  func.func @transform_0(%arg0: i32) -> (i32, i32, i32) {
    %c0_i32 = arith.constant 0 : i32
    %c0_i32_0 = arith.constant 0 : i32
    %c0_i32_1 = arith.constant 0 : i32
    return %arg0, %c0_i32, %c0_i32_0 : i32, i32, i32
  }
  func.func @transform_1(%arg0: i32) -> (i32, i32, i32) {
    %c0_i32 = arith.constant 0 : i32
    %c0_i32_0 = arith.constant 0 : i32
    %c0_i32_1 = arith.constant 0 : i32
    return %arg0, %c0_i32, %c0_i32_0 : i32, i32, i32
  }
  func.func @transform_2(%arg0: i32) -> (i32, i32) {
    %c0_i32 = arith.constant 0 : i32
    %c0_i32_0 = arith.constant 0 : i32
    %c0_i32_1 = arith.constant 0 : i32
    return %c0_i32, %c0_i32_0 : i32, i32
  }
  func.func @transform_3(%arg0: i32) -> (i32, i32, i32) {
    %c0_i32 = arith.constant 0 : i32
    %c0_i32_0 = arith.constant 0 : i32
    %c0_i32_1 = arith.constant 0 : i32
    %c0_i32_2 = arith.constant 0 : i32
    return %c0_i32, %c0_i32_0, %c0_i32_1 : i32, i32, i32
  }
  func.func @transform_4(%arg0: i32) -> (i32, i32) {
    %c0_i32 = arith.constant 0 : i32
    %c0_i32_0 = arith.constant 0 : i32
    %c0_i32_1 = arith.constant 0 : i32
    return %c0_i32, %c0_i32_0 : i32, i32
  }
  func.func @transform_5(%arg0: i32) -> (i32, i32, i32) {
    %c0_i32 = arith.constant 0 : i32
    %c0_i32_0 = arith.constant 0 : i32
    %c0_i32_1 = arith.constant 0 : i32
    %c0_i32_2 = arith.constant 0 : i32
    return %c0_i32, %c0_i32_0, %c0_i32_1 : i32, i32, i32
  }
  func.func @transform_6(%arg0: i32) -> (i32, i32) {
    %c0_i32 = arith.constant 0 : i32
    %c0_i32_0 = arith.constant 0 : i32
    %c0_i32_1 = arith.constant 0 : i32
    return %c0_i32, %c0_i32_0 : i32, i32
  }
  func.func @transform_7(%arg0: i32) -> (i32, i32, i32) {
    %c0_i32 = arith.constant 0 : i32
    %c0_i32_0 = arith.constant 0 : i32
    %c0_i32_1 = arith.constant 0 : i32
    return %arg0, %c0_i32, %c0_i32_0 : i32, i32, i32
  }
  func.func @transform_8(%arg0: i32) -> (i32, i32, i32) {
    %c0_i32 = arith.constant 0 : i32
    %c0_i32_0 = arith.constant 0 : i32
    %c0_i32_1 = arith.constant 0 : i32
    return %arg0, %c0_i32, %c0_i32_0 : i32, i32, i32
  }
}

</mosaic_0001>

<llo_original>
// kernel: tpu_custom_call.1
$region0: #{tpu_custom_call.1}
  #allocation0 [shape = 'u32[]', space=smem, size = 0x4, offset = 0x4, fixed_abs, tag = 'smem constant byte address 0x4 - core index']
  #allocation1 [shape = 'u32[144,128]{1,0:T(1,128)}', space=vmem, size = 0x12000, scoped, tag = 'internal scratch']
  %s0 = inlined_call_operand.vmem [shape: f32[2,32,256], index: 0, kind: input, shape index: {}]
  %s1 = inlined_call_operand.vmem [shape: f32[2,32,256], index: 1, kind: input, shape index: {}]
  %s2 = inlined_call_operand.vmem [shape: f32[9,256], index: 2, kind: input, shape index: {}]
  %s3 = inlined_call_operand.vmem [shape: bf16[9,68,64], index: 3, kind: input, shape index: {}]
  %s4 = inlined_call_operand.vmem [shape: f32[64,1], index: 4, kind: input, shape index: {}]
  %s5 = inlined_call_operand.vmem [shape: bf16[9,4,64], index: 5, kind: input, shape index: {}]
  %s6 = inlined_call_operand.vmem [shape: f32[4,1], index: 6, kind: input, shape index: {}]
  %s7 = inlined_call_operand.hbm [shape: f32[2,32,256], index: 7, kind: output, shape index: {0}]
  %s8 = inlined_call_operand.hbm [shape: f32[2,32,256], index: 8, kind: output, shape index: {1}]
  %9 = xla_tuple %s7, %s8
  %s10 = sld [smem:[#allocation0]]
  $region69: #{tpu_custom_call.1} parent=0
    _
  %s12 = ssub.s32 1, %s10
  %s13 = scalar_select 0, %s12, %s10
  $region1: #{tpu_custom_call.1} parent=0
    #allocation2 [shape = 'u8[65536]{0}', space=vmem, size = 0x10000, scoped, tag = 'output window, operand 0']
    #allocation3 [shape = 's32[2]{0}', space=sflag, size = 0x8, scoped, tag = 'scoped memory for tpu_custom_call.1']
    #allocation4 [shape = 'u8[65536]{0}', space=vmem, size = 0x10000, scoped, tag = 'output window, operand 1']
    #allocation5 [shape = 's32[2]{0}', space=sflag, size = 0x8, scoped, tag = 'scoped memory for tpu_custom_call.1']
    %14 = vsyncpa [#allocation3], 0
    %s15 = scalar_lea.sflag [#allocation3], 1
    %16 = vsyncpa %s15, 0
    %17 = vsyncpa [#allocation5], 0
    %s18 = scalar_lea.sflag [#allocation5], 1
    %19 = vsyncpa %s18, 0
    loop: start=0, step=1, limit=4
    $region2: #{tpu_custom_call.1} parent=1 // loop_pre_header
      _
    $region3: #{tpu_custom_call.1} parent=1 // loop_header
      %s21 = sphi 0, %s25
      %p22 = scmp.ge.s32.totalorder %s21, 4
      %s31 = sphi 0, %s33
      %s34 = sphi 0, %s31
      %s35 = sphi 0, %s34
      %s51 = sphi 0, %s35
      %s57 = sphi 0, %s59
      %s60 = sphi 0, %s57
      %s61 = sphi 0, %s60
      %s77 = sphi 0, %s61
      %s81 = sphi 0, %s81
      %s83 = sphi 0, %s81
      %s84 = sphi 0, %s83
      %s98 = sphi 0, %s84
      %s102 = sphi 0, %s102
      %s104 = sphi 0, %s102
      %s105 = sphi 0, %s104
      %s119 = sphi 0, %s105
      %s123 = sphi 0, %s123
      %s125 = sphi 0, %s123
      %s126 = sphi 0, %s125
      %s140 = sphi 0, %s126
      %s144 = sphi 0, %s144
      %s146 = sphi 0, %s144
      %s147 = sphi 0, %s146
      %s161 = sphi 0, %s147
      %s165 = sphi 0, %s165
      %s167 = sphi 0, %s165
      %s168 = sphi 0, %s167
      %s182 = sphi 0, %s168
      %s188 = sphi 0, %s190
      %s191 = sphi 0, %s188
      %s192 = sphi 0, %s191
      %s208 = sphi 0, %s192
      %s214 = sphi 0, %s216
      %s217 = sphi 0, %s214
      %s218 = sphi 0, %s217
      %s234 = sphi 0, %s218
    $region4: #{tpu_custom_call.1} parent=1 // loop_header_branch
      %24 = sbr.rel (%p22) target = $region8
    $region5: #{tpu_custom_call.1} parent=1 // loop_body
      %s26 = ssub.s32 %s21, 1
      %s27 = ssub.s32 %s21, 2
      %s28 = sadd.s32 %s21, 1
      %s29 = ssub.s32 %s21, %s28
      %p30 = scmp.eq.s32.totalorder %s29, 0
      %s32 = sadd.s32 %s31, 1
      %s33 = scalar_select %p30, %s31, %s32
      %p36 = pneg %p30
      %p37 = scmp.eq.s32.totalorder %s21, 1
      %p38 = por %p36, %p37
      %p39 = scmp.ne.s32.totalorder %s31, %s34
      %p40 = scmp.eq.s32.totalorder %s21, 0
      %p41 = por %p39, %p40
      %p42 = scmp.ne.s32.totalorder %s31, %s34
      %p43 = scmp.eq.s32.totalorder %s26, 1
      %p44 = por %p42, %p43
      %p45 = scmp.ne.s32.totalorder %s34, %s35
      %p46 = scmp.eq.s32.totalorder %s26, 0
      %p47 = por %p45, %p46
      %p48 = scmp.ne.s32.totalorder %s34, %s35
      %p49 = scmp.eq.s32.totalorder %s27, 1
      %p50 = por %p48, %p49
      %p52 = scmp.ne.s32.totalorder %s35, %s51
      %p53 = scmp.eq.s32.totalorder %s27, 0
      %p54 = por %p52, %p53
      %s55 = ssub.s32 %s21, %s28
      %p56 = scmp.eq.s32.totalorder %s55, 0
      %s58 = sadd.s32 %s57, 1
      %s59 = scalar_select %p56, %s57, %s58
      %p62 = pneg %p56
      %p63 = scmp.eq.s32.totalorder %s21, 1
      %p64 = por %p62, %p63
      %p65 = scmp.ne.s32.totalorder %s57, %s60
      %p66 = scmp.eq.s32.totalorder %s21, 0
      %p67 = por %p65, %p66
      %p68 = scmp.ne.s32.totalorder %s57, %s60
      %p69 = scmp.eq.s32.totalorder %s26, 1
      %p70 = por %p68, %p69
      %p71 = scmp.ne.s32.totalorder %s60, %s61
      %p72 = scmp.eq.s32.totalorder %s26, 0
      %p73 = por %p71, %p72
      %p74 = scmp.ne.s32.totalorder %s60, %s61
      %p75 = scmp.eq.s32.totalorder %s27, 1
      %p76 = por %p74, %p75
      %p78 = scmp.ne.s32.totalorder %s61, %s77
      %p79 = scmp.eq.s32.totalorder %s27, 0
      %p80 = por %p78, %p79
      %s82 = sadd.s32 %s81, 1
      %p85 = scmp.eq.s32.totalorder %s21, 1
      %p86 = scmp.ne.s32.totalorder %s81, %s83
      %p87 = scmp.eq.s32.totalorder %s21, 0
      %p88 = por %p86, %p87
      %p89 = scmp.ne.s32.totalorder %s81, %s83
      %p90 = scmp.eq.s32.totalorder %s26, 1
      %p91 = por %p89, %p90
      %p92 = scmp.ne.s32.totalorder %s83, %s84
      %p93 = scmp.eq.s32.totalorder %s26, 0
      %p94 = por %p92, %p93
      %p95 = scmp.ne.s32.totalorder %s83, %s84
      %p96 = scmp.eq.s32.totalorder %s27, 1
      %p97 = por %p95, %p96
      %p99 = scmp.ne.s32.totalorder %s84, %s98
      %p100 = scmp.eq.s32.totalorder %s27, 0
      %p101 = por %p99, %p100
      %s103 = sadd.s32 %s102, 1
      %p106 = scmp.eq.s32.totalorder %s21, 1
      %p107 = scmp.ne.s32.totalorder %s102, %s104
      %p108 = scmp.eq.s32.totalorder %s21, 0
      %p109 = por %p107, %p108
      %p110 = scmp.ne.s32.totalorder %s102, %s104
      %p111 = scmp.eq.s32.totalorder %s26, 1
      %p112 = por %p110, %p111
      %p113 = scmp.ne.s32.totalorder %s104, %s105
      %p114 = scmp.eq.s32.totalorder %s26, 0
      %p115 = por %p113, %p114
      %p116 = scmp.ne.s32.totalorder %s104, %s105
      %p117 = scmp.eq.s32.totalorder %s27, 1
      %p118 = por %p116, %p117
      %p120 = scmp.ne.s32.totalorder %s105, %s119
      %p121 = scmp.eq.s32.totalorder %s27, 0
      %p122 = por %p120, %p121
      %s124 = sadd.s32 %s123, 1
      %p127 = scmp.eq.s32.totalorder %s21, 1
      %p128 = scmp.ne.s32.totalorder %s123, %s125
      %p129 = scmp.eq.s32.totalorder %s21, 0
      %p130 = por %p128, %p129
      %p131 = scmp.ne.s32.totalorder %s123, %s125
      %p132 = scmp.eq.s32.totalorder %s26, 1
      %p133 = por %p131, %p132
      %p134 = scmp.ne.s32.totalorder %s125, %s126
      %p135 = scmp.eq.s32.totalorder %s26, 0
      %p136 = por %p134, %p135
      %p137 = scmp.ne.s32.totalorder %s125, %s126
      %p138 = scmp.eq.s32.totalorder %s27, 1
      %p139 = por %p137, %p138
      %p141 = scmp.ne.s32.totalorder %s126, %s140
      %p142 = scmp.eq.s32.totalorder %s27, 0
      %p143 = por %p141, %p142
      %s145 = sadd.s32 %s144, 1
      %p148 = scmp.eq.s32.totalorder %s21, 1
      %p149 = scmp.ne.s32.totalorder %s144, %s146
      %p150 = scmp.eq.s32.totalorder %s21, 0
      %p151 = por %p149, %p150
      %p152 = scmp.ne.s32.totalorder %s144, %s146
      %p153 = scmp.eq.s32.totalorder %s26, 1
      %p154 = por %p152, %p153
      %p155 = scmp.ne.s32.totalorder %s146, %s147
      %p156 = scmp.eq.s32.totalorder %s26, 0
      %p157 = por %p155, %p156
      %p158 = scmp.ne.s32.totalorder %s146, %s147
      %p159 = scmp.eq.s32.totalorder %s27, 1
      %p160 = por %p158, %p159
      %p162 = scmp.ne.s32.totalorder %s147, %s161
      %p163 = scmp.eq.s32.totalorder %s27, 0
      %p164 = por %p162, %p163
      %s166 = sadd.s32 %s165, 1
      %p169 = scmp.eq.s32.totalorder %s21, 1
      %p170 = scmp.ne.s32.totalorder %s165, %s167
      %p171 = scmp.eq.s32.totalorder %s21, 0
      %p172 = por %p170, %p171
      %p173 = scmp.ne.s32.totalorder %s165, %s167
      %p174 = scmp.eq.s32.totalorder %s26, 1
      %p175 = por %p173, %p174
      %p176 = scmp.ne.s32.totalorder %s167, %s168
      %p177 = scmp.eq.s32.totalorder %s26, 0
      %p178 = por %p176, %p177
      %p179 = scmp.ne.s32.totalorder %s167, %s168
      %p180 = scmp.eq.s32.totalorder %s27, 1
      %p181 = por %p179, %p180
      %p183 = scmp.ne.s32.totalorder %s168, %s182
      %p184 = scmp.eq.s32.totalorder %s27, 0
      %p185 = por %p183, %p184
      %s186 = ssub.s32 %s21, %s28
      %p187 = scmp.eq.s32.totalorder %s186, 0
      %s189 = sadd.s32 %s188, 1
      %s190 = scalar_select %p187, %s188, %s189
      %p193 = pneg %p187
      %p194 = scmp.eq.s32.totalorder %s21, 1
      %p195 = por %p193, %p194
      %p196 = scmp.ne.s32.totalorder %s188, %s191
      %p197 = scmp.eq.s32.totalorder %s21, 0
      %p198 = por %p196, %p197
      %p199 = scmp.ne.s32.totalorder %s188, %s191
      %p200 = scmp.eq.s32.totalorder %s26, 1
      %p201 = por %p199, %p200
      %p202 = scmp.ne.s32.totalorder %s191, %s192
      %p203 = scmp.eq.s32.totalorder %s26, 0
      %p204 = por %p202, %p203
      %p205 = scmp.ne.s32.totalorder %s191, %s192
      %p206 = scmp.eq.s32.totalorder %s27, 1
      %p207 = por %p205, %p206
      %p209 = scmp.ne.s32.totalorder %s192, %s208
      %p210 = scmp.eq.s32.totalorder %s27, 0
      %p211 = por %p209, %p210
      %s212 = ssub.s32 %s21, %s28
      %p213 = scmp.eq.s32.totalorder %s212, 0
      %s215 = sadd.s32 %s214, 1
      %s216 = scalar_select %p213, %s214, %s215
      %p219 = pneg %p213
      %p220 = scmp.eq.s32.totalorder %s21, 1
      %p221 = por %p219, %p220
      %p222 = scmp.ne.s32.totalorder %s214, %s217
      %p223 = scmp.eq.s32.totalorder %s21, 0
      %p224 = por %p222, %p223
      %p225 = scmp.ne.s32.totalorder %s214, %s217
      %p226 = scmp.eq.s32.totalorder %s26, 1
      %p227 = por %p225, %p226
      %p228 = scmp.ne.s32.totalorder %s217, %s218
      %p229 = scmp.eq.s32.totalorder %s26, 0
      %p230 = por %p228, %p229
      %p231 = scmp.ne.s32.totalorder %s217, %s218
      %p232 = scmp.eq.s32.totalorder %s27, 1
      %p233 = por %p231, %p232
      %p235 = scmp.ne.s32.totalorder %s218, %s234
      %p236 = scmp.eq.s32.totalorder %s27, 0
      %p237 = por %p235, %p236
      %p238 = scmp.le.s32.totalorder 1, %s21
      %p239 = scmp.lt.s32.totalorder %s21, 3
      %p240 = pnand %p238, %p239
      %p241 = pneg %p240
      // Predicated region
      $region9: #{tpu_custom_call.1} parent=5 // pred_check
        _
      $region10: #{tpu_custom_call.1} parent=5 // pred_check_branch
        %243 = sbr.rel (%p240) target = $region12
      $region11: #{tpu_custom_call.1} parent=5 // pred_region
        %s244 = ssub.s32 %s21, 1
        // Predicated region
        $region13: #{tpu_custom_call.1} parent=11 // pred_check
          %p245 = pneg %p94
        $region14: #{tpu_custom_call.1} parent=11 // pred_check_branch
          %247 = sbr.rel (%p245) target = $region16
        $region15: #{tpu_custom_call.1} parent=11 // pred_region
          _
        $region16: #{tpu_custom_call.1} parent=11 // pred_fallthru
          _
        // Predicated region
        $region17: #{tpu_custom_call.1} parent=11 // pred_check
          %p248 = pneg %p115
        $region18: #{tpu_custom_call.1} parent=11 // pred_check_branch
          %250 = sbr.rel (%p248) target = $region20
        $region19: #{tpu_custom_call.1} parent=11 // pred_region
          _
        $region20: #{tpu_custom_call.1} parent=11 // pred_fallthru
          _
        // Predicated region
        $region21: #{tpu_custom_call.1} parent=11 // pred_check
          %p251 = pneg %p136
        $region22: #{tpu_custom_call.1} parent=11 // pred_check_branch
          %253 = sbr.rel (%p251) target = $region24
        $region23: #{tpu_custom_call.1} parent=11 // pred_region
          _
        $region24: #{tpu_custom_call.1} parent=11 // pred_fallthru
          _
        // Predicated region
        $region25: #{tpu_custom_call.1} parent=11 // pred_check
          %p254 = pneg %p157
        $region26: #{tpu_custom_call.1} parent=11 // pred_check_branch
          %256 = sbr.rel (%p254) target = $region28
        $region27: #{tpu_custom_call.1} parent=11 // pred_region
          _
        $region28: #{tpu_custom_call.1} parent=11 // pred_fallthru
          _
        // Predicated region
        $region29: #{tpu_custom_call.1} parent=11 // pred_check
          %p257 = pneg %p178
        $region30: #{tpu_custom_call.1} parent=11 // pred_check_branch
          %259 = sbr.rel (%p257) target = $region32
        $region31: #{tpu_custom_call.1} parent=11 // pred_region
          _
        $region32: #{tpu_custom_call.1} parent=11 // pred_fallthru
          _
      $region12: #{tpu_custom_call.1} parent=5 // pred_fallthru
        _
      %p260 = scmp.lt.s32.totalorder %s21, 2
      // Predicated region
      $region33: #{tpu_custom_call.1} parent=5 // pred_check
        %p261 = pneg %p260
      $region34: #{tpu_custom_call.1} parent=5 // pred_check_branch
        %263 = sbr.rel (%p261) target = $region36
      $region35: #{tpu_custom_call.1} parent=5 // pred_region
        // Predicated region
        $region37: #{tpu_custom_call.1} parent=35 // pred_check
          %p264 = pneg %p41
        $region38: #{tpu_custom_call.1} parent=35 // pred_check_branch
          %266 = sbr.rel (%p264) target = $region40
        $region39: #{tpu_custom_call.1} parent=35 // pred_region
          %p267 = scmp.lt.s32.totalorder %s21, 1
          %s268 = scalar_select %p267, %s21, 1
          %s269 = smul.addr %s268, 8
          %s270 = smul.addr %s269, 8
          %s271 = scalar_lea.vmem %s0, %s270
        $region40: #{tpu_custom_call.1} parent=35 // pred_fallthru
          _
        // Predicated region
        $region41: #{tpu_custom_call.1} parent=35 // pred_check
          %p272 = pneg %p67
        $region42: #{tpu_custom_call.1} parent=35 // pred_check_branch
          %274 = sbr.rel (%p272) target = $region44
        $region43: #{tpu_custom_call.1} parent=35 // pred_region
          %p275 = scmp.lt.s32.totalorder %s21, 1
          %s276 = scalar_select %p275, %s21, 1
          %s277 = smul.addr %s276, 8
          %s278 = smul.addr %s277, 8
          %s279 = scalar_lea.vmem %s1, %s278
        $region44: #{tpu_custom_call.1} parent=35 // pred_fallthru
          _
      $region36: #{tpu_custom_call.1} parent=5 // pred_fallthru
        _
      %p280 = scmp.le.s32.totalorder 1, %s21
      %p281 = scmp.lt.s32.totalorder %s21, 3
      %p282 = pnand %p280, %p281
      %p283 = pneg %p282
      // Predicated region
      $region45: #{tpu_custom_call.1} parent=5 // pred_check
        _
      $region46: #{tpu_custom_call.1} parent=5 // pred_check_branch
        %285 = sbr.rel (%p282) target = $region48
      $region47: #{tpu_custom_call.1} parent=5 // pred_region
        %s286 = ssub.s32 %s21, 1
        %p287 = scmp.lt.s32.totalorder %s26, 1
        %s288 = scalar_select %p287, %s26, 1
        %s289 = smul.addr %s288, 8
        %s290 = smul.addr %s289, 8
        %s291 = scalar_lea.vmem %s0, %s290
        %p292 = pneg %p47
        %p293 = pneg %p44
        %p294 = scmp.lt.s32.totalorder %s26, 1
        %s295 = scalar_select %p294, %s26, 1
        %s296 = smul.addr %s295, 8
        %s297 = smul.addr %s296, 8
        %s298 = scalar_lea.vmem %s1, %s297
        %p299 = pneg %p73
        %p300 = pneg %p70
        %p301 = pneg %p94
        %p302 = pneg %p91
        %p303 = pneg %p115
        %p304 = pneg %p112
        %p305 = pneg %p136
        %p306 = pneg %p133
        %p307 = pneg %p157
        %p308 = pneg %p154
        %p309 = pneg %p178
        %p310 = pneg %p175
        %p311 = pneg %p204
        %p312 = pneg %p201
        %s313 = sand.u32 %s191, 1
        %s314 = scalar_lea.sflag [#allocation3], %s313
        %s315 = sand.u32 %s191, 1
        %s316 = smul.addr %s315, 64
        %s317 = scalar_lea.vmem [#allocation2], %s316
        %p318 = pneg %p230
        %p319 = pneg %p227
        %s320 = sand.u32 %s217, 1
        %s321 = scalar_lea.sflag [#allocation5], %s320
        %s322 = sand.u32 %s217, 1
        %s323 = smul.addr %s322, 64
        %s324 = scalar_lea.vmem [#allocation4], %s323
        %p325 = scmp.lt.s32.totalorder %s26, 1
        %s326 = scalar_select %p325, %s26, 1
        %s327 = smul.addr %s326, 8
        %s328 = smul.addr %s327, 8
        %s329 = scalar_lea.vmem %s0, %s328
        %p330 = scmp.lt.s32.totalorder %s26, 1
        %s331 = scalar_select %p330, %s26, 1
        %s332 = smul.addr %s331, 8
        %s333 = smul.addr %s332, 8
        %s334 = scalar_lea.vmem %s1, %s333
        %v336 = vld [vmem:[%s329] sm:$0xff]
        %v337 = vld [vmem:[%s329 + $0x8] sm:$0xff]
        %v338 = vld [vmem:[%s329 + $0x10] sm:$0xff]
        %v339 = vld [vmem:[%s329 + $0x18] sm:$0xff]
        %v340 = vld [vmem:[%s329 + $0x20] sm:$0xff]
        %v341 = vld [vmem:[%s329 + $0x28] sm:$0xff]
        %v342 = vld [vmem:[%s329 + $0x30] sm:$0xff]
        %v343 = vld [vmem:[%s329 + $0x38] sm:$0xff]
        %v344 = vld [vmem:[%s334] sm:$0xff]
        %v345 = vld [vmem:[%s334 + $0x8] sm:$0xff]
        %v346 = vld [vmem:[%s334 + $0x10] sm:$0xff]
        %v347 = vld [vmem:[%s334 + $0x18] sm:$0xff]
        %v348 = vld [vmem:[%s334 + $0x20] sm:$0xff]
        %v349 = vld [vmem:[%s334 + $0x28] sm:$0xff]
        %v350 = vld [vmem:[%s334 + $0x30] sm:$0xff]
        %v351 = vld [vmem:[%s334 + $0x38] sm:$0xff]
        %v352 = vld [vmem:[%s2] sm:$0xff]
        %v353 = vld [vmem:[%s2 + $0x8] sm:$0xff]
        %v354 = vld [vmem:[%s2 + $0x10] sm:$0x1]
        %v355 = vld [vmem:[%s2 + $0x18] sm:$0x1]
        %364 = vrot.lane.b32.xlu0 %v337, 17
        %v365 = vpop.permute.xlu0 %364
        %366 = vrot.lane.b32.xlu0 %v339, 17
        %v367 = vpop.permute.xlu0 %366
        %368 = vrot.lane.b32.xlu0 %v341, 17
        %v369 = vpop.permute.xlu0 %368
        %370 = vrot.lane.b32.xlu0 %v343, 17
        %v371 = vpop.permute.xlu0 %370
        %372 = vrot.lane.b32.xlu0 %v345, 17
        %v373 = vpop.permute.xlu0 %372
        %374 = vrot.lane.b32.xlu0 %v347, 17
        %v375 = vpop.permute.xlu0 %374
        %376 = vrot.lane.b32.xlu0 %v349, 17
        %v377 = vpop.permute.xlu0 %376
        %378 = vrot.lane.b32.xlu0 %v351, 17
        %v379 = vpop.permute.xlu0 %378
        %396 = vrot.lane.b32.xlu0 %v336, 17
        %v397 = vpop.permute.xlu0 %396
        %398 = vrot.lane.b32.xlu0 %v338, 17
        %v399 = vpop.permute.xlu0 %398
        %400 = vrot.lane.b32.xlu0 %v340, 17
        %v401 = vpop.permute.xlu0 %400
        %402 = vrot.lane.b32.xlu0 %v342, 17
        %v403 = vpop.permute.xlu0 %402
        %404 = vrot.lane.b32.xlu0 %v344, 17
        %v405 = vpop.permute.xlu0 %404
        %406 = vrot.lane.b32.xlu0 %v346, 17
        %v407 = vpop.permute.xlu0 %406
        %408 = vrot.lane.b32.xlu0 %v348, 17
        %v409 = vpop.permute.xlu0 %408
        %410 = vrot.lane.b32.xlu0 %v350, 17
        %v411 = vpop.permute.xlu0 %410
        %vm412 = vcmask 138240
        %v413 = vsel %vm412, %v397, %v365
        %v414 = vsel %vm412, %v399, %v367
        %v415 = vsel %vm412, %v401, %v369
        %v416 = vsel %vm412, %v403, %v371
        %v417 = vsel %vm412, %v405, %v373
        %v418 = vsel %vm412, %v407, %v375
        %v419 = vsel %vm412, %v409, %v377
        %v420 = vsel %vm412, %v411, %v379
        %v437 = vsel %vm412, %v365, %v397
        %v438 = vsel %vm412, %v367, %v399
        %v439 = vsel %vm412, %v369, %v401
        %v440 = vsel %vm412, %v371, %v403
        %v441 = vsel %vm412, %v373, %v405
        %v442 = vsel %vm412, %v375, %v407
        %v443 = vsel %vm412, %v377, %v409
        %v444 = vsel %vm412, %v379, %v411
        %v445 = vlaneseq
        %v446 = vshrl.u32 %v445, 7
        %v447 = vsub.s32 0, %v446
        %v448 = vrot.slane %v352, %v447
        %v449 = vlaneseq
        %v450 = vshrl.u32 %v449, 7
        %v451 = vsub.s32 0, %v450
        %v452 = vrot.slane %v353, %v451
        %v453 = vmul.f32 %v437, %v448
        %v454 = vmul.f32 %v413, %v452
        %v455 = vmul.f32 %v438, %v448
        %v456 = vmul.f32 %v414, %v452
        %v457 = vmul.f32 %v439, %v448
        %v458 = vmul.f32 %v415, %v452
        %v459 = vmul.f32 %v440, %v448
        %v460 = vmul.f32 %v416, %v452
        %v461 = vmul.f32 %v441, %v448
        %v462 = vmul.f32 %v417, %v452
        %v463 = vmul.f32 %v442, %v448
        %v464 = vmul.f32 %v418, %v452
        %v465 = vmul.f32 %v443, %v448
        %v466 = vmul.f32 %v419, %v452
        %v467 = vmul.f32 %v444, %v448
        %v468 = vmul.f32 %v420, %v452
        %v469 = vpack.c.bf16 %v455, %v453
        %v470 = vpack.c.bf16 %v456, %v454
        %v471 = vpack.c.bf16 %v459, %v457
        %v472 = vpack.c.bf16 %v460, %v458
        %v473 = vpack.c.bf16 %v463, %v461
        %v474 = vpack.c.bf16 %v464, %v462
        %v475 = vpack.c.bf16 %v467, %v465
        %v476 = vpack.c.bf16 %v468, %v466
        %v477 = vld [vmem:[%s3] sm:$0xf]
        %v478 = vld [vmem:[%s3 + $0x4] sm:$0xf]
        %v479 = vld [vmem:[%s3 + $0x8] sm:$0xf]
        %v480 = vld [vmem:[%s3 + $0xc] sm:$0xf]
        %v481 = vld [vmem:[%s3 + $0x10] sm:$0xf]
        %v482 = vld [vmem:[%s3 + $0x14] sm:$0xf]
        %v483 = vld [vmem:[%s3 + $0x18] sm:$0xf]
        %v484 = vld [vmem:[%s3 + $0x1c] sm:$0xf]
        %v485 = vld [vmem:[%s3 + $0x20] sm:$0x3]
        %486 = vrot.lane.b32.xlu0 %v337, 16
        %v487 = vpop.permute.xlu0 %486
        %488 = vrot.lane.b32.xlu0 %v339, 16
        %v489 = vpop.permute.xlu0 %488
        %490 = vrot.lane.b32.xlu0 %v341, 16
        %v491 = vpop.permute.xlu0 %490
        %492 = vrot.lane.b32.xlu0 %v343, 16
        %v493 = vpop.permute.xlu0 %492
        %494 = vrot.lane.b32.xlu0 %v345, 16
        %v495 = vpop.permute.xlu0 %494
        %496 = vrot.lane.b32.xlu0 %v347, 16
        %v497 = vpop.permute.xlu0 %496
        %498 = vrot.lane.b32.xlu0 %v349, 16
        %v499 = vpop.permute.xlu0 %498
        %500 = vrot.lane.b32.xlu0 %v351, 16
        %v501 = vpop.permute.xlu0 %500
        %510 = vrot.lane.b32.xlu0 %v336, 16
        %v511 = vpop.permute.xlu0 %510
        %512 = vrot.lane.b32.xlu0 %v338, 16
        %v513 = vpop.permute.xlu0 %512
        %514 = vrot.lane.b32.xlu0 %v340, 16
        %v515 = vpop.permute.xlu0 %514
        %516 = vrot.lane.b32.xlu0 %v342, 16
        %v517 = vpop.permute.xlu0 %516
        %518 = vrot.lane.b32.xlu0 %v344, 16
        %v519 = vpop.permute.xlu0 %518
        %520 = vrot.lane.b32.xlu0 %v346, 16
        %v521 = vpop.permute.xlu0 %520
        %522 = vrot.lane.b32.xlu0 %v348, 16
        %v523 = vpop.permute.xlu0 %522
        %524 = vrot.lane.b32.xlu0 %v350, 16
        %v525 = vpop.permute.xlu0 %524
        %vm526 = vcmask 130048
        %v527 = vsel %vm526, %v511, %v487
        %v528 = vsel %vm526, %v513, %v489
        %v529 = vsel %vm526, %v515, %v491
        %v530 = vsel %vm526, %v517, %v493
        %v531 = vsel %vm526, %v519, %v495
        %v532 = vsel %vm526, %v521, %v497
        %v533 = vsel %vm526, %v523, %v499
        %v534 = vsel %vm526, %v525, %v501
        %v551 = vsel %vm526, %v487, %v511
        %v552 = vsel %vm526, %v489, %v513
        %v553 = vsel %vm526, %v491, %v515
        %v554 = vsel %vm526, %v493, %v517
        %v555 = vsel %vm526, %v495, %v519
        %v556 = vsel %vm526, %v497, %v521
        %v557 = vsel %vm526, %v499, %v523
        %v558 = vsel %vm526, %v501, %v525
        %v559 = vlaneseq
        %v560 = vshrl.u32 %v559, 7
        %v561 = vsub.s32 1, %v560
        %v562 = vrot.slane %v352, %v561
        %v563 = vlaneseq
        %v564 = vshrl.u32 %v563, 7
        %v565 = vsub.s32 1, %v564
        %v566 = vrot.slane %v353, %v565
        %v567 = vmul.f32 %v551, %v562
        %v568 = vmul.f32 %v527, %v566
        %v569 = vmul.f32 %v552, %v562
        %v570 = vmul.f32 %v528, %v566
        %v571 = vmul.f32 %v553, %v562
        %v572 = vmul.f32 %v529, %v566
        %v573 = vmul.f32 %v554, %v562
        %v574 = vmul.f32 %v530, %v566
        %v575 = vmul.f32 %v555, %v562
        %v576 = vmul.f32 %v531, %v566
        %v577 = vmul.f32 %v556, %v562
        %v578 = vmul.f32 %v532, %v566
        %v579 = vmul.f32 %v557, %v562
        %v580 = vmul.f32 %v533, %v566
        %v581 = vmul.f32 %v558, %v562
        %v582 = vmul.f32 %v534, %v566
        %v583 = vpack.c.bf16 %v569, %v567
        %v584 = vpack.c.bf16 %v570, %v568
        %v585 = vpack.c.bf16 %v573, %v571
        %v586 = vpack.c.bf16 %v574, %v572
        %v587 = vpack.c.bf16 %v577, %v575
        %v588 = vpack.c.bf16 %v578, %v576
        %v589 = vpack.c.bf16 %v581, %v579
        %v590 = vpack.c.bf16 %v582, %v580
        %s591 = scalar_lea.vmem %s3, 36
        %v592 = vld [vmem:[%s591] sm:$0xf]
        %v593 = vld [vmem:[%s591 + $0x4] sm:$0xf]
        %v594 = vld [vmem:[%s591 + $0x8] sm:$0xf]
        %v595 = vld [vmem:[%s591 + $0xc] sm:$0xf]
        %v596 = vld [vmem:[%s591 + $0x10] sm:$0xf]
        %v597 = vld [vmem:[%s591 + $0x14] sm:$0xf]
        %v598 = vld [vmem:[%s591 + $0x18] sm:$0xf]
        %v599 = vld [vmem:[%s591 + $0x1c] sm:$0xf]
        %v600 = vld [vmem:[%s591 + $0x20] sm:$0x3]
        %v610 = vunpack.c.l.b16 %v592
        %v611 = vunpack.c.l.b16 %v593
        %v612 = vunpack.c.l.b16 %v594
        %v613 = vunpack.c.l.b16 %v595
        %v614 = vunpack.c.l.b16 %v596
        %v615 = vunpack.c.l.b16 %v597
        %v616 = vunpack.c.l.b16 %v598
        %v617 = vunpack.c.l.b16 %v599
        %v618 = vunpack.c.l.b16 %v600
        %v619 = vpack.c.b16 %v611, %v610
        %v620 = vpack.c.b16 %v613, %v612
        %v621 = vpack.c.b16 %v615, %v614
        %v622 = vpack.c.b16 %v617, %v616
        %v623 = vpack.c.b16 %v618, %v618
        %vm624 = vcmask 523264
        %v626 = vsel %vm624, %v619, 0
        %v629 = vsel %vm624, %v620, 0
        %v632 = vsel %vm624, %v621, 0
        %v635 = vsel %vm624, %v622, 0
        %v638 = vsel %vm624, %v623, 0
        %640 = vmatprep.subr.bf16.mxu0 %v584
        %641 = vmatpush1.bf16.msra.mxu0 %v583
        %642 = vmatprep.subr.bf16.mxu0 %v586
        %643 = vmatpush1.bf16.msra.mxu0 %v585
        %644 = vmatprep.subr.bf16.mxu0 %v588
        %645 = vmatpush1.bf16.msra.mxu0 %v587
        %646 = vmatprep.subr.bf16.mxu0 %v590
        %647 = vmatpush1.bf16.msra.mxu0 %v589
        %648 = vmatprep.subr.bf16.mxu0 0
        %649 = vmatpush1.bf16.msra.mxu0 0
        %650 = vmatprep.subr.bf16.mxu0 0
        %651 = vmatpush1.bf16.msra.mxu0 0
        %652 = vmatprep.subr.bf16.mxu0 0
        %653 = vmatpush1.bf16.msra.mxu0 0
        %654 = vmatprep.subr.bf16.mxu0 0
        %655 = vmatpush1.bf16.msra.mxu0 0
        %656 = vmatprep.subr.bf16.mxu0 0
        %657 = vmatpush1.bf16.msra.mxu0 0
        %658 = vmatprep.subr.bf16.mxu0 0
        %659 = vmatpush1.bf16.msra.mxu0 0
        %660 = vmatprep.subr.bf16.mxu0 0
        %661 = vmatpush1.bf16.msra.mxu0 0
        %662 = vmatprep.subr.bf16.mxu0 0
        %663 = vmatpush1.bf16.msra.mxu0 0
        %664 = vmatprep.subr.bf16.mxu0 0
        %665 = vmatpush1.bf16.msra.mxu0 0
        %666 = vmatprep.subr.bf16.mxu0 0
        %667 = vmatpush1.bf16.msra.mxu0 0
        %668 = vmatprep.subr.bf16.mxu0 0
        %669 = vmatpush1.bf16.msra.mxu0 0
        %670 = vmatprep.subr.bf16.mxu0 0
        %671 = vmatpush1.bf16.msra.mxu0 0
        %672 = vmatprep.mubr.bf16.mxu0 0
        %673 = vmatmul.mubr.bf16.gmra.mrb[0].mxu0 %v626
        %v674 = vpop.f32.mrb[0].mxu0
        %v675 = vadd.f32 0.0, %v674
        %v676 = vpop.f32.mrb[0].mxu0
        %v677 = vadd.f32 0.0, %v676
        %v678 = vpop.f32.mrb[0].mxu0
        %v679 = vadd.f32 0.0, %v678
        %v680 = vpop.f32.mrb[0].mxu0
        %v681 = vadd.f32 0.0, %v680
        %682 = vmatprep.mubr.bf16.mxu0 0
        %683 = vmatmul.mubr.bf16.gmra.mrb[0].mxu0 %v629
        %v684 = vpop.f32.mrb[0].mxu0
        %v685 = vadd.f32 0.0, %v684
        %v686 = vpop.f32.mrb[0].mxu0
        %v687 = vadd.f32 0.0, %v686
        %v688 = vpop.f32.mrb[0].mxu0
        %v689 = vadd.f32 0.0, %v688
        %v690 = vpop.f32.mrb[0].mxu0
        %v691 = vadd.f32 0.0, %v690
        %692 = vmatprep.mubr.bf16.mxu0 0
        %693 = vmatmul.mubr.bf16.gmra.mrb[0].mxu0 %v632
        %v694 = vpop.f32.mrb[0].mxu0
        %v695 = vadd.f32 0.0, %v694
        %v696 = vpop.f32.mrb[0].mxu0
        %v697 = vadd.f32 0.0, %v696
        %v698 = vpop.f32.mrb[0].mxu0
        %v699 = vadd.f32 0.0, %v698
        %v700 = vpop.f32.mrb[0].mxu0
        %v701 = vadd.f32 0.0, %v700
        %702 = vmatprep.mubr.bf16.mxu0 0
        %703 = vmatmul.mubr.bf16.gmra.mrb[0].mxu0 %v635
        %v704 = vpop.f32.mrb[0].mxu0
        %v705 = vadd.f32 0.0, %v704
        %v706 = vpop.f32.mrb[0].mxu0
        %v707 = vadd.f32 0.0, %v706
        %v708 = vpop.f32.mrb[0].mxu0
        %v709 = vadd.f32 0.0, %v708
        %v710 = vpop.f32.mrb[0].mxu0
        %v711 = vadd.f32 0.0, %v710
        %712 = vmatprep.mubr.bf16.mxu0 0
        %713 = vmatmul.mubr.bf16.gmra.mrb[0].mxu0 %v638
        %v714 = vpop.f32.mrb[0].mxu0
        %v715 = vadd.f32 0.0, %v714
        %v716 = vpop.f32.mrb[0].mxu0
        %v717 = vadd.f32 0.0, %v716
        %v718 = vpop.f32.mrb[0].mxu0
        %v719 = vpop.f32.mrb[0].mxu0
        %720 = vdwg.mxu0
        %v730 = vunpack.c.l.b16 %v477
        %v731 = vunpack.c.l.b16 %v478
        %v732 = vunpack.c.l.b16 %v479
        %v733 = vunpack.c.l.b16 %v480
        %v734 = vunpack.c.l.b16 %v481
        %v735 = vunpack.c.l.b16 %v482
        %v736 = vunpack.c.l.b16 %v483
        %v737 = vunpack.c.l.b16 %v484
        %v738 = vunpack.c.l.b16 %v485
        %v739 = vpack.c.b16 %v731, %v730
        %v740 = vpack.c.b16 %v733, %v732
        %v741 = vpack.c.b16 %v735, %v734
        %v742 = vpack.c.b16 %v737, %v736
        %v743 = vpack.c.b16 %v738, %v738
        %v745 = vsel %vm624, %v739, 0
        %v748 = vsel %vm624, %v740, 0
        %v751 = vsel %vm624, %v741, 0
        %v754 = vsel %vm624, %v742, 0
        %v757 = vsel %vm624, %v743, 0
        %759 = vmatprep.subr.bf16.mxu0 %v470
        %760 = vmatpush1.bf16.msra.mxu0 %v469
        %761 = vmatprep.subr.bf16.mxu0 %v472
        %762 = vmatpush1.bf16.msra.mxu0 %v471
        %763 = vmatprep.subr.bf16.mxu0 %v474
        %764 = vmatpush1.bf16.msra.mxu0 %v473
        %765 = vmatprep.subr.bf16.mxu0 %v476
        %766 = vmatpush1.bf16.msra.mxu0 %v475
        %767 = vmatprep.subr.bf16.mxu0 0
        %768 = vmatpush1.bf16.msra.mxu0 0
        %769 = vmatprep.subr.bf16.mxu0 0
        %770 = vmatpush1.bf16.msra.mxu0 0
        %771 = vmatprep.subr.bf16.mxu0 0
        %772 = vmatpush1.bf16.msra.mxu0 0
        %773 = vmatprep.subr.bf16.mxu0 0
        %774 = vmatpush1.bf16.msra.mxu0 0
        %775 = vmatprep.subr.bf16.mxu0 0
        %776 = vmatpush1.bf16.msra.mxu0 0
        %777 = vmatprep.subr.bf16.mxu0 0
        %778 = vmatpush1.bf16.msra.mxu0 0
        %779 = vmatprep.subr.bf16.mxu0 0
        %780 = vmatpush1.bf16.msra.mxu0 0
        %781 = vmatprep.subr.bf16.mxu0 0
        %782 = vmatpush1.bf16.msra.mxu0 0
        %783 = vmatprep.subr.bf16.mxu0 0
        %784 = vmatpush1.bf16.msra.mxu0 0
        %785 = vmatprep.subr.bf16.mxu0 0
        %786 = vmatpush1.bf16.msra.mxu0 0
        %787 = vmatprep.subr.bf16.mxu0 0
        %788 = vmatpush1.bf16.msra.mxu0 0
        %789 = vmatprep.subr.bf16.mxu0 0
        %790 = vmatpush1.bf16.msra.mxu0 0
        %791 = vmatprep.mubr.bf16.mxu0 0
        %792 = vmatmul.mubr.bf16.gmra.mrb[0].mxu0 %v745
        %v793 = vpop.f32.mrb[0].mxu0
        %v794 = vadd.f32 %v675, %v793
        %v795 = vpop.f32.mrb[0].mxu0
        %v796 = vadd.f32 %v677, %v795
        %v797 = vpop.f32.mrb[0].mxu0
        %v798 = vadd.f32 %v679, %v797
        %v799 = vpop.f32.mrb[0].mxu0
        %v800 = vadd.f32 %v681, %v799
        %801 = vmatprep.mubr.bf16.mxu0 0
        %802 = vmatmul.mubr.bf16.gmra.mrb[0].mxu0 %v748
        %v803 = vpop.f32.mrb[0].mxu0
        %v804 = vadd.f32 %v685, %v803
        %v805 = vpop.f32.mrb[0].mxu0
        %v806 = vadd.f32 %v687, %v805
        %v807 = vpop.f32.mrb[0].mxu0
        %v808 = vadd.f32 %v689, %v807
        %v809 = vpop.f32.mrb[0].mxu0
        %v810 = vadd.f32 %v691, %v809
        %811 = vmatprep.mubr.bf16.mxu0 0
        %812 = vmatmul.mubr.bf16.gmra.mrb[0].mxu0 %v751
        %v813 = vpop.f32.mrb[0].mxu0
        %v814 = vadd.f32 %v695, %v813
        %v815 = vpop.f32.mrb[0].mxu0
        %v816 = vadd.f32 %v697, %v815
        %v817 = vpop.f32.mrb[0].mxu0
        %v818 = vadd.f32 %v699, %v817
        %v819 = vpop.f32.mrb[0].mxu0
        %v820 = vadd.f32 %v701, %v819
        %821 = vmatprep.mubr.bf16.mxu0 0
        %822 = vmatmul.mubr.bf16.gmra.mrb[0].mxu0 %v754
        %v823 = vpop.f32.mrb[0].mxu0
        %v824 = vadd.f32 %v705, %v823
        %v825 = vpop.f32.mrb[0].mxu0
        %v826 = vadd.f32 %v707, %v825
        %v827 = vpop.f32.mrb[0].mxu0
        %v828 = vadd.f32 %v709, %v827
        %v829 = vpop.f32.mrb[0].mxu0
        %v830 = vadd.f32 %v711, %v829
        %831 = vmatprep.mubr.bf16.mxu0 0
        %832 = vmatmul.mubr.bf16.gmra.mrb[0].mxu0 %v757
        %v833 = vpop.f32.mrb[0].mxu0
        %v834 = vadd.f32 %v715, %v833
        %v835 = vpop.f32.mrb[0].mxu0
        %v836 = vadd.f32 %v717, %v835
        %v837 = vpop.f32.mrb[0].mxu0
        %v838 = vpop.f32.mrb[0].mxu0
        %839 = vdwg.mxu0
        %840 = vrot.lane.b32.xlu0 %v337, 15
        %v841 = vpop.permute.xlu0 %840
        %842 = vrot.lane.b32.xlu0 %v339, 15
        %v843 = vpop.permute.xlu0 %842
        %844 = vrot.lane.b32.xlu0 %v341, 15
        %v845 = vpop.permute.xlu0 %844
        %846 = vrot.lane.b32.xlu0 %v343, 15
        %v847 = vpop.permute.xlu0 %846
        %848 = vrot.lane.b32.xlu0 %v345, 15
        %v849 = vpop.permute.xlu0 %848
        %850 = vrot.lane.b32.xlu0 %v347, 15
        %v851 = vpop.permute.xlu0 %850
        %852 = vrot.lane.b32.xlu0 %v349, 15
        %v853 = vpop.permute.xlu0 %852
        %854 = vrot.lane.b32.xlu0 %v351, 15
        %v855 = vpop.permute.xlu0 %854
        %864 = vrot.lane.b32.xlu0 %v336, 15
        %v865 = vpop.permute.xlu0 %864
        %866 = vrot.lane.b32.xlu0 %v338, 15
        %v867 = vpop.permute.xlu0 %866
        %868 = vrot.lane.b32.xlu0 %v340, 15
        %v869 = vpop.permute.xlu0 %868
        %870 = vrot.lane.b32.xlu0 %v342, 15
        %v871 = vpop.permute.xlu0 %870
        %872 = vrot.lane.b32.xlu0 %v344, 15
        %v873 = vpop.permute.xlu0 %872
        %874 = vrot.lane.b32.xlu0 %v346, 15
        %v875 = vpop.permute.xlu0 %874
        %876 = vrot.lane.b32.xlu0 %v348, 15
        %v877 = vpop.permute.xlu0 %876
        %878 = vrot.lane.b32.xlu0 %v350, 15
        %v879 = vpop.permute.xlu0 %878
        %vm880 = vcmask 121856
        %v881 = vsel %vm880, %v865, %v841
        %v882 = vsel %vm880, %v867, %v843
        %v883 = vsel %vm880, %v869, %v845
        %v884 = vsel %vm880, %v871, %v847
        %v885 = vsel %vm880, %v873, %v849
        %v886 = vsel %vm880, %v875, %v851
        %v887 = vsel %vm880, %v877, %v853
        %v888 = vsel %vm880, %v879, %v855
        %v905 = vsel %vm880, %v841, %v865
        %v906 = vsel %vm880, %v843, %v867
        %v907 = vsel %vm880, %v845, %v869
        %v908 = vsel %vm880, %v847, %v871
        %v909 = vsel %vm880, %v849, %v873
        %v910 = vsel %vm880, %v851, %v875
        %v911 = vsel %vm880, %v853, %v877
        %v912 = vsel %vm880, %v855, %v879
        %v913 = vlaneseq
        %v914 = vshrl.u32 %v913, 7
        %v915 = vsub.s32 2, %v914
        %v916 = vrot.slane %v352, %v915
        %v917 = vlaneseq
        %v918 = vshrl.u32 %v917, 7
        %v919 = vsub.s32 2, %v918
        %v920 = vrot.slane %v353, %v919
        %v921 = vmul.f32 %v905, %v916
        %v922 = vmul.f32 %v881, %v920
        %v923 = vmul.f32 %v906, %v916
        %v924 = vmul.f32 %v882, %v920
        %v925 = vmul.f32 %v907, %v916
        %v926 = vmul.f32 %v883, %v920
        %v927 = vmul.f32 %v908, %v916
        %v928 = vmul.f32 %v884, %v920
        %v929 = vmul.f32 %v909, %v916
        %v930 = vmul.f32 %v885, %v920
        %v931 = vmul.f32 %v910, %v916
        %v932 = vmul.f32 %v886, %v920
        %v933 = vmul.f32 %v911, %v916
        %v934 = vmul.f32 %v887, %v920
        %v935 = vmul.f32 %v912, %v916
        %v936 = vmul.f32 %v888, %v920
        %v937 = vpack.c.bf16 %v923, %v921
        %v938 = vpack.c.bf16 %v924, %v922
        %v939 = vpack.c.bf16 %v927, %v925
        %v940 = vpack.c.bf16 %v928, %v926
        %v941 = vpack.c.bf16 %v931, %v929
        %v942 = vpack.c.bf16 %v932, %v930
        %v943 = vpack.c.bf16 %v935, %v933
        %v944 = vpack.c.bf16 %v936, %v934
        %s945 = scalar_lea.vmem %s3, 72
        %v946 = vld [vmem:[%s945] sm:$0xf]
        %v947 = vld [vmem:[%s945 + $0x4] sm:$0xf]
        %v948 = vld [vmem:[%s945 + $0x8] sm:$0xf]
        %v949 = vld [vmem:[%s945 + $0xc] sm:$0xf]
        %v950 = vld [vmem:[%s945 + $0x10] sm:$0xf]
        %v951 = vld [vmem:[%s945 + $0x14] sm:$0xf]
        %v952 = vld [vmem:[%s945 + $0x18] sm:$0xf]
        %v953 = vld [vmem:[%s945 + $0x1c] sm:$0xf]
        %v954 = vld [vmem:[%s945 + $0x20] sm:$0x3]
        %v964 = vunpack.c.l.b16 %v946
        %v965 = vunpack.c.l.b16 %v947
        %v966 = vunpack.c.l.b16 %v948
        %v967 = vunpack.c.l.b16 %v949
        %v968 = vunpack.c.l.b16 %v950
        %v969 = vunpack.c.l.b16 %v951
        %v970 = vunpack.c.l.b16 %v952
        %v971 = vunpack.c.l.b16 %v953
        %v972 = vunpack.c.l.b16 %v954
        %v973 = vpack.c.b16 %v965, %v964
        %v974 = vpack.c.b16 %v967, %v966
        %v975 = vpack.c.b16 %v969, %v968
        %v976 = vpack.c.b16 %v971, %v970
        %v977 = vpack.c.b16 %v972, %v972
        %v979 = vsel %vm624, %v973, 0
        %v982 = vsel %vm624, %v974, 0
        %v985 = vsel %vm624, %v975, 0
        %v988 = vsel %vm624, %v976, 0
        %v991 = vsel %vm624, %v977, 0
        %993 = vmatprep.subr.bf16.mxu0 %v938
        %994 = vmatpush1.bf16.msra.mxu0 %v937
        %995 = vmatprep.subr.bf16.mxu0 %v940
        %996 = vmatpush1.bf16.msra.mxu0 %v939
        %997 = vmatprep.subr.bf16.mxu0 %v942
        %998 = vmatpush1.bf16.msra.mxu0 %v941
        %999 = vmatprep.subr.bf16.mxu0 %v944
        %1000 = vmatpush1.bf16.msra.mxu0 %v943
        %1001 = vmatprep.subr.bf16.mxu0 0
        %1002 = vmatpush1.bf16.msra.mxu0 0
        %1003 = vmatprep.subr.bf16.mxu0 0
        %1004 = vmatpush1.bf16.msra.mxu0 0
        %1005 = vmatprep.subr.bf16.mxu0 0
        %1006 = vmatpush1.bf16.msra.mxu0 0
        %1007 = vmatprep.subr.bf16.mxu0 0
        %1008 = vmatpush1.bf16.msra.mxu0 0
        %1009 = vmatprep.subr.bf16.mxu0 0
        %1010 = vmatpush1.bf16.msra.mxu0 0
        %1011 = vmatprep.subr.bf16.mxu0 0
        %1012 = vmatpush1.bf16.msra.mxu0 0
        %1013 = vmatprep.subr.bf16.mxu0 0
        %1014 = vmatpush1.bf16.msra.mxu0 0
        %1015 = vmatprep.subr.bf16.mxu0 0
        %1016 = vmatpush1.bf16.msra.mxu0 0
        %1017 = vmatprep.subr.bf16.mxu0 0
        %1018 = vmatpush1.bf16.msra.mxu0 0
        %1019 = vmatprep.subr.bf16.mxu0 0
        %1020 = vmatpush1.bf16.msra.mxu0 0
        %1021 = vmatprep.subr.bf16.mxu0 0
        %1022 = vmatpush1.bf16.msra.mxu0 0
        %1023 = vmatprep.subr.bf16.mxu0 0
        %1024 = vmatpush1.bf16.msra.mxu0 0
        %1025 = vmatprep.mubr.bf16.mxu0 0
        %1026 = vmatmul.mubr.bf16.gmra.mrb[0].mxu0 %v979
        %v1027 = vpop.f32.mrb[0].mxu0
        %v1028 = vadd.f32 0.0, %v1027
        %v1029 = vpop.f32.mrb[0].mxu0
        %v1030 = vadd.f32 0.0, %v1029
        %v1031 = vpop.f32.mrb[0].mxu0
        %v1032 = vadd.f32 0.0, %v1031
        %v1033 = vpop.f32.mrb[0].mxu0
        %v1034 = vadd.f32 0.0, %v1033
        %1035 = vmatprep.mubr.bf16.mxu0 0
        %1036 = vmatmul.mubr.bf16.gmra.mrb[0].mxu0 %v982
        %v1037 = vpop.f32.mrb[0].mxu0
        %v1038 = vadd.f32 0.0, %v1037
        %v1039 = vpop.f32.mrb[0].mxu0
        %v1040 = vadd.f32 0.0, %v1039
        %v1041 = vpop.f32.mrb[0].mxu0
        %v1042 = vadd.f32 0.0, %v1041
        %v1043 = vpop.f32.mrb[0].mxu0
        %v1044 = vadd.f32 0.0, %v1043
        %1045 = vmatprep.mubr.bf16.mxu0 0
        %1046 = vmatmul.mubr.bf16.gmra.mrb[0].mxu0 %v985
        %v1047 = vpop.f32.mrb[0].mxu0
        %v1048 = vadd.f32 0.0, %v1047
        %v1049 = vpop.f32.mrb[0].mxu0
        %v1050 = vadd.f32 0.0, %v1049
        %v1051 = vpop.f32.mrb[0].mxu0
        %v1052 = vadd.f32 0.0, %v1051
        %v1053 = vpop.f32.mrb[0].mxu0
        %v1054 = vadd.f32 0.0, %v1053
        %1055 = vmatprep.mubr.bf16.mxu0 0
        %1056 = vmatmul.mubr.bf16.gmra.mrb[0].mxu0 %v988
        %v1057 = vpop.f32.mrb[0].mxu0
        %v1058 = vadd.f32 0.0, %v1057
        %v1059 = vpop.f32.mrb[0].mxu0
        %v1060 = vadd.f32 0.0, %v1059
        %v1061 = vpop.f32.mrb[0].mxu0
        %v1062 = vadd.f32 0.0, %v1061
        %v1063 = vpop.f32.mrb[0].mxu0
        %v1064 = vadd.f32 0.0, %v1063
        %1065 = vmatprep.mubr.bf16.mxu0 0
        %1066 = vmatmul.mubr.bf16.gmra.mrb[0].mxu0 %v991
        %v1067 = vpop.f32.mrb[0].mxu0
        %v1068 = vadd.f32 0.0, %v1067
        %v1069 = vpop.f32.mrb[0].mxu0
        %v1070 = vadd.f32 0.0, %v1069
        %v1071 = vpop.f32.mrb[0].mxu0
        %v1072 = vpop.f32.mrb[0].mxu0
        %1073 = vdwg.mxu0
        %v1074 = vadd.f32 %v794, %v1028
        %v1075 = vadd.f32 %v796, %v1030
        %v1076 = vadd.f32 %v798, %v1032
        %v1077 = vadd.f32 %v800, %v1034
        %v1078 = vadd.f32 %v804, %v1038
        %v1079 = vadd.f32 %v806, %v1040
        %v1080 = vadd.f32 %v808, %v1042
        %v1081 = vadd.f32 %v810, %v1044
        %v1082 = vadd.f32 %v814, %v1048
        %v1083 = vadd.f32 %v816, %v1050
        %v1084 = vadd.f32 %v818, %v1052
        %v1085 = vadd.f32 %v820, %v1054
        %v1086 = vadd.f32 %v824, %v1058
        %v1087 = vadd.f32 %v826, %v1060
        %v1088 = vadd.f32 %v828, %v1062
        %v1089 = vadd.f32 %v830, %v1064
        %v1090 = vadd.f32 %v834, %v1068
        %v1091 = vadd.f32 %v836, %v1070
        %1092 = vrot.lane.b32.xlu0 %v337, 1
        %v1093 = vpop.permute.xlu0 %1092
        %1094 = vrot.lane.b32.xlu0 %v339, 1
        %v1095 = vpop.permute.xlu0 %1094
        %1096 = vrot.lane.b32.xlu0 %v341, 1
        %v1097 = vpop.permute.xlu0 %1096
        %1098 = vrot.lane.b32.xlu0 %v343, 1
        %v1099 = vpop.permute.xlu0 %1098
        %1100 = vrot.lane.b32.xlu0 %v345, 1
        %v1101 = vpop.permute.xlu0 %1100
        %1102 = vrot.lane.b32.xlu0 %v347, 1
        %v1103 = vpop.permute.xlu0 %1102
        %1104 = vrot.lane.b32.xlu0 %v349, 1
        %v1105 = vpop.permute.xlu0 %1104
        %1106 = vrot.lane.b32.xlu0 %v351, 1
        %v1107 = vpop.permute.xlu0 %1106
        %1116 = vrot.lane.b32.xlu0 %v336, 1
        %v1117 = vpop.permute.xlu0 %1116
        %1118 = vrot.lane.b32.xlu0 %v338, 1
        %v1119 = vpop.permute.xlu0 %1118
        %1120 = vrot.lane.b32.xlu0 %v340, 1
        %v1121 = vpop.permute.xlu0 %1120
        %1122 = vrot.lane.b32.xlu0 %v342, 1
        %v1123 = vpop.permute.xlu0 %1122
        %1124 = vrot.lane.b32.xlu0 %v344, 1
        %v1125 = vpop.permute.xlu0 %1124
        %1126 = vrot.lane.b32.xlu0 %v346, 1
        %v1127 = vpop.permute.xlu0 %1126
        %1128 = vrot.lane.b32.xlu0 %v348, 1
        %v1129 = vpop.permute.xlu0 %1128
        %1130 = vrot.lane.b32.xlu0 %v350, 1
        %v1131 = vpop.permute.xlu0 %1130
        %vm1132 = vcmask 7168
        %v1133 = vsel %vm1132, %v1117, %v1093
        %v1134 = vsel %vm1132, %v1119, %v1095
        %v1135 = vsel %vm1132, %v1121, %v1097
        %v1136 = vsel %vm1132, %v1123, %v1099
        %v1137 = vsel %vm1132, %v1125, %v1101
        %v1138 = vsel %vm1132, %v1127, %v1103
        %v1139 = vsel %vm1132, %v1129, %v1105
        %v1140 = vsel %vm1132, %v1131, %v1107
        %v1157 = vsel %vm1132, %v1093, %v1117
        %v1158 = vsel %vm1132, %v1095, %v1119
        %v1159 = vsel %vm1132, %v1097, %v1121
        %v1160 = vsel %vm1132, %v1099, %v1123
        %v1161 = vsel %vm1132, %v1101, %v1125
        %v1162 = vsel %vm1132, %v1103, %v1127
        %v1163 = vsel %vm1132, %v1105, %v1129
        %v1164 = vsel %vm1132, %v1107, %v1131
        %v1165 = vlaneseq
        %v1166 = vshrl.u32 %v1165, 7
        %v1167 = vsub.s32 3, %v1166
        %v1168 = vrot.slane %v352, %v1167
        %v1169 = vlaneseq
        %v1170 = vshrl.u32 %v1169, 7
        %v1171 = vsub.s32 3, %v1170
        %v1172 = vrot.slane %v353, %v1171
        %v1173 = vmul.f32 %v1157, %v1168
        %v1174 = vmul.f32 %v1133, %v1172
        %v1175 = vmul.f32 %v1158, %v1168
        %v1176 = vmul.f32 %v1134, %v1172
        %v1177 = vmul.f32 %v1159, %v1168
        %v1178 = vmul.f32 %v1135, %v1172
        %v1179 = vmul.f32 %v1160, %v1168
        %v1180 = vmul.f32 %v1136, %v1172
        %v1181 = vmul.f32 %v1161, %v1168
        %v1182 = vmul.f32 %v1137, %v1172
        %v1183 = vmul.f32 %v1162, %v1168
        %v1184 = vmul.f32 %v1138, %v1172
        %v1185 = vmul.f32 %v1163, %v1168
        %v1186 = vmul.f32 %v1139, %v1172
        %v1187 = vmul.f32 %v1164, %v1168
        %v1188 = vmul.f32 %v1140, %v1172
        %v1189 = vpack.c.bf16 %v1175, %v1173
        %v1190 = vpack.c.bf16 %v1176, %v1174
        %v1191 = vpack.c.bf16 %v1179, %v1177
        %v1192 = vpack.c.bf16 %v1180, %v1178
        %v1193 = vpack.c.bf16 %v1183, %v1181
        %v1194 = vpack.c.bf16 %v1184, %v1182
        %v1195 = vpack.c.bf16 %v1187, %v1185
        %v1196 = vpack.c.bf16 %v1188, %v1186
        %s1197 = scalar_lea.vmem %s3, 108
        %v1198 = vld [vmem:[%s1197] sm:$0xf]
        %v1199 = vld [vmem:[%s1197 + $0x4] sm:$0xf]
        %v1200 = vld [vmem:[%s1197 + $0x8] sm:$0xf]
        %v1201 = vld [vmem:[%s1197 + $0xc] sm:$0xf]
        %v1202 = vld [vmem:[%s1197 + $0x10] sm:$0xf]
        %v1203 = vld [vmem:[%s1197 + $0x14] sm:$0xf]
        %v1204 = vld [vmem:[%s1197 + $0x18] sm:$0xf]
        %v1205 = vld [vmem:[%s1197 + $0x1c] sm:$0xf]
        %v1206 = vld [vmem:[%s1197 + $0x20] sm:$0x3]
        %v1216 = vunpack.c.l.b16 %v1198
        %v1217 = vunpack.c.l.b16 %v1199
        %v1218 = vunpack.c.l.b16 %v1200
        %v1219 = vunpack.c.l.b16 %v1201
        %v1220 = vunpack.c.l.b16 %v1202
        %v1221 = vunpack.c.l.b16 %v1203
        %v1222 = vunpack.c.l.b16 %v1204
        %v1223 = vunpack.c.l.b16 %v1205
        %v1224 = vunpack.c.l.b16 %v1206
        %v1225 = vpack.c.b16 %v1217, %v1216
        %v1226 = vpack.c.b16 %v1219, %v1218
        %v1227 = vpack.c.b16 %v1221, %v1220
        %v1228 = vpack.c.b16 %v1223, %v1222
        %v1229 = vpack.c.b16 %v1224, %v1224
        %v1231 = vsel %vm624, %v1225, 0
        %v1234 = vsel %vm624, %v1226, 0
        %v1237 = vsel %vm624, %v1227, 0
        %v1240 = vsel %vm624, %v1228, 0
        %v1243 = vsel %vm624, %v1229, 0
        %1245 = vmatprep.subr.bf16.mxu0 %v1190
        %1246 = vmatpush1.bf16.msra.mxu0 %v1189
        %1247 = vmatprep.subr.bf16.mxu0 %v1192
        %1248 = vmatpush1.bf16.msra.mxu0 %v1191
        %1249 = vmatprep.subr.bf16.mxu0 %v1194
        %1250 = vmatpush1.bf16.msra.mxu0 %v1193
        %1251 = vmatprep.subr.bf16.mxu0 %v1196
        %1252 = vmatpush1.bf16.msra.mxu0 %v1195
        %1253 = vmatprep.subr.bf16.mxu0 0
        %1254 = vmatpush1.bf16.msra.mxu0 0
        %1255 = vmatprep.subr.bf16.mxu0 0
        %1256 = vmatpush1.bf16.msra.mxu0 0
        %1257 = vmatprep.subr.bf16.mxu0 0
        %1258 = vmatpush1.bf16.msra.mxu0 0
        %1259 = vmatprep.subr.bf16.mxu0 0
        %1260 = vmatpush1.bf16.msra.mxu0 0
        %1261 = vmatprep.subr.bf16.mxu0 0
        %1262 = vmatpush1.bf16.msra.mxu0 0
        %1263 = vmatprep.subr.bf16.mxu0 0
        %1264 = vmatpush1.bf16.msra.mxu0 0
        %1265 = vmatprep.subr.bf16.mxu0 0
        %1266 = vmatpush1.bf16.msra.mxu0 0
        %1267 = vmatprep.subr.bf16.mxu0 0
        %1268 = vmatpush1.bf16.msra.mxu0 0
        %1269 = vmatprep.subr.bf16.mxu0 0
        %1270 = vmatpush1.bf16.msra.mxu0 0
        %1271 = vmatprep.subr.bf16.mxu0 0
        %1272 = vmatpush1.bf16.msra.mxu0 0
        %1273 = vmatprep.subr.bf16.mxu0 0
        %1274 = vmatpush1.bf16.msra.mxu0 0
        %1275 = vmatprep.subr.bf16.mxu0 0
        %1276 = vmatpush1.bf16.msra.mxu0 0
        %1277 = vmatprep.mubr.bf16.mxu0 0
        %1278 = vmatmul.mubr.bf16.gmra.mrb[0].mxu0 %v1231
        %v1279 = vpop.f32.mrb[0].mxu0
        %v1280 = vadd.f32 0.0, %v1279
        %v1281 = vpop.f32.mrb[0].mxu0
        %v1282 = vadd.f32 0.0, %v1281
        %v1283 = vpop.f32.mrb[0].mxu0
        %v1284 = vadd.f32 0.0, %v1283
        %v1285 = vpop.f32.mrb[0].mxu0
        %v1286 = vadd.f32 0.0, %v1285
        %1287 = vmatprep.mubr.bf16.mxu0 0
        %1288 = vmatmul.mubr.bf16.gmra.mrb[0].mxu0 %v1234
        %v1289 = vpop.f32.mrb[0].mxu0
        %v1290 = vadd.f32 0.0, %v1289
        %v1291 = vpop.f32.mrb[0].mxu0
        %v1292 = vadd.f32 0.0, %v1291
        %v1293 = vpop.f32.mrb[0].mxu0
        %v1294 = vadd.f32 0.0, %v1293
        %v1295 = vpop.f32.mrb[0].mxu0
        %v1296 = vadd.f32 0.0, %v1295
        %1297 = vmatprep.mubr.bf16.mxu0 0
        %1298 = vmatmul.mubr.bf16.gmra.mrb[0].mxu0 %v1237
        %v1299 = vpop.f32.mrb[0].mxu0
        %v1300 = vadd.f32 0.0, %v1299
        %v1301 = vpop.f32.mrb[0].mxu0
        %v1302 = vadd.f32 0.0, %v1301
        %v1303 = vpop.f32.mrb[0].mxu0
        %v1304 = vadd.f32 0.0, %v1303
        %v1305 = vpop.f32.mrb[0].mxu0
        %v1306 = vadd.f32 0.0, %v1305
        %1307 = vmatprep.mubr.bf16.mxu0 0
        %1308 = vmatmul.mubr.bf16.gmra.mrb[0].mxu0 %v1240
        %v1309 = vpop.f32.mrb[0].mxu0
        %v1310 = vadd.f32 0.0, %v1309
        %v1311 = vpop.f32.mrb[0].mxu0
        %v1312 = vadd.f32 0.0, %v1311
        %v1313 = vpop.f32.mrb[0].mxu0
        %v1314 = vadd.f32 0.0, %v1313
        %v1315 = vpop.f32.mrb[0].mxu0
        %v1316 = vadd.f32 0.0, %v1315
        %1317 = vmatprep.mubr.bf16.mxu0 0
        %1318 = vmatmul.mubr.bf16.gmra.mrb[0].mxu0 %v1243
        %v1319 = vpop.f32.mrb[0].mxu0
        %v1320 = vadd.f32 0.0, %v1319
        %v1321 = vpop.f32.mrb[0].mxu0
        %v1322 = vadd.f32 0.0, %v1321
        %v1323 = vpop.f32.mrb[0].mxu0
        %v1324 = vpop.f32.mrb[0].mxu0
        %1325 = vdwg.mxu0
        %v1326 = vadd.f32 %v1074, %v1280
        %v1327 = vadd.f32 %v1075, %v1282
        %v1328 = vadd.f32 %v1076, %v1284
        %v1329 = vadd.f32 %v1077, %v1286
        %v1330 = vadd.f32 %v1078, %v1290
        %v1331 = vadd.f32 %v1079, %v1292
        %v1332 = vadd.f32 %v1080, %v1294
        %v1333 = vadd.f32 %v1081, %v1296
        %v1334 = vadd.f32 %v1082, %v1300
        %v1335 = vadd.f32 %v1083, %v1302
        %v1336 = vadd.f32 %v1084, %v1304
        %v1337 = vadd.f32 %v1085, %v1306
        %v1338 = vadd.f32 %v1086, %v1310
        %v1339 = vadd.f32 %v1087, %v1312
        %v1340 = vadd.f32 %v1088, %v1314
        %v1341 = vadd.f32 %v1089, %v1316
        %v1342 = vadd.f32 %v1090, %v1320
        %v1343 = vadd.f32 %v1091, %v1322
        %v1344 = vlaneseq
        %v1345 = vshrl.u32 %v1344, 7
        %v1346 = vsub.s32 4, %v1345
        %v1347 = vrot.slane %v352, %v1346
        %v1348 = vlaneseq
        %v1349 = vshrl.u32 %v1348, 7
        %v1350 = vsub.s32 4, %v1349
        %v1351 = vrot.slane %v353, %v1350
        %v1352 = vmul.f32 %v336, %v1347
        %v1353 = vmul.f32 %v337, %v1351
        %v1354 = vmul.f32 %v338, %v1347
        %v1355 = vmul.f32 %v339, %v1351
        %v1356 = vmul.f32 %v340, %v1347
        %v1357 = vmul.f32 %v341, %v1351
        %v1358 = vmul.f32 %v342, %v1347
        %v1359 = vmul.f32 %v343, %v1351
        %v1360 = vmul.f32 %v344, %v1347
        %v1361 = vmul.f32 %v345, %v1351
        %v1362 = vmul.f32 %v346, %v1347
        %v1363 = vmul.f32 %v347, %v1351
        %v1364 = vmul.f32 %v348, %v1347
        %v1365 = vmul.f32 %v349, %v1351
        %v1366 = vmul.f32 %v350, %v1347
        %v1367 = vmul.f32 %v351, %v1351
        %v1368 = vpack.c.bf16 %v1354, %v1352
        %v1369 = vpack.c.bf16 %v1355, %v1353
        %v1370 = vpack.c.bf16 %v1358, %v1356
        %v1371 = vpack.c.bf16 %v1359, %v1357
        %v1372 = vpack.c.bf16 %v1362, %v1360
        %v1373 = vpack.c.bf16 %v1363, %v1361
        %v1374 = vpack.c.bf16 %v1366, %v1364
        %v1375 = vpack.c.bf16 %v1367, %v1365
        %s1376 = scalar_lea.vmem %s3, 144
        %v1377 = vld [vmem:[%s1376] sm:$0xf]
        %v1378 = vld [vmem:[%s1376 + $0x4] sm:$0xf]
        %v1379 = vld [vmem:[%s1376 + $0x8] sm:$0xf]
        %v1380 = vld [vmem:[%s1376 + $0xc] sm:$0xf]
        %v1381 = vld [vmem:[%s1376 + $0x10] sm:$0xf]
        %v1382 = vld [vmem:[%s1376 + $0x14] sm:$0xf]
        %v1383 = vld [vmem:[%s1376 + $0x18] sm:$0xf]
        %v1384 = vld [vmem:[%s1376 + $0x1c] sm:$0xf]
        %v1385 = vld [vmem:[%s1376 + $0x20] sm:$0x3]
        %v1395 = vunpack.c.l.b16 %v1377
        %v1396 = vunpack.c.l.b16 %v1378
        %v1397 = vunpack.c.l.b16 %v1379
        %v1398 = vunpack.c.l.b16 %v1380
        %v1399 = vunpack.c.l.b16 %v1381
        %v1400 = vunpack.c.l.b16 %v1382
        %v1401 = vunpack.c.l.b16 %v1383
        %v1402 = vunpack.c.l.b16 %v1384
        %v1403 = vunpack.c.l.b16 %v1385
        %v1404 = vpack.c.b16 %v1396, %v1395
        %v1405 = vpack.c.b16 %v1398, %v1397
        %v1406 = vpack.c.b16 %v1400, %v1399
        %v1407 = vpack.c.b16 %v1402, %v1401
        %v1408 = vpack.c.b16 %v1403, %v1403
        %v1410 = vsel %vm624, %v1404, 0
        %v1413 = vsel %vm624, %v1405, 0
        %v1416 = vsel %vm624, %v1406, 0
        %v1419 = vsel %vm624, %v1407, 0
        %v1422 = vsel %vm624, %v1408, 0
        %1424 = vmatprep.subr.bf16.mxu0 %v1369
        %1425 = vmatpush1.bf16.msra.mxu0 %v1368
        %1426 = vmatprep.subr.bf16.mxu0 %v1371
        %1427 = vmatpush1.bf16.msra.mxu0 %v1370
        %1428 = vmatprep.subr.bf16.mxu0 %v1373
        %1429 = vmatpush1.bf16.msra.mxu0 %v1372
        %1430 = vmatprep.subr.bf16.mxu0 %v1375
        %1431 = vmatpush1.bf16.msra.mxu0 %v1374
        %1432 = vmatprep.subr.bf16.mxu0 0
        %1433 = vmatpush1.bf16.msra.mxu0 0
        %1434 = vmatprep.subr.bf16.mxu0 0
        %1435 = vmatpush1.bf16.msra.mxu0 0
        %1436 = vmatprep.subr.bf16.mxu0 0
        %1437 = vmatpush1.bf16.msra.mxu0 0
        %1438 = vmatprep.subr.bf16.mxu0 0
        %1439 = vmatpush1.bf16.msra.mxu0 0
        %1440 = vmatprep.subr.bf16.mxu0 0
        %1441 = vmatpush1.bf16.msra.mxu0 0
        %1442 = vmatprep.subr.bf16.mxu0 0
        %1443 = vmatpush1.bf16.msra.mxu0 0
        %1444 = vmatprep.subr.bf16.mxu0 0
        %1445 = vmatpush1.bf16.msra.mxu0 0
        %1446 = vmatprep.subr.bf16.mxu0 0
        %1447 = vmatpush1.bf16.msra.mxu0 0
        %1448 = vmatprep.subr.bf16.mxu0 0
        %1449 = vmatpush1.bf16.msra.mxu0 0
        %1450 = vmatprep.subr.bf16.mxu0 0
        %1451 = vmatpush1.bf16.msra.mxu0 0
        %1452 = vmatprep.subr.bf16.mxu0 0
        %1453 = vmatpush1.bf16.msra.mxu0 0
        %1454 = vmatprep.subr.bf16.mxu0 0
        %1455 = vmatpush1.bf16.msra.mxu0 0
        %1456 = vmatprep.mubr.bf16.mxu0 0
        %1457 = vmatmul.mubr.bf16.gmra.mrb[0].mxu0 %v1410
        %v1458 = vpop.f32.mrb[0].mxu0
        %v1459 = vadd.f32 0.0, %v1458
        %v1460 = vpop.f32.mrb[0].mxu0
        %v1461 = vadd.f32 0.0, %v1460
        %v1462 = vpop.f32.mrb[0].mxu0
        %v1463 = vadd.f32 0.0, %v1462
        %v1464 = vpop.f32.mrb[0].mxu0
        %v1465 = vadd.f32 0.0, %v1464
        %1466 = vmatprep.mubr.bf16.mxu0 0
        %1467 = vmatmul.mubr.bf16.gmra.mrb[0].mxu0 %v1413
        %v1468 = vpop.f32.mrb[0].mxu0
        %v1469 = vadd.f32 0.0, %v1468
        %v1470 = vpop.f32.mrb[0].mxu0
        %v1471 = vadd.f32 0.0, %v1470
        %v1472 = vpop.f32.mrb[0].mxu0
        %v1473 = vadd.f32 0.0, %v1472
        %v1474 = vpop.f32.mrb[0].mxu0
        %v1475 = vadd.f32 0.0, %v1474
        %1476 = vmatprep.mubr.bf16.mxu0 0
        %1477 = vmatmul.mubr.bf16.gmra.mrb[0].mxu0 %v1416
        %v1478 = vpop.f32.mrb[0].mxu0
        %v1479 = vadd.f32 0.0, %v1478
        %v1480 = vpop.f32.mrb[0].mxu0
        %v1481 = vadd.f32 0.0, %v1480
        %v1482 = vpop.f32.mrb[0].mxu0
        %v1483 = vadd.f32 0.0, %v1482
        %v1484 = vpop.f32.mrb[0].mxu0
        %v1485 = vadd.f32 0.0, %v1484
        %1486 = vmatprep.mubr.bf16.mxu0 0
        %1487 = vmatmul.mubr.bf16.gmra.mrb[0].mxu0 %v1419
        %v1488 = vpop.f32.mrb[0].mxu0
        %v1489 = vadd.f32 0.0, %v1488
        %v1490 = vpop.f32.mrb[0].mxu0
        %v1491 = vadd.f32 0.0, %v1490
        %v1492 = vpop.f32.mrb[0].mxu0
        %v1493 = vadd.f32 0.0, %v1492
        %v1494 = vpop.f32.mrb[0].mxu0
        %v1495 = vadd.f32 0.0, %v1494
        %1496 = vmatprep.mubr.bf16.mxu0 0
        %1497 = vmatmul.mubr.bf16.gmra.mrb[0].mxu0 %v1422
        %v1498 = vpop.f32.mrb[0].mxu0
        %v1499 = vadd.f32 0.0, %v1498
        %v1500 = vpop.f32.mrb[0].mxu0
        %v1501 = vadd.f32 0.0, %v1500
        %v1502 = vpop.f32.mrb[0].mxu0
        %v1503 = vpop.f32.mrb[0].mxu0
        %1504 = vdwg.mxu0
        %v1505 = vadd.f32 %v1326, %v1459
        %v1506 = vadd.f32 %v1327, %v1461
        %v1507 = vadd.f32 %v1328, %v1463
        %v1508 = vadd.f32 %v1329, %v1465
        %v1509 = vadd.f32 %v1330, %v1469
        %v1510 = vadd.f32 %v1331, %v1471
        %v1511 = vadd.f32 %v1332, %v1473
        %v1512 = vadd.f32 %v1333, %v1475
        %v1513 = vadd.f32 %v1334, %v1479
        %v1514 = vadd.f32 %v1335, %v1481
        %v1515 = vadd.f32 %v1336, %v1483
        %v1516 = vadd.f32 %v1337, %v1485
        %v1517 = vadd.f32 %v1338, %v1489
        %v1518 = vadd.f32 %v1339, %v1491
        %v1519 = vadd.f32 %v1340, %v1493
        %v1520 = vadd.f32 %v1341, %v1495
        %v1521 = vadd.f32 %v1342, %v1499
        %v1522 = vadd.f32 %v1343, %v1501
        %1523 = vrot.lane.b32.xlu0 %v336, 127
        %v1524 = vpop.permute.xlu0 %1523
        %1525 = vrot.lane.b32.xlu0 %v337, 127
        %v1526 = vpop.permute.xlu0 %1525
        %1527 = vrot.lane.b32.xlu0 %v338, 127
        %v1528 = vpop.permute.xlu0 %1527
        %1529 = vrot.lane.b32.xlu0 %v339, 127
        %v1530 = vpop.permute.xlu0 %1529
        %1531 = vrot.lane.b32.xlu0 %v340, 127
        %v1532 = vpop.permute.xlu0 %1531
        %1533 = vrot.lane.b32.xlu0 %v341, 127
        %v1534 = vpop.permute.xlu0 %1533
        %1535 = vrot.lane.b32.xlu0 %v342, 127
        %v1536 = vpop.permute.xlu0 %1535
        %1537 = vrot.lane.b32.xlu0 %v343, 127
        %v1538 = vpop.permute.xlu0 %1537
        %1539 = vrot.lane.b32.xlu0 %v344, 127
        %v1540 = vpop.permute.xlu0 %1539
        %1541 = vrot.lane.b32.xlu0 %v345, 127
        %v1542 = vpop.permute.xlu0 %1541
        %1543 = vrot.lane.b32.xlu0 %v346, 127
        %v1544 = vpop.permute.xlu0 %1543
        %1545 = vrot.lane.b32.xlu0 %v347, 127
        %v1546 = vpop.permute.xlu0 %1545
        %1547 = vrot.lane.b32.xlu0 %v348, 127
        %v1548 = vpop.permute.xlu0 %1547
        %1549 = vrot.lane.b32.xlu0 %v349, 127
        %v1550 = vpop.permute.xlu0 %1549
        %1551 = vrot.lane.b32.xlu0 %v350, 127
        %v1552 = vpop.permute.xlu0 %1551
        %1553 = vrot.lane.b32.xlu0 %v351, 127
        %v1554 = vpop.permute.xlu0 %1553
        %vm1555 = vcmask 1039360
        %v1556 = vsel %vm1555, %v1524, %v1526
        %v1557 = vsel %vm1555, %v1528, %v1530
        %v1558 = vsel %vm1555, %v1532, %v1534
        %v1559 = vsel %vm1555, %v1536, %v1538
        %v1560 = vsel %vm1555, %v1540, %v1542
        %v1561 = vsel %vm1555, %v1544, %v1546
        %v1562 = vsel %vm1555, %v1548, %v1550
        %v1563 = vsel %vm1555, %v1552, %v1554
        %v1588 = vsel %vm1555, %v1526, %v1524
        %v1589 = vsel %vm1555, %v1530, %v1528
        %v1590 = vsel %vm1555, %v1534, %v1532
        %v1591 = vsel %vm1555, %v1538, %v1536
        %v1592 = vsel %vm1555, %v1542, %v1540
        %v1593 = vsel %vm1555, %v1546, %v1544
        %v1594 = vsel %vm1555, %v1550, %v1548
        %v1595 = vsel %vm1555, %v1554, %v1552
        %v1596 = vlaneseq
        %v1597 = vshrl.u32 %v1596, 7
        %v1598 = vsub.s32 5, %v1597
        %v1599 = vrot.slane %v352, %v1598
        %v1600 = vlaneseq
        %v1601 = vshrl.u32 %v1600, 7
        %v1602 = vsub.s32 5, %v1601
        %v1603 = vrot.slane %v353, %v1602
        %v1604 = vmul.f32 %v1556, %v1599
        %v1605 = vmul.f32 %v1588, %v1603
        %v1606 = vmul.f32 %v1557, %v1599
        %v1607 = vmul.f32 %v1589, %v1603
        %v1608 = vmul.f32 %v1558, %v1599
        %v1609 = vmul.f32 %v1590, %v1603
        %v1610 = vmul.f32 %v1559, %v1599
        %v1611 = vmul.f32 %v1591, %v1603
        %v1612 = vmul.f32 %v1560, %v1599
        %v1613 = vmul.f32 %v1592, %v1603
        %v1614 = vmul.f32 %v1561, %v1599
        %v1615 = vmul.f32 %v1593, %v1603
        %v1616 = vmul.f32 %v1562, %v1599
        %v1617 = vmul.f32 %v1594, %v1603
        %v1618 = vmul.f32 %v1563, %v1599
        %v1619 = vmul.f32 %v1595, %v1603
        %v1620 = vpack.c.bf16 %v1606, %v1604
        %v1621 = vpack.c.bf16 %v1607, %v1605
        %v1622 = vpack.c.bf16 %v1610, %v1608
        %v1623 = vpack.c.bf16 %v1611, %v1609
        %v1624 = vpack.c.bf16 %v1614, %v1612
        %v1625 = vpack.c.bf16 %v1615, %v1613
        %v1626 = vpack.c.bf16 %v1618, %v1616
        %v1627 = vpack.c.bf16 %v1619, %v1617
        %s1628 = scalar_lea.vmem %s3, 180
        %v1629 = vld [vmem:[%s1628] sm:$0xf]
        %v1630 = vld [vmem:[%s1628 + $0x4] sm:$0xf]
        %v1631 = vld [vmem:[%s1628 + $0x8] sm:$0xf]
        %v1632 = vld [vmem:[%s1628 + $0xc] sm:$0xf]
        %v1633 = vld [vmem:[%s1628 + $0x10] sm:$0xf]
        %v1634 = vld [vmem:[%s1628 + $0x14] sm:$0xf]
        %v1635 = vld [vmem:[%s1628 + $0x18] sm:$0xf]
        %v1636 = vld [vmem:[%s1628 + $0x1c] sm:$0xf]
        %v1637 = vld [vmem:[%s1628 + $0x20] sm:$0x3]
        %v1647 = vunpack.c.l.b16 %v1629
        %v1648 = vunpack.c.l.b16 %v1630
        %v1649 = vunpack.c.l.b16 %v1631
        %v1650 = vunpack.c.l.b16 %v1632
        %v1651 = vunpack.c.l.b16 %v1633
        %v1652 = vunpack.c.l.b16 %v1634
        %v1653 = vunpack.c.l.b16 %v1635
        %v1654 = vunpack.c.l.b16 %v1636
        %v1655 = vunpack.c.l.b16 %v1637
        %v1656 = vpack.c.b16 %v1648, %v1647
        %v1657 = vpack.c.b16 %v1650, %v1649
        %v1658 = vpack.c.b16 %v1652, %v1651
        %v1659 = vpack.c.b16 %v1654, %v1653
        %v1660 = vpack.c.b16 %v1655, %v1655
        %v1662 = vsel %vm624, %v1656, 0
        %v1665 = vsel %vm624, %v1657, 0
        %v1668 = vsel %vm624, %v1658, 0
        %v1671 = vsel %vm624, %v1659, 0
        %v1674 = vsel %vm624, %v1660, 0
        %1676 = vmatprep.subr.bf16.mxu0 %v1621
        %1677 = vmatpush1.bf16.msra.mxu0 %v1620
        %1678 = vmatprep.subr.bf16.mxu0 %v1623
        %1679 = vmatpush1.bf16.msra.mxu0 %v1622
        %1680 = vmatprep.subr.bf16.mxu0 %v1625
        %1681 = vmatpush1.bf16.msra.mxu0 %v1624
        %1682 = vmatprep.subr.bf16.mxu0 %v1627
        %1683 = vmatpush1.bf16.msra.mxu0 %v1626
        %1684 = vmatprep.subr.bf16.mxu0 0
        %1685 = vmatpush1.bf16.msra.mxu0 0
        %1686 = vmatprep.subr.bf16.mxu0 0
        %1687 = vmatpush1.bf16.msra.mxu0 0
        %1688 = vmatprep.subr.bf16.mxu0 0
        %1689 = vmatpush1.bf16.msra.mxu0 0
        %1690 = vmatprep.subr.bf16.mxu0 0
        %1691 = vmatpush1.bf16.msra.mxu0 0
        %1692 = vmatprep.subr.bf16.mxu0 0
        %1693 = vmatpush1.bf16.msra.mxu0 0
        %1694 = vmatprep.subr.bf16.mxu0 0
        %1695 = vmatpush1.bf16.msra.mxu0 0
        %1696 = vmatprep.subr.bf16.mxu0 0
        %1697 = vmatpush1.bf16.msra.mxu0 0
        %1698 = vmatprep.subr.bf16.mxu0 0
        %1699 = vmatpush1.bf16.msra.mxu0 0
        %1700 = vmatprep.subr.bf16.mxu0 0
        %1701 = vmatpush1.bf16.msra.mxu0 0
        %1702 = vmatprep.subr.bf16.mxu0 0
        %1703 = vmatpush1.bf16.msra.mxu0 0
        %1704 = vmatprep.subr.bf16.mxu0 0
        %1705 = vmatpush1.bf16.msra.mxu0 0
        %1706 = vmatprep.subr.bf16.mxu0 0
        %1707 = vmatpush1.bf16.msra.mxu0 0
        %1708 = vmatprep.mubr.bf16.mxu0 0
        %1709 = vmatmul.mubr.bf16.gmra.mrb[0].mxu0 %v1662
        %v1710 = vpop.f32.mrb[0].mxu0
        %v1711 = vadd.f32 0.0, %v1710
        %v1712 = vpop.f32.mrb[0].mxu0
        %v1713 = vadd.f32 0.0, %v1712
        %v1714 = vpop.f32.mrb[0].mxu0
        %v1715 = vadd.f32 0.0, %v1714
        %v1716 = vpop.f32.mrb[0].mxu0
        %v1717 = vadd.f32 0.0, %v1716
        %1718 = vmatprep.mubr.bf16.mxu0 0
        %1719 = vmatmul.mubr.bf16.gmra.mrb[0].mxu0 %v1665
        %v1720 = vpop.f32.mrb[0].mxu0
        %v1721 = vadd.f32 0.0, %v1720
        %v1722 = vpop.f32.mrb[0].mxu0
        %v1723 = vadd.f32 0.0, %v1722
        %v1724 = vpop.f32.mrb[0].mxu0
        %v1725 = vadd.f32 0.0, %v1724
        %v1726 = vpop.f32.mrb[0].mxu0
        %v1727 = vadd.f32 0.0, %v1726
        %1728 = vmatprep.mubr.bf16.mxu0 0
        %1729 = vmatmul.mubr.bf16.gmra.mrb[0].mxu0 %v1668
        %v1730 = vpop.f32.mrb[0].mxu0
        %v1731 = vadd.f32 0.0, %v1730
        %v1732 = vpop.f32.mrb[0].mxu0
        %v1733 = vadd.f32 0.0, %v1732
        %v1734 = vpop.f32.mrb[0].mxu0
        %v1735 = vadd.f32 0.0, %v1734
        %v1736 = vpop.f32.mrb[0].mxu0
        %v1737 = vadd.f32 0.0, %v1736
        %1738 = vmatprep.mubr.bf16.mxu0 0
        %1739 = vmatmul.mubr.bf16.gmra.mrb[0].mxu0 %v1671
        %v1740 = vpop.f32.mrb[0].mxu0
        %v1741 = vadd.f32 0.0, %v1740
        %v1742 = vpop.f32.mrb[0].mxu0
        %v1743 = vadd.f32 0.0, %v1742
        %v1744 = vpop.f32.mrb[0].mxu0
        %v1745 = vadd.f32 0.0, %v1744
        %v1746 = vpop.f32.mrb[0].mxu0
        %v1747 = vadd.f32 0.0, %v1746
        %1748 = vmatprep.mubr.bf16.mxu0 0
        %1749 = vmatmul.mubr.bf16.gmra.mrb[0].mxu0 %v1674
        %v1750 = vpop.f32.mrb[0].mxu0
        %v1751 = vadd.f32 0.0, %v1750
        %v1752 = vpop.f32.mrb[0].mxu0
        %v1753 = vadd.f32 0.0, %v1752
        %v1754 = vpop.f32.mrb[0].mxu0
        %v1755 = vpop.f32.mrb[0].mxu0
        %1756 = vdwg.mxu0
        %v1757 = vadd.f32 %v1505, %v1711
        %v1758 = vadd.f32 %v1506, %v1713
        %v1759 = vadd.f32 %v1507, %v1715
        %v1760 = vadd.f32 %v1508, %v1717
        %v1761 = vadd.f32 %v1509, %v1721
        %v1762 = vadd.f32 %v1510, %v1723
        %v1763 = vadd.f32 %v1511, %v1725
        %v1764 = vadd.f32 %v1512, %v1727
        %v1765 = vadd.f32 %v1513, %v1731
        %v1766 = vadd.f32 %v1514, %v1733
        %v1767 = vadd.f32 %v1515, %v1735
        %v1768 = vadd.f32 %v1516, %v1737
        %v1769 = vadd.f32 %v1517, %v1741
        %v1770 = vadd.f32 %v1518, %v1743
        %v1771 = vadd.f32 %v1519, %v1745
        %v1772 = vadd.f32 %v1520, %v1747
        %v1773 = vadd.f32 %v1521, %v1751
        %v1774 = vadd.f32 %v1522, %v1753
        %1775 = vrot.lane.b32.xlu0 %v336, 113
        %v1776 = vpop.permute.xlu0 %1775
        %1777 = vrot.lane.b32.xlu0 %v337, 113
        %v1778 = vpop.permute.xlu0 %1777
        %1779 = vrot.lane.b32.xlu0 %v338, 113
        %v1780 = vpop.permute.xlu0 %1779
        %1781 = vrot.lane.b32.xlu0 %v339, 113
        %v1782 = vpop.permute.xlu0 %1781
        %1783 = vrot.lane.b32.xlu0 %v340, 113
        %v1784 = vpop.permute.xlu0 %1783
        %1785 = vrot.lane.b32.xlu0 %v341, 113
        %v1786 = vpop.permute.xlu0 %1785
        %1787 = vrot.lane.b32.xlu0 %v342, 113
        %v1788 = vpop.permute.xlu0 %1787
        %1789 = vrot.lane.b32.xlu0 %v343, 113
        %v1790 = vpop.permute.xlu0 %1789
        %1791 = vrot.lane.b32.xlu0 %v344, 113
        %v1792 = vpop.permute.xlu0 %1791
        %1793 = vrot.lane.b32.xlu0 %v345, 113
        %v1794 = vpop.permute.xlu0 %1793
        %1795 = vrot.lane.b32.xlu0 %v346, 113
        %v1796 = vpop.permute.xlu0 %1795
        %1797 = vrot.lane.b32.xlu0 %v347, 113
        %v1798 = vpop.permute.xlu0 %1797
        %1799 = vrot.lane.b32.xlu0 %v348, 113
        %v1800 = vpop.permute.xlu0 %1799
        %1801 = vrot.lane.b32.xlu0 %v349, 113
        %v1802 = vpop.permute.xlu0 %1801
        %1803 = vrot.lane.b32.xlu0 %v350, 113
        %v1804 = vpop.permute.xlu0 %1803
        %1805 = vrot.lane.b32.xlu0 %v351, 113
        %v1806 = vpop.permute.xlu0 %1805
        %vm1807 = vcmask 924672
        %v1808 = vsel %vm1807, %v1776, %v1778
        %v1809 = vsel %vm1807, %v1780, %v1782
        %v1810 = vsel %vm1807, %v1784, %v1786
        %v1811 = vsel %vm1807, %v1788, %v1790
        %v1812 = vsel %vm1807, %v1792, %v1794
        %v1813 = vsel %vm1807, %v1796, %v1798
        %v1814 = vsel %vm1807, %v1800, %v1802
        %v1815 = vsel %vm1807, %v1804, %v1806
        %v1840 = vsel %vm1807, %v1778, %v1776
        %v1841 = vsel %vm1807, %v1782, %v1780
        %v1842 = vsel %vm1807, %v1786, %v1784
        %v1843 = vsel %vm1807, %v1790, %v1788
        %v1844 = vsel %vm1807, %v1794, %v1792
        %v1845 = vsel %vm1807, %v1798, %v1796
        %v1846 = vsel %vm1807, %v1802, %v1800
        %v1847 = vsel %vm1807, %v1806, %v1804
        %v1848 = vlaneseq
        %v1849 = vshrl.u32 %v1848, 7
        %v1850 = vsub.s32 6, %v1849
        %v1851 = vrot.slane %v352, %v1850
        %v1852 = vlaneseq
        %v1853 = vshrl.u32 %v1852, 7
        %v1854 = vsub.s32 6, %v1853
        %v1855 = vrot.slane %v353, %v1854
        %v1856 = vmul.f32 %v1808, %v1851
        %v1857 = vmul.f32 %v1840, %v1855
        %v1858 = vmul.f32 %v1809, %v1851
        %v1859 = vmul.f32 %v1841, %v1855
        %v1860 = vmul.f32 %v1810, %v1851
        %v1861 = vmul.f32 %v1842, %v1855
        %v1862 = vmul.f32 %v1811, %v1851
        %v1863 = vmul.f32 %v1843, %v1855
        %v1864 = vmul.f32 %v1812, %v1851
        %v1865 = vmul.f32 %v1844, %v1855
        %v1866 = vmul.f32 %v1813, %v1851
        %v1867 = vmul.f32 %v1845, %v1855
        %v1868 = vmul.f32 %v1814, %v1851
        %v1869 = vmul.f32 %v1846, %v1855
        %v1870 = vmul.f32 %v1815, %v1851
        %v1871 = vmul.f32 %v1847, %v1855
        %v1872 = vpack.c.bf16 %v1858, %v1856
        %v1873 = vpack.c.bf16 %v1859, %v1857
        %v1874 = vpack.c.bf16 %v1862, %v1860
        %v1875 = vpack.c.bf16 %v1863, %v1861
        %v1876 = vpack.c.bf16 %v1866, %v1864
        %v1877 = vpack.c.bf16 %v1867, %v1865
        %v1878 = vpack.c.bf16 %v1870, %v1868
        %v1879 = vpack.c.bf16 %v1871, %v1869
        %s1880 = scalar_lea.vmem %s3, 216
        %v1881 = vld [vmem:[%s1880] sm:$0xf]
        %v1882 = vld [vmem:[%s1880 + $0x4] sm:$0xf]
        %v1883 = vld [vmem:[%s1880 + $0x8] sm:$0xf]
        %v1884 = vld [vmem:[%s1880 + $0xc] sm:$0xf]
        %v1885 = vld [vmem:[%s1880 + $0x10] sm:$0xf]
        %v1886 = vld [vmem:[%s1880 + $0x14] sm:$0xf]
        %v1887 = vld [vmem:[%s1880 + $0x18] sm:$0xf]
        %v1888 = vld [vmem:[%s1880 + $0x1c] sm:$0xf]
        %v1889 = vld [vmem:[%s1880 + $0x20] sm:$0x3]
        %v1899 = vunpack.c.l.b16 %v1881
        %v1900 = vunpack.c.l.b16 %v1882
        %v1901 = vunpack.c.l.b16 %v1883
        %v1902 = vunpack.c.l.b16 %v1884
        %v1903 = vunpack.c.l.b16 %v1885
        %v1904 = vunpack.c.l.b16 %v1886
        %v1905 = vunpack.c.l.b16 %v1887
        %v1906 = vunpack.c.l.b16 %v1888
        %v1907 = vunpack.c.l.b16 %v1889
        %v1908 = vpack.c.b16 %v1900, %v1899
        %v1909 = vpack.c.b16 %v1902, %v1901
        %v1910 = vpack.c.b16 %v1904, %v1903
        %v1911 = vpack.c.b16 %v1906, %v1905
        %v1912 = vpack.c.b16 %v1907, %v1907
        %v1914 = vsel %vm624, %v1908, 0
        %v1917 = vsel %vm624, %v1909, 0
        %v1920 = vsel %vm624, %v1910, 0
        %v1923 = vsel %vm624, %v1911, 0
        %v1926 = vsel %vm624, %v1912, 0
        %1928 = vmatprep.subr.bf16.mxu0 %v1873
        %1929 = vmatpush1.bf16.msra.mxu0 %v1872
        %1930 = vmatprep.subr.bf16.mxu0 %v1875
        %1931 = vmatpush1.bf16.msra.mxu0 %v1874
        %1932 = vmatprep.subr.bf16.mxu0 %v1877
        %1933 = vmatpush1.bf16.msra.mxu0 %v1876
        %1934 = vmatprep.subr.bf16.mxu0 %v1879
        %1935 = vmatpush1.bf16.msra.mxu0 %v1878
        %1936 = vmatprep.subr.bf16.mxu0 0
        %1937 = vmatpush1.bf16.msra.mxu0 0
        %1938 = vmatprep.subr.bf16.mxu0 0
        %1939 = vmatpush1.bf16.msra.mxu0 0
        %1940 = vmatprep.subr.bf16.mxu0 0
        %1941 = vmatpush1.bf16.msra.mxu0 0
        %1942 = vmatprep.subr.bf16.mxu0 0
        %1943 = vmatpush1.bf16.msra.mxu0 0
        %1944 = vmatprep.subr.bf16.mxu0 0
        %1945 = vmatpush1.bf16.msra.mxu0 0
        %1946 = vmatprep.subr.bf16.mxu0 0
        %1947 = vmatpush1.bf16.msra.mxu0 0
        %1948 = vmatprep.subr.bf16.mxu0 0
        %1949 = vmatpush1.bf16.msra.mxu0 0
        %1950 = vmatprep.subr.bf16.mxu0 0
        %1951 = vmatpush1.bf16.msra.mxu0 0
        %1952 = vmatprep.subr.bf16.mxu0 0
        %1953 = vmatpush1.bf16.msra.mxu0 0
        %1954 = vmatprep.subr.bf16.mxu0 0
        %1955 = vmatpush1.bf16.msra.mxu0 0
        %1956 = vmatprep.subr.bf16.mxu0 0
        %1957 = vmatpush1.bf16.msra.mxu0 0
        %1958 = vmatprep.subr.bf16.mxu0 0
        %1959 = vmatpush1.bf16.msra.mxu0 0
        %1960 = vmatprep.mubr.bf16.mxu0 0
        %1961 = vmatmul.mubr.bf16.gmra.mrb[0].mxu0 %v1914
        %v1962 = vpop.f32.mrb[0].mxu0
        %v1963 = vadd.f32 0.0, %v1962
        %v1964 = vpop.f32.mrb[0].mxu0
        %v1965 = vadd.f32 0.0, %v1964
        %v1966 = vpop.f32.mrb[0].mxu0
        %v1967 = vadd.f32 0.0, %v1966
        %v1968 = vpop.f32.mrb[0].mxu0
        %v1969 = vadd.f32 0.0, %v1968
        %1970 = vmatprep.mubr.bf16.mxu0 0
        %1971 = vmatmul.mubr.bf16.gmra.mrb[0].mxu0 %v1917
        %v1972 = vpop.f32.mrb[0].mxu0
        %v1973 = vadd.f32 0.0, %v1972
        %v1974 = vpop.f32.mrb[0].mxu0
        %v1975 = vadd.f32 0.0, %v1974
        %v1976 = vpop.f32.mrb[0].mxu0
        %v1977 = vadd.f32 0.0, %v1976
        %v1978 = vpop.f32.mrb[0].mxu0
        %v1979 = vadd.f32 0.0, %v1978
        %1980 = vmatprep.mubr.bf16.mxu0 0
        %1981 = vmatmul.mubr.bf16.gmra.mrb[0].mxu0 %v1920
        %v1982 = vpop.f32.mrb[0].mxu0
        %v1983 = vadd.f32 0.0, %v1982
        %v1984 = vpop.f32.mrb[0].mxu0
        %v1985 = vadd.f32 0.0, %v1984
        %v1986 = vpop.f32.mrb[0].mxu0
        %v1987 = vadd.f32 0.0, %v1986
        %v1988 = vpop.f32.mrb[0].mxu0
        %v1989 = vadd.f32 0.0, %v1988
        %1990 = vmatprep.mubr.bf16.mxu0 0
        %1991 = vmatmul.mubr.bf16.gmra.mrb[0].mxu0 %v1923
        %v1992 = vpop.f32.mrb[0].mxu0
        %v1993 = vadd.f32 0.0, %v1992
        %v1994 = vpop.f32.mrb[0].mxu0
        %v1995 = vadd.f32 0.0, %v1994
        %v1996 = vpop.f32.mrb[0].mxu0
        %v1997 = vadd.f32 0.0, %v1996
        %v1998 = vpop.f32.mrb[0].mxu0
        %v1999 = vadd.f32 0.0, %v1998
        %2000 = vmatprep.mubr.bf16.mxu0 0
        %2001 = vmatmul.mubr.bf16.gmra.mrb[0].mxu0 %v1926
        %v2002 = vpop.f32.mrb[0].mxu0
        %v2003 = vadd.f32 0.0, %v2002
        %v2004 = vpop.f32.mrb[0].mxu0
        %v2005 = vadd.f32 0.0, %v2004
        %v2006 = vpop.f32.mrb[0].mxu0
        %v2007 = vpop.f32.mrb[0].mxu0
        %2008 = vdwg.mxu0
        %v2009 = vadd.f32 %v1757, %v1963
        %v2010 = vadd.f32 %v1758, %v1965
        %v2011 = vadd.f32 %v1759, %v1967
        %v2012 = vadd.f32 %v1760, %v1969
        %v2013 = vadd.f32 %v1761, %v1973
        %v2014 = vadd.f32 %v1762, %v1975
        %v2015 = vadd.f32 %v1763, %v1977
        %v2016 = vadd.f32 %v1764, %v1979
        %v2017 = vadd.f32 %v1765, %v1983
        %v2018 = vadd.f32 %v1766, %v1985
        %v2019 = vadd.f32 %v1767, %v1987
        %v2020 = vadd.f32 %v1768, %v1989
        %v2021 = vadd.f32 %v1769, %v1993
        %v2022 = vadd.f32 %v1770, %v1995
        %v2023 = vadd.f32 %v1771, %v1997
        %v2024 = vadd.f32 %v1772, %v1999
        %v2025 = vadd.f32 %v1773, %v2003
        %v2026 = vadd.f32 %v1774, %v2005
        %2027 = vrot.lane.b32.xlu0 %v336, 112
        %v2028 = vpop.permute.xlu0 %2027
        %2029 = vrot.lane.b32.xlu0 %v337, 112
        %v2030 = vpop.permute.xlu0 %2029
        %2031 = vrot.lane.b32.xlu0 %v338, 112
        %v2032 = vpop.permute.xlu0 %2031
        %2033 = vrot.lane.b32.xlu0 %v339, 112
        %v2034 = vpop.permute.xlu0 %2033
        %2035 = vrot.lane.b32.xlu0 %v340, 112
        %v2036 = vpop.permute.xlu0 %2035
        %2037 = vrot.lane.b32.xlu0 %v341, 112
        %v2038 = vpop.permute.xlu0 %2037
        %2039 = vrot.lane.b32.xlu0 %v342, 112
        %v2040 = vpop.permute.xlu0 %2039
        %2041 = vrot.lane.b32.xlu0 %v343, 112
        %v2042 = vpop.permute.xlu0 %2041
        %2043 = vrot.lane.b32.xlu0 %v344, 112
        %v2044 = vpop.permute.xlu0 %2043
        %2045 = vrot.lane.b32.xlu0 %v345, 112
        %v2046 = vpop.permute.xlu0 %2045
        %2047 = vrot.lane.b32.xlu0 %v346, 112
        %v2048 = vpop.permute.xlu0 %2047
        %2049 = vrot.lane.b32.xlu0 %v347, 112
        %v2050 = vpop.permute.xlu0 %2049
        %2051 = vrot.lane.b32.xlu0 %v348, 112
        %v2052 = vpop.permute.xlu0 %2051
        %2053 = vrot.lane.b32.xlu0 %v349, 112
        %v2054 = vpop.permute.xlu0 %2053
        %2055 = vrot.lane.b32.xlu0 %v350, 112
        %v2056 = vpop.permute.xlu0 %2055
        %2057 = vrot.lane.b32.xlu0 %v351, 112
        %v2058 = vpop.permute.xlu0 %2057
        %vm2059 = vcmask 916480
        %v2060 = vsel %vm2059, %v2028, %v2030
        %v2061 = vsel %vm2059, %v2032, %v2034
        %v2062 = vsel %vm2059, %v2036, %v2038
        %v2063 = vsel %vm2059, %v2040, %v2042
        %v2064 = vsel %vm2059, %v2044, %v2046
        %v2065 = vsel %vm2059, %v2048, %v2050
        %v2066 = vsel %vm2059, %v2052, %v2054
        %v2067 = vsel %vm2059, %v2056, %v2058
        %v2092 = vsel %vm2059, %v2030, %v2028
        %v2093 = vsel %vm2059, %v2034, %v2032
        %v2094 = vsel %vm2059, %v2038, %v2036
        %v2095 = vsel %vm2059, %v2042, %v2040
        %v2096 = vsel %vm2059, %v2046, %v2044
        %v2097 = vsel %vm2059, %v2050, %v2048
        %v2098 = vsel %vm2059, %v2054, %v2052
        %v2099 = vsel %vm2059, %v2058, %v2056
        %v2100 = vlaneseq
        %v2101 = vshrl.u32 %v2100, 7
        %v2102 = vsub.s32 7, %v2101
        %v2103 = vrot.slane %v352, %v2102
        %v2104 = vlaneseq
        %v2105 = vshrl.u32 %v2104, 7
        %v2106 = vsub.s32 7, %v2105
        %v2107 = vrot.slane %v353, %v2106
        %v2108 = vmul.f32 %v2060, %v2103
        %v2109 = vmul.f32 %v2092, %v2107
        %v2110 = vmul.f32 %v2061, %v2103
        %v2111 = vmul.f32 %v2093, %v2107
        %v2112 = vmul.f32 %v2062, %v2103
        %v2113 = vmul.f32 %v2094, %v2107
        %v2114 = vmul.f32 %v2063, %v2103
        %v2115 = vmul.f32 %v2095, %v2107
        %v2116 = vmul.f32 %v2064, %v2103
        %v2117 = vmul.f32 %v2096, %v2107
        %v2118 = vmul.f32 %v2065, %v2103
        %v2119 = vmul.f32 %v2097, %v2107
        %v2120 = vmul.f32 %v2066, %v2103
        %v2121 = vmul.f32 %v2098, %v2107
        %v2122 = vmul.f32 %v2067, %v2103
        %v2123 = vmul.f32 %v2099, %v2107
        %v2124 = vpack.c.bf16 %v2110, %v2108
        %v2125 = vpack.c.bf16 %v2111, %v2109
        %v2126 = vpack.c.bf16 %v2114, %v2112
        %v2127 = vpack.c.bf16 %v2115, %v2113
        %v2128 = vpack.c.bf16 %v2118, %v2116
        %v2129 = vpack.c.bf16 %v2119, %v2117
        %v2130 = vpack.c.bf16 %v2122, %v2120
        %v2131 = vpack.c.bf16 %v2123, %v2121
        %s2132 = scalar_lea.vmem %s3, 252
        %v2133 = vld [vmem:[%s2132] sm:$0xf]
        %v2134 = vld [vmem:[%s2132 + $0x4] sm:$0xf]
        %v2135 = vld [vmem:[%s2132 + $0x8] sm:$0xf]
        %v2136 = vld [vmem:[%s2132 + $0xc] sm:$0xf]
        %v2137 = vld [vmem:[%s2132 + $0x10] sm:$0xf]
        %v2138 = vld [vmem:[%s2132 + $0x14] sm:$0xf]
        %v2139 = vld [vmem:[%s2132 + $0x18] sm:$0xf]
        %v2140 = vld [vmem:[%s2132 + $0x1c] sm:$0xf]
        %v2141 = vld [vmem:[%s2132 + $0x20] sm:$0x3]
        %v2151 = vunpack.c.l.b16 %v2133
        %v2152 = vunpack.c.l.b16 %v2134
        %v2153 = vunpack.c.l.b16 %v2135
        %v2154 = vunpack.c.l.b16 %v2136
        %v2155 = vunpack.c.l.b16 %v2137
        %v2156 = vunpack.c.l.b16 %v2138
        %v2157 = vunpack.c.l.b16 %v2139
        %v2158 = vunpack.c.l.b16 %v2140
        %v2159 = vunpack.c.l.b16 %v2141
        %v2160 = vpack.c.b16 %v2152, %v2151
        %v2161 = vpack.c.b16 %v2154, %v2153
        %v2162 = vpack.c.b16 %v2156, %v2155
        %v2163 = vpack.c.b16 %v2158, %v2157
        %v2164 = vpack.c.b16 %v2159, %v2159
        %v2166 = vsel %vm624, %v2160, 0
        %v2169 = vsel %vm624, %v2161, 0
        %v2172 = vsel %vm624, %v2162, 0
        %v2175 = vsel %vm624, %v2163, 0
        %v2178 = vsel %vm624, %v2164, 0
        %2180 = vmatprep.subr.bf16.mxu0 %v2125
        %2181 = vmatpush1.bf16.msra.mxu0 %v2124
        %2182 = vmatprep.subr.bf16.mxu0 %v2127
        %2183 = vmatpush1.bf16.msra.mxu0 %v2126
        %2184 = vmatprep.subr.bf16.mxu0 %v2129
        %2185 = vmatpush1.bf16.msra.mxu0 %v2128
        %2186 = vmatprep.subr.bf16.mxu0 %v2131
        %2187 = vmatpush1.bf16.msra.mxu0 %v2130
        %2188 = vmatprep.subr.bf16.mxu0 0
        %2189 = vmatpush1.bf16.msra.mxu0 0
        %2190 = vmatprep.subr.bf16.mxu0 0
        %2191 = vmatpush1.bf16.msra.mxu0 0
        %2192 = vmatprep.subr.bf16.mxu0 0
        %2193 = vmatpush1.bf16.msra.mxu0 0
        %2194 = vmatprep.subr.bf16.mxu0 0
        %2195 = vmatpush1.bf16.msra.mxu0 0
        %2196 = vmatprep.subr.bf16.mxu0 0
        %2197 = vmatpush1.bf16.msra.mxu0 0
        %2198 = vmatprep.subr.bf16.mxu0 0
        %2199 = vmatpush1.bf16.msra.mxu0 0
        %2200 = vmatprep.subr.bf16.mxu0 0
        %2201 = vmatpush1.bf16.msra.mxu0 0
        %2202 = vmatprep.subr.bf16.mxu0 0
        %2203 = vmatpush1.bf16.msra.mxu0 0
        %2204 = vmatprep.subr.bf16.mxu0 0
        %2205 = vmatpush1.bf16.msra.mxu0 0
        %2206 = vmatprep.subr.bf16.mxu0 0
        %2207 = vmatpush1.bf16.msra.mxu0 0
        %2208 = vmatprep.subr.bf16.mxu0 0
        %2209 = vmatpush1.bf16.msra.mxu0 0
        %2210 = vmatprep.subr.bf16.mxu0 0
        %2211 = vmatpush1.bf16.msra.mxu0 0
        %2212 = vmatprep.mubr.bf16.mxu0 0
        %2213 = vmatmul.mubr.bf16.gmra.mrb[0].mxu0 %v2166
        %v2214 = vpop.f32.mrb[0].mxu0
        %v2215 = vadd.f32 0.0, %v2214
        %v2216 = vpop.f32.mrb[0].mxu0
        %v2217 = vadd.f32 0.0, %v2216
        %v2218 = vpop.f32.mrb[0].mxu0
        %v2219 = vadd.f32 0.0, %v2218
        %v2220 = vpop.f32.mrb[0].mxu0
        %v2221 = vadd.f32 0.0, %v2220
        %2222 = vmatprep.mubr.bf16.mxu0 0
        %2223 = vmatmul.mubr.bf16.gmra.mrb[0].mxu0 %v2169
        %v2224 = vpop.f32.mrb[0].mxu0
        %v2225 = vadd.f32 0.0, %v2224
        %v2226 = vpop.f32.mrb[0].mxu0
        %v2227 = vadd.f32 0.0, %v2226
        %v2228 = vpop.f32.mrb[0].mxu0
        %v2229 = vadd.f32 0.0, %v2228
        %v2230 = vpop.f32.mrb[0].mxu0
        %v2231 = vadd.f32 0.0, %v2230
        %2232 = vmatprep.mubr.bf16.mxu0 0
        %2233 = vmatmul.mubr.bf16.gmra.mrb[0].mxu0 %v2172
        %v2234 = vpop.f32.mrb[0].mxu0
        %v2235 = vadd.f32 0.0, %v2234
        %v2236 = vpop.f32.mrb[0].mxu0
        %v2237 = vadd.f32 0.0, %v2236
        %v2238 = vpop.f32.mrb[0].mxu0
        %v2239 = vadd.f32 0.0, %v2238
        %v2240 = vpop.f32.mrb[0].mxu0
        %v2241 = vadd.f32 0.0, %v2240
        %2242 = vmatprep.mubr.bf16.mxu0 0
        %2243 = vmatmul.mubr.bf16.gmra.mrb[0].mxu0 %v2175
        %v2244 = vpop.f32.mrb[0].mxu0
        %v2245 = vadd.f32 0.0, %v2244
        %v2246 = vpop.f32.mrb[0].mxu0
        %v2247 = vadd.f32 0.0, %v2246
        %v2248 = vpop.f32.mrb[0].mxu0
        %v2249 = vadd.f32 0.0, %v2248
        %v2250 = vpop.f32.mrb[0].mxu0
        %v2251 = vadd.f32 0.0, %v2250
        %2252 = vmatprep.mubr.bf16.mxu0 0
        %2253 = vmatmul.mubr.bf16.gmra.mrb[0].mxu0 %v2178
        %v2254 = vpop.f32.mrb[0].mxu0
        %v2255 = vadd.f32 0.0, %v2254
        %v2256 = vpop.f32.mrb[0].mxu0
        %v2257 = vadd.f32 0.0, %v2256
        %v2258 = vpop.f32.mrb[0].mxu0
        %v2259 = vpop.f32.mrb[0].mxu0
        %2260 = vdwg.mxu0
        %v2261 = vadd.f32 %v2009, %v2215
        %v2262 = vadd.f32 %v2010, %v2217
        %v2263 = vadd.f32 %v2011, %v2219
        %v2264 = vadd.f32 %v2012, %v2221
        %v2265 = vadd.f32 %v2013, %v2225
        %v2266 = vadd.f32 %v2014, %v2227
        %v2267 = vadd.f32 %v2015, %v2229
        %v2268 = vadd.f32 %v2016, %v2231
        %v2269 = vadd.f32 %v2017, %v2235
        %v2270 = vadd.f32 %v2018, %v2237
        %v2271 = vadd.f32 %v2019, %v2239
        %v2272 = vadd.f32 %v2020, %v2241
        %v2273 = vadd.f32 %v2021, %v2245
        %v2274 = vadd.f32 %v2022, %v2247
        %v2275 = vadd.f32 %v2023, %v2249
        %v2276 = vadd.f32 %v2024, %v2251
        %v2277 = vadd.f32 %v2025, %v2255
        %v2278 = vadd.f32 %v2026, %v2257
        %2279 = vrot.lane.b32.xlu0 %v336, 111
        %v2280 = vpop.permute.xlu0 %2279
        %2281 = vrot.lane.b32.xlu0 %v337, 111
        %v2282 = vpop.permute.xlu0 %2281
        %2283 = vrot.lane.b32.xlu0 %v338, 111
        %v2284 = vpop.permute.xlu0 %2283
        %2285 = vrot.lane.b32.xlu0 %v339, 111
        %v2286 = vpop.permute.xlu0 %2285
        %2287 = vrot.lane.b32.xlu0 %v340, 111
        %v2288 = vpop.permute.xlu0 %2287
        %2289 = vrot.lane.b32.xlu0 %v341, 111
        %v2290 = vpop.permute.xlu0 %2289
        %2291 = vrot.lane.b32.xlu0 %v342, 111
        %v2292 = vpop.permute.xlu0 %2291
        %2293 = vrot.lane.b32.xlu0 %v343, 111
        %v2294 = vpop.permute.xlu0 %2293
        %2295 = vrot.lane.b32.xlu0 %v344, 111
        %v2296 = vpop.permute.xlu0 %2295
        %2297 = vrot.lane.b32.xlu0 %v345, 111
        %v2298 = vpop.permute.xlu0 %2297
        %2299 = vrot.lane.b32.xlu0 %v346, 111
        %v2300 = vpop.permute.xlu0 %2299
        %2301 = vrot.lane.b32.xlu0 %v347, 111
        %v2302 = vpop.permute.xlu0 %2301
        %2303 = vrot.lane.b32.xlu0 %v348, 111
        %v2304 = vpop.permute.xlu0 %2303
        %2305 = vrot.lane.b32.xlu0 %v349, 111
        %v2306 = vpop.permute.xlu0 %2305
        %2307 = vrot.lane.b32.xlu0 %v350, 111
        %v2308 = vpop.permute.xlu0 %2307
        %2309 = vrot.lane.b32.xlu0 %v351, 111
        %v2310 = vpop.permute.xlu0 %2309
        %vm2311 = vcmask 908288
        %v2312 = vsel %vm2311, %v2280, %v2282
        %v2313 = vsel %vm2311, %v2284, %v2286
        %v2314 = vsel %vm2311, %v2288, %v2290
        %v2315 = vsel %vm2311, %v2292, %v2294
        %v2316 = vsel %vm2311, %v2296, %v2298
        %v2317 = vsel %vm2311, %v2300, %v2302
        %v2318 = vsel %vm2311, %v2304, %v2306
        %v2319 = vsel %vm2311, %v2308, %v2310
        %v2344 = vsel %vm2311, %v2282, %v2280
        %v2345 = vsel %vm2311, %v2286, %v2284
        %v2346 = vsel %vm2311, %v2290, %v2288
        %v2347 = vsel %vm2311, %v2294, %v2292
        %v2348 = vsel %vm2311, %v2298, %v2296
        %v2349 = vsel %vm2311, %v2302, %v2300
        %v2350 = vsel %vm2311, %v2306, %v2304
        %v2351 = vsel %vm2311, %v2310, %v2308
        %v2352 = vlaneseq
        %v2353 = vshrl.u32 %v2352, 7
        %v2354 = vsub.s32 0, %v2353
        %v2355 = vrot.slane %v354, %v2354
        %v2356 = vlaneseq
        %v2357 = vshrl.u32 %v2356, 7
        %v2358 = vsub.s32 0, %v2357
        %v2359 = vrot.slane %v355, %v2358
        %v2360 = vmul.f32 %v2312, %v2355
        %v2361 = vmul.f32 %v2344, %v2359
        %v2362 = vmul.f32 %v2313, %v2355
        %v2363 = vmul.f32 %v2345, %v2359
        %v2364 = vmul.f32 %v2314, %v2355
        %v2365 = vmul.f32 %v2346, %v2359
        %v2366 = vmul.f32 %v2315, %v2355
        %v2367 = vmul.f32 %v2347, %v2359
        %v2368 = vmul.f32 %v2316, %v2355
        %v2369 = vmul.f32 %v2348, %v2359
        %v2370 = vmul.f32 %v2317, %v2355
        %v2371 = vmul.f32 %v2349, %v2359
        %v2372 = vmul.f32 %v2318, %v2355
        %v2373 = vmul.f32 %v2350, %v2359
        %v2374 = vmul.f32 %v2319, %v2355
        %v2375 = vmul.f32 %v2351, %v2359
        %v2376 = vpack.c.bf16 %v2362, %v2360
        %v2377 = vpack.c.bf16 %v2363, %v2361
        %v2378 = vpack.c.bf16 %v2366, %v2364
        %v2379 = vpack.c.bf16 %v2367, %v2365
        %v2380 = vpack.c.bf16 %v2370, %v2368
        %v2381 = vpack.c.bf16 %v2371, %v2369
        %v2382 = vpack.c.bf16 %v2374, %v2372
        %v2383 = vpack.c.bf16 %v2375, %v2373
        %s2384 = scalar_lea.vmem %s3, 288
        %v2385 = vld [vmem:[%s2384] sm:$0xf]
        %v2386 = vld [vmem:[%s2384 + $0x4] sm:$0xf]
        %v2387 = vld [vmem:[%s2384 + $0x8] sm:$0xf]
        %v2388 = vld [vmem:[%s2384 + $0xc] sm:$0xf]
        %v2389 = vld [vmem:[%s2384 + $0x10] sm:$0xf]
        %v2390 = vld [vmem:[%s2384 + $0x14] sm:$0xf]
        %v2391 = vld [vmem:[%s2384 + $0x18] sm:$0xf]
        %v2392 = vld [vmem:[%s2384 + $0x1c] sm:$0xf]
        %v2393 = vld [vmem:[%s2384 + $0x20] sm:$0x3]
        %v2403 = vunpack.c.l.b16 %v2385
        %v2404 = vunpack.c.l.b16 %v2386
        %v2405 = vunpack.c.l.b16 %v2387
        %v2406 = vunpack.c.l.b16 %v2388
        %v2407 = vunpack.c.l.b16 %v2389
        %v2408 = vunpack.c.l.b16 %v2390
        %v2409 = vunpack.c.l.b16 %v2391
        %v2410 = vunpack.c.l.b16 %v2392
        %v2411 = vunpack.c.l.b16 %v2393
        %v2412 = vpack.c.b16 %v2404, %v2403
        %v2413 = vpack.c.b16 %v2406, %v2405
        %v2414 = vpack.c.b16 %v2408, %v2407
        %v2415 = vpack.c.b16 %v2410, %v2409
        %v2416 = vpack.c.b16 %v2411, %v2411
        %v2418 = vsel %vm624, %v2412, 0
        %v2421 = vsel %vm624, %v2413, 0
        %v2424 = vsel %vm624, %v2414, 0
        %v2427 = vsel %vm624, %v2415, 0
        %v2430 = vsel %vm624, %v2416, 0
        %2432 = vmatprep.subr.bf16.mxu0 %v2377
        %2433 = vmatpush1.bf16.msra.mxu0 %v2376
        %2434 = vmatprep.subr.bf16.mxu0 %v2379
        %2435 = vmatpush1.bf16.msra.mxu0 %v2378
        %2436 = vmatprep.subr.bf16.mxu0 %v2381
        %2437 = vmatpush1.bf16.msra.mxu0 %v2380
        %2438 = vmatprep.subr.bf16.mxu0 %v2383
        %2439 = vmatpush1.bf16.msra.mxu0 %v2382
        %2440 = vmatprep.subr.bf16.mxu0 0
        %2441 = vmatpush1.bf16.msra.mxu0 0
        %2442 = vmatprep.subr.bf16.mxu0 0
        %2443 = vmatpush1.bf16.msra.mxu0 0
        %2444 = vmatprep.subr.bf16.mxu0 0
        %2445 = vmatpush1.bf16.msra.mxu0 0
        %2446 = vmatprep.subr.bf16.mxu0 0
        %2447 = vmatpush1.bf16.msra.mxu0 0
        %2448 = vmatprep.subr.bf16.mxu0 0
        %2449 = vmatpush1.bf16.msra.mxu0 0
        %2450 = vmatprep.subr.bf16.mxu0 0
        %2451 = vmatpush1.bf16.msra.mxu0 0
        %2452 = vmatprep.subr.bf16.mxu0 0
        %2453 = vmatpush1.bf16.msra.mxu0 0
        %2454 = vmatprep.subr.bf16.mxu0 0
        %2455 = vmatpush1.bf16.msra.mxu0 0
        %2456 = vmatprep.subr.bf16.mxu0 0
        %2457 = vmatpush1.bf16.msra.mxu0 0
        %2458 = vmatprep.subr.bf16.mxu0 0
        %2459 = vmatpush1.bf16.msra.mxu0 0
        %2460 = vmatprep.subr.bf16.mxu0 0
        %2461 = vmatpush1.bf16.msra.mxu0 0
        %2462 = vmatprep.subr.bf16.mxu0 0
        %2463 = vmatpush1.bf16.msra.mxu0 0
        %2464 = vmatprep.mubr.bf16.mxu0 0
        %2465 = vmatmul.mubr.bf16.gmra.mrb[0].mxu0 %v2418
        %v2466 = vpop.f32.mrb[0].mxu0
        %v2467 = vadd.f32 0.0, %v2466
        %v2468 = vpop.f32.mrb[0].mxu0
        %v2469 = vadd.f32 0.0, %v2468
        %v2470 = vpop.f32.mrb[0].mxu0
        %v2471 = vadd.f32 0.0, %v2470
        %v2472 = vpop.f32.mrb[0].mxu0
        %v2473 = vadd.f32 0.0, %v2472
        %2474 = vmatprep.mubr.bf16.mxu0 0
        %2475 = vmatmul.mubr.bf16.gmra.mrb[0].mxu0 %v2421
        %v2476 = vpop.f32.mrb[0].mxu0
        %v2477 = vadd.f32 0.0, %v2476
        %v2478 = vpop.f32.mrb[0].mxu0
        %v2479 = vadd.f32 0.0, %v2478
        %v2480 = vpop.f32.mrb[0].mxu0
        %v2481 = vadd.f32 0.0, %v2480
        %v2482 = vpop.f32.mrb[0].mxu0
        %v2483 = vadd.f32 0.0, %v2482
        %2484 = vmatprep.mubr.bf16.mxu0 0
        %2485 = vmatmul.mubr.bf16.gmra.mrb[0].mxu0 %v2424
        %v2486 = vpop.f32.mrb[0].mxu0
        %v2487 = vadd.f32 0.0, %v2486
        %v2488 = vpop.f32.mrb[0].mxu0
        %v2489 = vadd.f32 0.0, %v2488
        %v2490 = vpop.f32.mrb[0].mxu0
        %v2491 = vadd.f32 0.0, %v2490
        %v2492 = vpop.f32.mrb[0].mxu0
        %v2493 = vadd.f32 0.0, %v2492
        %2494 = vmatprep.mubr.bf16.mxu0 0
        %2495 = vmatmul.mubr.bf16.gmra.mrb[0].mxu0 %v2427
        %v2496 = vpop.f32.mrb[0].mxu0
        %v2497 = vadd.f32 0.0, %v2496
        %v2498 = vpop.f32.mrb[0].mxu0
        %v2499 = vadd.f32 0.0, %v2498
        %v2500 = vpop.f32.mrb[0].mxu0
        %v2501 = vadd.f32 0.0, %v2500
        %v2502 = vpop.f32.mrb[0].mxu0
        %v2503 = vadd.f32 0.0, %v2502
        %2504 = vmatprep.mubr.bf16.mxu0 0
        %2505 = vmatmul.mubr.bf16.gmra.mrb[0].mxu0 %v2430
        %v2506 = vpop.f32.mrb[0].mxu0
        %v2507 = vadd.f32 0.0, %v2506
        %v2508 = vpop.f32.mrb[0].mxu0
        %v2509 = vadd.f32 0.0, %v2508
        %v2510 = vpop.f32.mrb[0].mxu0
        %v2511 = vpop.f32.mrb[0].mxu0
        %2512 = vdwg.mxu0
        %v2513 = vadd.f32 %v2261, %v2467
        %v2514 = vadd.f32 %v2262, %v2469
        %v2515 = vadd.f32 %v2263, %v2471
        %v2516 = vadd.f32 %v2264, %v2473
        %v2517 = vadd.f32 %v2265, %v2477
        %v2518 = vadd.f32 %v2266, %v2479
        %v2519 = vadd.f32 %v2267, %v2481
        %v2520 = vadd.f32 %v2268, %v2483
        %v2521 = vadd.f32 %v2269, %v2487
        %v2522 = vadd.f32 %v2270, %v2489
        %v2523 = vadd.f32 %v2271, %v2491
        %v2524 = vadd.f32 %v2272, %v2493
        %v2525 = vadd.f32 %v2273, %v2497
        %v2526 = vadd.f32 %v2274, %v2499
        %v2527 = vadd.f32 %v2275, %v2501
        %v2528 = vadd.f32 %v2276, %v2503
        %v2529 = vadd.f32 %v2277, %v2507
        %v2530 = vadd.f32 %v2278, %v2509
        %v2531 = vld [vmem:[%s4] sm:$0xff]
        %v2532 = vld [vmem:[%s4 + $0x8] sm:$0xff]
        %v2533 = vld [vmem:[%s4 + $0x10] sm:$0xff]
        %v2534 = vld [vmem:[%s4 + $0x18] sm:$0xff]
        %v2535 = vld [vmem:[%s4 + $0x20] sm:$0xff]
        %v2536 = vld [vmem:[%s4 + $0x28] sm:$0xff]
        %v2537 = vld [vmem:[%s4 + $0x30] sm:$0xff]
        %v2538 = vld [vmem:[%s4 + $0x38] sm:$0xff]
        %2540 = vset.pattern.permute.xlu0 0
        %2541 = vperm.xlu0 %2540, %v2531
        %v2542 = vpop.permute.xlu0 %2541
        %2545 = vset.pattern.permute.xlu0 0
        %2546 = vperm.xlu0 %2545, %v2532
        %v2547 = vpop.permute.xlu0 %2546
        %2550 = vset.pattern.permute.xlu0 0
        %2551 = vperm.xlu0 %2550, %v2533
        %v2552 = vpop.permute.xlu0 %2551
        %2555 = vset.pattern.permute.xlu0 0
        %2556 = vperm.xlu0 %2555, %v2534
        %v2557 = vpop.permute.xlu0 %2556
        %v2559 = vadd.f32 %v2513, %v2542
        %v2560 = vadd.f32 %v2514, %v2542
        %v2561 = vadd.f32 %v2515, %v2547
        %v2562 = vadd.f32 %v2516, %v2547
        %v2563 = vadd.f32 %v2517, %v2552
        %v2564 = vadd.f32 %v2518, %v2552
        %v2565 = vadd.f32 %v2519, %v2557
        %v2566 = vadd.f32 %v2520, %v2557
        %2568 = vset.pattern.permute.xlu0 0
        %2569 = vperm.xlu0 %2568, %v2535
        %v2570 = vpop.permute.xlu0 %2569
        %2573 = vset.pattern.permute.xlu0 0
        %2574 = vperm.xlu0 %2573, %v2536
        %v2575 = vpop.permute.xlu0 %2574
        %2578 = vset.pattern.permute.xlu0 0
        %2579 = vperm.xlu0 %2578, %v2537
        %v2580 = vpop.permute.xlu0 %2579
        %2583 = vset.pattern.permute.xlu0 0
        %2584 = vperm.xlu0 %2583, %v2538
        %v2585 = vpop.permute.xlu0 %2584
        %v2587 = vadd.f32 %v2521, %v2570
        %v2588 = vadd.f32 %v2522, %v2570
        %v2589 = vadd.f32 %v2523, %v2575
        %v2590 = vadd.f32 %v2524, %v2575
        %v2591 = vadd.f32 %v2525, %v2580
        %v2592 = vadd.f32 %v2526, %v2580
        %v2593 = vadd.f32 %v2527, %v2585
        %v2594 = vadd.f32 %v2528, %v2585
        %v2595 = vmul.f32 %v2559, %v2587
        %v2596 = vmul.f32 %v2560, %v2588
        %v2597 = vmul.f32 %v2561, %v2589
        %v2598 = vmul.f32 %v2562, %v2590
        %v2599 = vmul.f32 %v2563, %v2591
        %v2600 = vmul.f32 %v2564, %v2592
        %v2601 = vmul.f32 %v2565, %v2593
        %v2602 = vmul.f32 %v2566, %v2594
        %v2603 = vsub.f32 0.0, %v2595
        %v2604 = vsub.f32 0.0, %v2596
        %v2605 = vsub.f32 0.0, %v2597
        %v2606 = vsub.f32 0.0, %v2598
        %v2607 = vsub.f32 0.0, %v2599
        %v2608 = vsub.f32 0.0, %v2600
        %v2609 = vsub.f32 0.0, %v2601
        %v2610 = vsub.f32 0.0, %v2602
        %v2611 = vmul.f32 %v2603, 1.442695
        %v2612 = vpow.pop %v2611
        %v2613 = vmul.f32 %v2604, 1.442695
        %v2614 = vpow.pop %v2613
        %v2615 = vmul.f32 %v2605, 1.442695
        %v2616 = vpow.pop %v2615
        %v2617 = vmul.f32 %v2606, 1.442695
        %v2618 = vpow.pop %v2617
        %v2619 = vmul.f32 %v2607, 1.442695
        %v2620 = vpow.pop %v2619
        %v2621 = vmul.f32 %v2608, 1.442695
        %v2622 = vpow.pop %v2621
        %v2623 = vmul.f32 %v2609, 1.442695
        %v2624 = vpow.pop %v2623
        %v2625 = vmul.f32 %v2610, 1.442695
        %v2626 = vpow.pop %v2625
        %v2627 = vadd.f32 %v2612, 1.0
        %v2628 = vadd.f32 %v2614, 1.0
        %v2629 = vadd.f32 %v2616, 1.0
        %v2630 = vadd.f32 %v2618, 1.0
        %v2631 = vadd.f32 %v2620, 1.0
        %v2632 = vadd.f32 %v2622, 1.0
        %v2633 = vadd.f32 %v2624, 1.0
        %v2634 = vadd.f32 %v2626, 1.0
        %v2635 = vrcp.pop %v2627
        %v2636 = vmul.f32 1.0, %v2635
        %v2637 = vrcp.pop %v2628
        %v2638 = vmul.f32 1.0, %v2637
        %v2639 = vrcp.pop %v2629
        %v2640 = vmul.f32 1.0, %v2639
        %v2641 = vrcp.pop %v2630
        %v2642 = vmul.f32 1.0, %v2641
        %v2643 = vrcp.pop %v2631
        %v2644 = vmul.f32 1.0, %v2643
        %v2645 = vrcp.pop %v2632
        %v2646 = vmul.f32 1.0, %v2645
        %v2647 = vrcp.pop %v2633
        %v2648 = vmul.f32 1.0, %v2647
        %v2649 = vrcp.pop %v2634
        %v2650 = vmul.f32 1.0, %v2649
        %v2651 = vmul.f32 %v336, %v2636
        %v2652 = vmul.f32 %v337, %v2638
        %v2653 = vmul.f32 %v338, %v2640
        %v2654 = vmul.f32 %v339, %v2642
        %v2655 = vmul.f32 %v340, %v2644
        %v2656 = vmul.f32 %v341, %v2646
        %v2657 = vmul.f32 %v342, %v2648
        %v2658 = vmul.f32 %v343, %v2650
        %v2659 = vmul.f32 %v344, %v2636
        %v2660 = vmul.f32 %v345, %v2638
        %v2661 = vmul.f32 %v346, %v2640
        %v2662 = vmul.f32 %v347, %v2642
        %v2663 = vmul.f32 %v348, %v2644
        %v2664 = vmul.f32 %v349, %v2646
        %v2665 = vmul.f32 %v350, %v2648
        %v2666 = vmul.f32 %v351, %v2650
        %2675 = vrot.lane.b32.xlu0 %v2652, 17
        %v2676 = vpop.permute.xlu0 %2675
        %2677 = vrot.lane.b32.xlu0 %v2654, 17
        %v2678 = vpop.permute.xlu0 %2677
        %2679 = vrot.lane.b32.xlu0 %v2656, 17
        %v2680 = vpop.permute.xlu0 %2679
        %2681 = vrot.lane.b32.xlu0 %v2658, 17
        %v2682 = vpop.permute.xlu0 %2681
        %2683 = vrot.lane.b32.xlu0 %v2660, 17
        %v2684 = vpop.permute.xlu0 %2683
        %2685 = vrot.lane.b32.xlu0 %v2662, 17
        %v2686 = vpop.permute.xlu0 %2685
        %2687 = vrot.lane.b32.xlu0 %v2664, 17
        %v2688 = vpop.permute.xlu0 %2687
        %2689 = vrot.lane.b32.xlu0 %v2666, 17
        %v2690 = vpop.permute.xlu0 %2689
        %2707 = vrot.lane.b32.xlu0 %v2651, 17
        %v2708 = vpop.permute.xlu0 %2707
        %2709 = vrot.lane.b32.xlu0 %v2653, 17
        %v2710 = vpop.permute.xlu0 %2709
        %2711 = vrot.lane.b32.xlu0 %v2655, 17
        %v2712 = vpop.permute.xlu0 %2711
        %2713 = vrot.lane.b32.xlu0 %v2657, 17
        %v2714 = vpop.permute.xlu0 %2713
        %2715 = vrot.lane.b32.xlu0 %v2659, 17
        %v2716 = vpop.permute.xlu0 %2715
        %2717 = vrot.lane.b32.xlu0 %v2661, 17
        %v2718 = vpop.permute.xlu0 %2717
        %2719 = vrot.lane.b32.xlu0 %v2663, 17
        %v2720 = vpop.permute.xlu0 %2719
        %2721 = vrot.lane.b32.xlu0 %v2665, 17
        %v2722 = vpop.permute.xlu0 %2721
        %v2723 = vsel %vm412, %v2708, %v2676
        %v2724 = vsel %vm412, %v2710, %v2678
        %v2725 = vsel %vm412, %v2712, %v2680
        %v2726 = vsel %vm412, %v2714, %v2682
        %v2727 = vsel %vm412, %v2716, %v2684
        %v2728 = vsel %vm412, %v2718, %v2686
        %v2729 = vsel %vm412, %v2720, %v2688
        %v2730 = vsel %vm412, %v2722, %v2690
        %v2747 = vsel %vm412, %v2676, %v2708
        %v2748 = vsel %vm412, %v2678, %v2710
        %v2749 = vsel %vm412, %v2680, %v2712
        %v2750 = vsel %vm412, %v2682, %v2714
        %v2751 = vsel %vm412, %v2684, %v2716
        %v2752 = vsel %vm412, %v2686, %v2718
        %v2753 = vsel %vm412, %v2688, %v2720
        %v2754 = vsel %vm412, %v2690, %v2722
        %v2755 = vmul.f32 %v2747, %v448
        %v2756 = vmul.f32 %v2723, %v452
        %v2757 = vmul.f32 %v2748, %v448
        %v2758 = vmul.f32 %v2724, %v452
        %v2759 = vmul.f32 %v2749, %v448
        %v2760 = vmul.f32 %v2725, %v452
        %v2761 = vmul.f32 %v2750, %v448
        %v2762 = vmul.f32 %v2726, %v452
        %v2763 = vmul.f32 %v2751, %v448
        %v2764 = vmul.f32 %v2727, %v452
        %v2765 = vmul.f32 %v2752, %v448
        %v2766 = vmul.f32 %v2728, %v452
        %v2767 = vmul.f32 %v2753, %v448
        %v2768 = vmul.f32 %v2729, %v452
        %v2769 = vmul.f32 %v2754, %v448
        %v2770 = vmul.f32 %v2730, %v452
        %v2771 = vpack.c.bf16 %v2757, %v2755
        %v2772 = vpack.c.bf16 %v2758, %v2756
        %v2773 = vpack.c.bf16 %v2761, %v2759
        %v2774 = vpack.c.bf16 %v2762, %v2760
        %v2775 = vpack.c.bf16 %v2765, %v2763
        %v2776 = vpack.c.bf16 %v2766, %v2764
        %v2777 = vpack.c.bf16 %v2769, %v2767
        %v2778 = vpack.c.bf16 %v2770, %v2768
        %v2779 = vld [vmem:[%s5] sm:$0x3]
        %2780 = vrot.lane.b32.xlu0 %v2652, 16
        %v2781 = vpop.permute.xlu0 %2780
        %2782 = vrot.lane.b32.xlu0 %v2654, 16
        %v2783 = vpop.permute.xlu0 %2782
        %2784 = vrot.lane.b32.xlu0 %v2656, 16
        %v2785 = vpop.permute.xlu0 %2784
        %2786 = vrot.lane.b32.xlu0 %v2658, 16
        %v2787 = vpop.permute.xlu0 %2786
        %2788 = vrot.lane.b32.xlu0 %v2660, 16
        %v2789 = vpop.permute.xlu0 %2788
        %2790 = vrot.lane.b32.xlu0 %v2662, 16
        %v2791 = vpop.permute.xlu0 %2790
        %2792 = vrot.lane.b32.xlu0 %v2664, 16
        %v2793 = vpop.permute.xlu0 %2792
        %2794 = vrot.lane.b32.xlu0 %v2666, 16
        %v2795 = vpop.permute.xlu0 %2794
        %2804 = vrot.lane.b32.xlu0 %v2651, 16
        %v2805 = vpop.permute.xlu0 %2804
        %2806 = vrot.lane.b32.xlu0 %v2653, 16
        %v2807 = vpop.permute.xlu0 %2806
        %2808 = vrot.lane.b32.xlu0 %v2655, 16
        %v2809 = vpop.permute.xlu0 %2808
        %2810 = vrot.lane.b32.xlu0 %v2657, 16
        %v2811 = vpop.permute.xlu0 %2810
        %2812 = vrot.lane.b32.xlu0 %v2659, 16
        %v2813 = vpop.permute.xlu0 %2812
        %2814 = vrot.lane.b32.xlu0 %v2661, 16
        %v2815 = vpop.permute.xlu0 %2814
        %2816 = vrot.lane.b32.xlu0 %v2663, 16
        %v2817 = vpop.permute.xlu0 %2816
        %2818 = vrot.lane.b32.xlu0 %v2665, 16
        %v2819 = vpop.permute.xlu0 %2818
        %v2820 = vsel %vm526, %v2805, %v2781
        %v2821 = vsel %vm526, %v2807, %v2783
        %v2822 = vsel %vm526, %v2809, %v2785
        %v2823 = vsel %vm526, %v2811, %v2787
        %v2824 = vsel %vm526, %v2813, %v2789
        %v2825 = vsel %vm526, %v2815, %v2791
        %v2826 = vsel %vm526, %v2817, %v2793
        %v2827 = vsel %vm526, %v2819, %v2795
        %v2844 = vsel %vm526, %v2781, %v2805
        %v2845 = vsel %vm526, %v2783, %v2807
        %v2846 = vsel %vm526, %v2785, %v2809
        %v2847 = vsel %vm526, %v2787, %v2811
        %v2848 = vsel %vm526, %v2789, %v2813
        %v2849 = vsel %vm526, %v2791, %v2815
        %v2850 = vsel %vm526, %v2793, %v2817
        %v2851 = vsel %vm526, %v2795, %v2819
        %v2852 = vmul.f32 %v2844, %v562
        %v2853 = vmul.f32 %v2820, %v566
        %v2854 = vmul.f32 %v2845, %v562
        %v2855 = vmul.f32 %v2821, %v566
        %v2856 = vmul.f32 %v2846, %v562
        %v2857 = vmul.f32 %v2822, %v566
        %v2858 = vmul.f32 %v2847, %v562
        %v2859 = vmul.f32 %v2823, %v566
        %v2860 = vmul.f32 %v2848, %v562
        %v2861 = vmul.f32 %v2824, %v566
        %v2862 = vmul.f32 %v2849, %v562
        %v2863 = vmul.f32 %v2825, %v566
        %v2864 = vmul.f32 %v2850, %v562
        %v2865 = vmul.f32 %v2826, %v566
        %v2866 = vmul.f32 %v2851, %v562
        %v2867 = vmul.f32 %v2827, %v566
        %v2868 = vpack.c.bf16 %v2854, %v2852
        %v2869 = vpack.c.bf16 %v2855, %v2853
        %v2870 = vpack.c.bf16 %v2858, %v2856
        %v2871 = vpack.c.bf16 %v2859, %v2857
        %v2872 = vpack.c.bf16 %v2862, %v2860
        %v2873 = vpack.c.bf16 %v2863, %v2861
        %v2874 = vpack.c.bf16 %v2866, %v2864
        %v2875 = vpack.c.bf16 %v2867, %v2865
        %s2876 = scalar_lea.vmem %s5, 2
        %v2877 = vld [vmem:[%s2876] sm:$0x3]
        %v2879 = vsel %vm624, %v2877, 0
        %2881 = vmatprep.subr.bf16.mxu0 %v2869
        %2882 = vmatpush1.bf16.msra.mxu0 %v2868
        %2883 = vmatprep.subr.bf16.mxu0 %v2871
        %2884 = vmatpush1.bf16.msra.mxu0 %v2870
        %2885 = vmatprep.subr.bf16.mxu0 %v2873
        %2886 = vmatpush1.bf16.msra.mxu0 %v2872
        %2887 = vmatprep.subr.bf16.mxu0 %v2875
        %2888 = vmatpush1.bf16.msra.mxu0 %v2874
        %2889 = vmatprep.subr.bf16.mxu0 0
        %2890 = vmatpush1.bf16.msra.mxu0 0
        %2891 = vmatprep.subr.bf16.mxu0 0
        %2892 = vmatpush1.bf16.msra.mxu0 0
        %2893 = vmatprep.subr.bf16.mxu0 0
        %2894 = vmatpush1.bf16.msra.mxu0 0
        %2895 = vmatprep.subr.bf16.mxu0 0
        %2896 = vmatpush1.bf16.msra.mxu0 0
        %2897 = vmatprep.subr.bf16.mxu0 0
        %2898 = vmatpush1.bf16.msra.mxu0 0
        %2899 = vmatprep.subr.bf16.mxu0 0
        %2900 = vmatpush1.bf16.msra.mxu0 0
        %2901 = vmatprep.subr.bf16.mxu0 0
        %2902 = vmatpush1.bf16.msra.mxu0 0
        %2903 = vmatprep.subr.bf16.mxu0 0
        %2904 = vmatpush1.bf16.msra.mxu0 0
        %2905 = vmatprep.subr.bf16.mxu0 0
        %2906 = vmatpush1.bf16.msra.mxu0 0
        %2907 = vmatprep.subr.bf16.mxu0 0
        %2908 = vmatpush1.bf16.msra.mxu0 0
        %2909 = vmatprep.subr.bf16.mxu0 0
        %2910 = vmatpush1.bf16.msra.mxu0 0
        %2911 = vmatprep.subr.bf16.mxu0 0
        %2912 = vmatpush1.bf16.msra.mxu0 0
        %2913 = vmatprep.mubr.bf16.mxu0 0
        %2914 = vmatmul.mubr.bf16.gmra.mrb[0].mxu0 %v2879
        %v2915 = vpop.f32.mrb[0].mxu0
        %v2916 = vadd.f32 0.0, %v2915
        %v2917 = vpop.f32.mrb[0].mxu0
        %v2918 = vadd.f32 0.0, %v2917
        %v2919 = vpop.f32.mrb[0].mxu0
        %v2920 = vpop.f32.mrb[0].mxu0
        %2921 = vdwg.mxu0
        %v2923 = vsel %vm624, %v2779, 0
        %2925 = vmatprep.subr.bf16.mxu0 %v2772
        %2926 = vmatpush1.bf16.msra.mxu0 %v2771
        %2927 = vmatprep.subr.bf16.mxu0 %v2774
        %2928 = vmatpush1.bf16.msra.mxu0 %v2773
        %2929 = vmatprep.subr.bf16.mxu0 %v2776
        %2930 = vmatpush1.bf16.msra.mxu0 %v2775
        %2931 = vmatprep.subr.bf16.mxu0 %v2778
        %2932 = vmatpush1.bf16.msra.mxu0 %v2777
        %2933 = vmatprep.subr.bf16.mxu0 0
        %2934 = vmatpush1.bf16.msra.mxu0 0
        %2935 = vmatprep.subr.bf16.mxu0 0
        %2936 = vmatpush1.bf16.msra.mxu0 0
        %2937 = vmatprep.subr.bf16.mxu0 0
        %2938 = vmatpush1.bf16.msra.mxu0 0
        %2939 = vmatprep.subr.bf16.mxu0 0
        %2940 = vmatpush1.bf16.msra.mxu0 0
        %2941 = vmatprep.subr.bf16.mxu0 0
        %2942 = vmatpush1.bf16.msra.mxu0 0
        %2943 = vmatprep.subr.bf16.mxu0 0
        %2944 = vmatpush1.bf16.msra.mxu0 0
        %2945 = vmatprep.subr.bf16.mxu0 0
        %2946 = vmatpush1.bf16.msra.mxu0 0
        %2947 = vmatprep.subr.bf16.mxu0 0
        %2948 = vmatpush1.bf16.msra.mxu0 0
        %2949 = vmatprep.subr.bf16.mxu0 0
        %2950 = vmatpush1.bf16.msra.mxu0 0
        %2951 = vmatprep.subr.bf16.mxu0 0
        %2952 = vmatpush1.bf16.msra.mxu0 0
        %2953 = vmatprep.subr.bf16.mxu0 0
        %2954 = vmatpush1.bf16.msra.mxu0 0
        %2955 = vmatprep.subr.bf16.mxu0 0
        %2956 = vmatpush1.bf16.msra.mxu0 0
        %2957 = vmatprep.mubr.bf16.mxu0 0
        %2958 = vmatmul.mubr.bf16.gmra.mrb[0].mxu0 %v2923
        %v2959 = vpop.f32.mrb[0].mxu0
        %v2960 = vadd.f32 %v2916, %v2959
        %v2961 = vpop.f32.mrb[0].mxu0
        %v2962 = vadd.f32 %v2918, %v2961
        %v2963 = vpop.f32.mrb[0].mxu0
        %v2964 = vpop.f32.mrb[0].mxu0
        %2965 = vdwg.mxu0
        %2966 = vrot.lane.b32.xlu0 %v2652, 15
        %v2967 = vpop.permute.xlu0 %2966
        %2968 = vrot.lane.b32.xlu0 %v2654, 15
        %v2969 = vpop.permute.xlu0 %2968
        %2970 = vrot.lane.b32.xlu0 %v2656, 15
        %v2971 = vpop.permute.xlu0 %2970
        %2972 = vrot.lane.b32.xlu0 %v2658, 15
        %v2973 = vpop.permute.xlu0 %2972
        %2974 = vrot.lane.b32.xlu0 %v2660, 15
        %v2975 = vpop.permute.xlu0 %2974
        %2976 = vrot.lane.b32.xlu0 %v2662, 15
        %v2977 = vpop.permute.xlu0 %2976
        %2978 = vrot.lane.b32.xlu0 %v2664, 15
        %v2979 = vpop.permute.xlu0 %2978
        %2980 = vrot.lane.b32.xlu0 %v2666, 15
        %v2981 = vpop.permute.xlu0 %2980
        %2990 = vrot.lane.b32.xlu0 %v2651, 15
        %v2991 = vpop.permute.xlu0 %2990
        %2992 = vrot.lane.b32.xlu0 %v2653, 15
        %v2993 = vpop.permute.xlu0 %2992
        %2994 = vrot.lane.b32.xlu0 %v2655, 15
        %v2995 = vpop.permute.xlu0 %2994
        %2996 = vrot.lane.b32.xlu0 %v2657, 15
        %v2997 = vpop.permute.xlu0 %2996
        %2998 = vrot.lane.b32.xlu0 %v2659, 15
        %v2999 = vpop.permute.xlu0 %2998
        %3000 = vrot.lane.b32.xlu0 %v2661, 15
        %v3001 = vpop.permute.xlu0 %3000
        %3002 = vrot.lane.b32.xlu0 %v2663, 15
        %v3003 = vpop.permute.xlu0 %3002
        %3004 = vrot.lane.b32.xlu0 %v2665, 15
        %v3005 = vpop.permute.xlu0 %3004
        %v3006 = vsel %vm880, %v2991, %v2967
        %v3007 = vsel %vm880, %v2993, %v2969
        %v3008 = vsel %vm880, %v2995, %v2971
        %v3009 = vsel %vm880, %v2997, %v2973
        %v3010 = vsel %vm880, %v2999, %v2975
        %v3011 = vsel %vm880, %v3001, %v2977
        %v3012 = vsel %vm880, %v3003, %v2979
        %v3013 = vsel %vm880, %v3005, %v2981
        %v3030 = vsel %vm880, %v2967, %v2991
        %v3031 = vsel %vm880, %v2969, %v2993
        %v3032 = vsel %vm880, %v2971, %v2995
        %v3033 = vsel %vm880, %v2973, %v2997
        %v3034 = vsel %vm880, %v2975, %v2999
        %v3035 = vsel %vm880, %v2977, %v3001
        %v3036 = vsel %vm880, %v2979, %v3003
        %v3037 = vsel %vm880, %v2981, %v3005
        %v3038 = vmul.f32 %v3030, %v916
        %v3039 = vmul.f32 %v3006, %v920
        %v3040 = vmul.f32 %v3031, %v916
        %v3041 = vmul.f32 %v3007, %v920
        %v3042 = vmul.f32 %v3032, %v916
        %v3043 = vmul.f32 %v3008, %v920
        %v3044 = vmul.f32 %v3033, %v916
        %v3045 = vmul.f32 %v3009, %v920
        %v3046 = vmul.f32 %v3034, %v916
        %v3047 = vmul.f32 %v3010, %v920
        %v3048 = vmul.f32 %v3035, %v916
        %v3049 = vmul.f32 %v3011, %v920
        %v3050 = vmul.f32 %v3036, %v916
        %v3051 = vmul.f32 %v3012, %v920
        %v3052 = vmul.f32 %v3037, %v916
        %v3053 = vmul.f32 %v3013, %v920
        %v3054 = vpack.c.bf16 %v3040, %v3038
        %v3055 = vpack.c.bf16 %v3041, %v3039
        %v3056 = vpack.c.bf16 %v3044, %v3042
        %v3057 = vpack.c.bf16 %v3045, %v3043
        %v3058 = vpack.c.bf16 %v3048, %v3046
        %v3059 = vpack.c.bf16 %v3049, %v3047
        %v3060 = vpack.c.bf16 %v3052, %v3050
        %v3061 = vpack.c.bf16 %v3053, %v3051
        %s3062 = scalar_lea.vmem %s5, 4
        %v3063 = vld [vmem:[%s3062] sm:$0x3]
        %v3065 = vsel %vm624, %v3063, 0
        %3067 = vmatprep.subr.bf16.mxu0 %v3055
        %3068 = vmatpush1.bf16.msra.mxu0 %v3054
        %3069 = vmatprep.subr.bf16.mxu0 %v3057
        %3070 = vmatpush1.bf16.msra.mxu0 %v3056
        %3071 = vmatprep.subr.bf16.mxu0 %v3059
        %3072 = vmatpush1.bf16.msra.mxu0 %v3058
        %3073 = vmatprep.subr.bf16.mxu0 %v3061
        %3074 = vmatpush1.bf16.msra.mxu0 %v3060
        %3075 = vmatprep.subr.bf16.mxu0 0
        %3076 = vmatpush1.bf16.msra.mxu0 0
        %3077 = vmatprep.subr.bf16.mxu0 0
        %3078 = vmatpush1.bf16.msra.mxu0 0
        %3079 = vmatprep.subr.bf16.mxu0 0
        %3080 = vmatpush1.bf16.msra.mxu0 0
        %3081 = vmatprep.subr.bf16.mxu0 0
        %3082 = vmatpush1.bf16.msra.mxu0 0
        %3083 = vmatprep.subr.bf16.mxu0 0
        %3084 = vmatpush1.bf16.msra.mxu0 0
        %3085 = vmatprep.subr.bf16.mxu0 0
        %3086 = vmatpush1.bf16.msra.mxu0 0
        %3087 = vmatprep.subr.bf16.mxu0 0
        %3088 = vmatpush1.bf16.msra.mxu0 0
        %3089 = vmatprep.subr.bf16.mxu0 0
        %3090 = vmatpush1.bf16.msra.mxu0 0
        %3091 = vmatprep.subr.bf16.mxu0 0
        %3092 = vmatpush1.bf16.msra.mxu0 0
        %3093 = vmatprep.subr.bf16.mxu0 0
        %3094 = vmatpush1.bf16.msra.mxu0 0
        %3095 = vmatprep.subr.bf16.mxu0 0
        %3096 = vmatpush1.bf16.msra.mxu0 0
        %3097 = vmatprep.subr.bf16.mxu0 0
        %3098 = vmatpush1.bf16.msra.mxu0 0
        %3099 = vmatprep.mubr.bf16.mxu0 0
        %3100 = vmatmul.mubr.bf16.gmra.mrb[0].mxu0 %v3065
        %v3101 = vpop.f32.mrb[0].mxu0
        %v3102 = vadd.f32 0.0, %v3101
        %v3103 = vpop.f32.mrb[0].mxu0
        %v3104 = vadd.f32 0.0, %v3103
        %v3105 = vpop.f32.mrb[0].mxu0
        %v3106 = vpop.f32.mrb[0].mxu0
        %3107 = vdwg.mxu0
        %v3108 = vadd.f32 %v2960, %v3102
        %v3109 = vadd.f32 %v2962, %v3104
        %3110 = vrot.lane.b32.xlu0 %v2652, 1
        %v3111 = vpop.permute.xlu0 %3110
        %3112 = vrot.lane.b32.xlu0 %v2654, 1
        %v3113 = vpop.permute.xlu0 %3112
        %3114 = vrot.lane.b32.xlu0 %v2656, 1
        %v3115 = vpop.permute.xlu0 %3114
        %3116 = vrot.lane.b32.xlu0 %v2658, 1
        %v3117 = vpop.permute.xlu0 %3116
        %3118 = vrot.lane.b32.xlu0 %v2660, 1
        %v3119 = vpop.permute.xlu0 %3118
        %3120 = vrot.lane.b32.xlu0 %v2662, 1
        %v3121 = vpop.permute.xlu0 %3120
        %3122 = vrot.lane.b32.xlu0 %v2664, 1
        %v3123 = vpop.permute.xlu0 %3122
        %3124 = vrot.lane.b32.xlu0 %v2666, 1
        %v3125 = vpop.permute.xlu0 %3124
        %3134 = vrot.lane.b32.xlu0 %v2651, 1
        %v3135 = vpop.permute.xlu0 %3134
        %3136 = vrot.lane.b32.xlu0 %v2653, 1
        %v3137 = vpop.permute.xlu0 %3136
        %3138 = vrot.lane.b32.xlu0 %v2655, 1
        %v3139 = vpop.permute.xlu0 %3138
        %3140 = vrot.lane.b32.xlu0 %v2657, 1
        %v3141 = vpop.permute.xlu0 %3140
        %3142 = vrot.lane.b32.xlu0 %v2659, 1
        %v3143 = vpop.permute.xlu0 %3142
        %3144 = vrot.lane.b32.xlu0 %v2661, 1
        %v3145 = vpop.permute.xlu0 %3144
        %3146 = vrot.lane.b32.xlu0 %v2663, 1
        %v3147 = vpop.permute.xlu0 %3146
        %3148 = vrot.lane.b32.xlu0 %v2665, 1
        %v3149 = vpop.permute.xlu0 %3148
        %v3150 = vsel %vm1132, %v3135, %v3111
        %v3151 = vsel %vm1132, %v3137, %v3113
        %v3152 = vsel %vm1132, %v3139, %v3115
        %v3153 = vsel %vm1132, %v3141, %v3117
        %v3154 = vsel %vm1132, %v3143, %v3119
        %v3155 = vsel %vm1132, %v3145, %v3121
        %v3156 = vsel %vm1132, %v3147, %v3123
        %v3157 = vsel %vm1132, %v3149, %v3125
        %v3174 = vsel %vm1132, %v3111, %v3135
        %v3175 = vsel %vm1132, %v3113, %v3137
        %v3176 = vsel %vm1132, %v3115, %v3139
        %v3177 = vsel %vm1132, %v3117, %v3141
        %v3178 = vsel %vm1132, %v3119, %v3143
        %v3179 = vsel %vm1132, %v3121, %v3145
        %v3180 = vsel %vm1132, %v3123, %v3147
        %v3181 = vsel %vm1132, %v3125, %v3149
        %v3182 = vmul.f32 %v3174, %v1168
        %v3183 = vmul.f32 %v3150, %v1172
        %v3184 = vmul.f32 %v3175, %v1168
        %v3185 = vmul.f32 %v3151, %v1172
        %v3186 = vmul.f32 %v3176, %v1168
        %v3187 = vmul.f32 %v3152, %v1172
        %v3188 = vmul.f32 %v3177, %v1168
        %v3189 = vmul.f32 %v3153, %v1172
        %v3190 = vmul.f32 %v3178, %v1168
        %v3191 = vmul.f32 %v3154, %v1172
        %v3192 = vmul.f32 %v3179, %v1168
        %v3193 = vmul.f32 %v3155, %v1172
        %v3194 = vmul.f32 %v3180, %v1168
        %v3195 = vmul.f32 %v3156, %v1172
        %v3196 = vmul.f32 %v3181, %v1168
        %v3197 = vmul.f32 %v3157, %v1172
        %v3198 = vpack.c.bf16 %v3184, %v3182
        %v3199 = vpack.c.bf16 %v3185, %v3183
        %v3200 = vpack.c.bf16 %v3188, %v3186
        %v3201 = vpack.c.bf16 %v3189, %v3187
        %v3202 = vpack.c.bf16 %v3192, %v3190
        %v3203 = vpack.c.bf16 %v3193, %v3191
        %v3204 = vpack.c.bf16 %v3196, %v3194
        %v3205 = vpack.c.bf16 %v3197, %v3195
        %s3206 = scalar_lea.vmem %s5, 6
        %v3207 = vld [vmem:[%s3206] sm:$0x3]
        %v3209 = vsel %vm624, %v3207, 0
        %3211 = vmatprep.subr.bf16.mxu0 %v3199
        %3212 = vmatpush1.bf16.msra.mxu0 %v3198
        %3213 = vmatprep.subr.bf16.mxu0 %v3201
        %3214 = vmatpush1.bf16.msra.mxu0 %v3200
        %3215 = vmatprep.subr.bf16.mxu0 %v3203
        %3216 = vmatpush1.bf16.msra.mxu0 %v3202
        %3217 = vmatprep.subr.bf16.mxu0 %v3205
        %3218 = vmatpush1.bf16.msra.mxu0 %v3204
        %3219 = vmatprep.subr.bf16.mxu0 0
        %3220 = vmatpush1.bf16.msra.mxu0 0
        %3221 = vmatprep.subr.bf16.mxu0 0
        %3222 = vmatpush1.bf16.msra.mxu0 0
        %3223 = vmatprep.subr.bf16.mxu0 0
        %3224 = vmatpush1.bf16.msra.mxu0 0
        %3225 = vmatprep.subr.bf16.mxu0 0
        %3226 = vmatpush1.bf16.msra.mxu0 0
        %3227 = vmatprep.subr.bf16.mxu0 0
        %3228 = vmatpush1.bf16.msra.mxu0 0
        %3229 = vmatprep.subr.bf16.mxu0 0
        %3230 = vmatpush1.bf16.msra.mxu0 0
        %3231 = vmatprep.subr.bf16.mxu0 0
        %3232 = vmatpush1.bf16.msra.mxu0 0
        %3233 = vmatprep.subr.bf16.mxu0 0
        %3234 = vmatpush1.bf16.msra.mxu0 0
        %3235 = vmatprep.subr.bf16.mxu0 0
        %3236 = vmatpush1.bf16.msra.mxu0 0
        %3237 = vmatprep.subr.bf16.mxu0 0
        %3238 = vmatpush1.bf16.msra.mxu0 0
        %3239 = vmatprep.subr.bf16.mxu0 0
        %3240 = vmatpush1.bf16.msra.mxu0 0
        %3241 = vmatprep.subr.bf16.mxu0 0
        %3242 = vmatpush1.bf16.msra.mxu0 0
        %3243 = vmatprep.mubr.bf16.mxu0 0
        %3244 = vmatmul.mubr.bf16.gmra.mrb[0].mxu0 %v3209
        %v3245 = vpop.f32.mrb[0].mxu0
        %v3246 = vadd.f32 0.0, %v3245
        %v3247 = vpop.f32.mrb[0].mxu0
        %v3248 = vadd.f32 0.0, %v3247
        %v3249 = vpop.f32.mrb[0].mxu0
        %v3250 = vpop.f32.mrb[0].mxu0
        %3251 = vdwg.mxu0
        %v3252 = vadd.f32 %v3108, %v3246
        %v3253 = vadd.f32 %v3109, %v3248
        %v3254 = vmul.f32 %v2651, %v1347
        %v3255 = vmul.f32 %v2652, %v1351
        %v3256 = vmul.f32 %v2653, %v1347
        %v3257 = vmul.f32 %v2654, %v1351
        %v3258 = vmul.f32 %v2655, %v1347
        %v3259 = vmul.f32 %v2656, %v1351
        %v3260 = vmul.f32 %v2657, %v1347
        %v3261 = vmul.f32 %v2658, %v1351
        %v3262 = vmul.f32 %v2659, %v1347
        %v3263 = vmul.f32 %v2660, %v1351
        %v3264 = vmul.f32 %v2661, %v1347
        %v3265 = vmul.f32 %v2662, %v1351
        %v3266 = vmul.f32 %v2663, %v1347
        %v3267 = vmul.f32 %v2664, %v1351
        %v3268 = vmul.f32 %v2665, %v1347
        %v3269 = vmul.f32 %v2666, %v1351
        %v3270 = vpack.c.bf16 %v3256, %v3254
        %v3271 = vpack.c.bf16 %v3257, %v3255
        %v3272 = vpack.c.bf16 %v3260, %v3258
        %v3273 = vpack.c.bf16 %v3261, %v3259
        %v3274 = vpack.c.bf16 %v3264, %v3262
        %v3275 = vpack.c.bf16 %v3265, %v3263
        %v3276 = vpack.c.bf16 %v3268, %v3266
        %v3277 = vpack.c.bf16 %v3269, %v3267
        %s3278 = scalar_lea.vmem %s5, 8
        %v3279 = vld [vmem:[%s3278] sm:$0x3]
        %v3281 = vsel %vm624, %v3279, 0
        %3283 = vmatprep.subr.bf16.mxu0 %v3271
        %3284 = vmatpush1.bf16.msra.mxu0 %v3270
        %3285 = vmatprep.subr.bf16.mxu0 %v3273
        %3286 = vmatpush1.bf16.msra.mxu0 %v3272
        %3287 = vmatprep.subr.bf16.mxu0 %v3275
        %3288 = vmatpush1.bf16.msra.mxu0 %v3274
        %3289 = vmatprep.subr.bf16.mxu0 %v3277
        %3290 = vmatpush1.bf16.msra.mxu0 %v3276
        %3291 = vmatprep.subr.bf16.mxu0 0
        %3292 = vmatpush1.bf16.msra.mxu0 0
        %3293 = vmatprep.subr.bf16.mxu0 0
        %3294 = vmatpush1.bf16.msra.mxu0 0
        %3295 = vmatprep.subr.bf16.mxu0 0
        %3296 = vmatpush1.bf16.msra.mxu0 0
        %3297 = vmatprep.subr.bf16.mxu0 0
        %3298 = vmatpush1.bf16.msra.mxu0 0
        %3299 = vmatprep.subr.bf16.mxu0 0
        %3300 = vmatpush1.bf16.msra.mxu0 0
        %3301 = vmatprep.subr.bf16.mxu0 0
        %3302 = vmatpush1.bf16.msra.mxu0 0
        %3303 = vmatprep.subr.bf16.mxu0 0
        %3304 = vmatpush1.bf16.msra.mxu0 0
        %3305 = vmatprep.subr.bf16.mxu0 0
        %3306 = vmatpush1.bf16.msra.mxu0 0
        %3307 = vmatprep.subr.bf16.mxu0 0
        %3308 = vmatpush1.bf16.msra.mxu0 0
        %3309 = vmatprep.subr.bf16.mxu0 0
        %3310 = vmatpush1.bf16.msra.mxu0 0
        %3311 = vmatprep.subr.bf16.mxu0 0
        %3312 = vmatpush1.bf16.msra.mxu0 0
        %3313 = vmatprep.subr.bf16.mxu0 0
        %3314 = vmatpush1.bf16.msra.mxu0 0
        %3315 = vmatprep.mubr.bf16.mxu0 0
        %3316 = vmatmul.mubr.bf16.gmra.mrb[0].mxu0 %v3281
        %v3317 = vpop.f32.mrb[0].mxu0
        %v3318 = vadd.f32 0.0, %v3317
        %v3319 = vpop.f32.mrb[0].mxu0
        %v3320 = vadd.f32 0.0, %v3319
        %v3321 = vpop.f32.mrb[0].mxu0
        %v3322 = vpop.f32.mrb[0].mxu0
        %3323 = vdwg.mxu0
        %v3324 = vadd.f32 %v3252, %v3318
        %v3325 = vadd.f32 %v3253, %v3320
        %3326 = vrot.lane.b32.xlu0 %v2651, 127
        %v3327 = vpop.permute.xlu0 %3326
        %3328 = vrot.lane.b32.xlu0 %v2652, 127
        %v3329 = vpop.permute.xlu0 %3328
        %3330 = vrot.lane.b32.xlu0 %v2653, 127
        %v3331 = vpop.permute.xlu0 %3330
        %3332 = vrot.lane.b32.xlu0 %v2654, 127
        %v3333 = vpop.permute.xlu0 %3332
        %3334 = vrot.lane.b32.xlu0 %v2655, 127
        %v3335 = vpop.permute.xlu0 %3334
        %3336 = vrot.lane.b32.xlu0 %v2656, 127
        %v3337 = vpop.permute.xlu0 %3336
        %3338 = vrot.lane.b32.xlu0 %v2657, 127
        %v3339 = vpop.permute.xlu0 %3338
        %3340 = vrot.lane.b32.xlu0 %v2658, 127
        %v3341 = vpop.permute.xlu0 %3340
        %3342 = vrot.lane.b32.xlu0 %v2659, 127
        %v3343 = vpop.permute.xlu0 %3342
        %3344 = vrot.lane.b32.xlu0 %v2660, 127
        %v3345 = vpop.permute.xlu0 %3344
        %3346 = vrot.lane.b32.xlu0 %v2661, 127
        %v3347 = vpop.permute.xlu0 %3346
        %3348 = vrot.lane.b32.xlu0 %v2662, 127
        %v3349 = vpop.permute.xlu0 %3348
        %3350 = vrot.lane.b32.xlu0 %v2663, 127
        %v3351 = vpop.permute.xlu0 %3350
        %3352 = vrot.lane.b32.xlu0 %v2664, 127
        %v3353 = vpop.permute.xlu0 %3352
        %3354 = vrot.lane.b32.xlu0 %v2665, 127
        %v3355 = vpop.permute.xlu0 %3354
        %3356 = vrot.lane.b32.xlu0 %v2666, 127
        %v3357 = vpop.permute.xlu0 %3356
        %v3358 = vsel %vm1555, %v3327, %v3329
        %v3359 = vsel %vm1555, %v3331, %v3333
        %v3360 = vsel %vm1555, %v3335, %v3337
        %v3361 = vsel %vm1555, %v3339, %v3341
        %v3362 = vsel %vm1555, %v3343, %v3345
        %v3363 = vsel %vm1555, %v3347, %v3349
        %v3364 = vsel %vm1555, %v3351, %v3353
        %v3365 = vsel %vm1555, %v3355, %v3357
        %v3390 = vsel %vm1555, %v3329, %v3327
        %v3391 = vsel %vm1555, %v3333, %v3331
        %v3392 = vsel %vm1555, %v3337, %v3335
        %v3393 = vsel %vm1555, %v3341, %v3339
        %v3394 = vsel %vm1555, %v3345, %v3343
        %v3395 = vsel %vm1555, %v3349, %v3347
        %v3396 = vsel %vm1555, %v3353, %v3351
        %v3397 = vsel %vm1555, %v3357, %v3355
        %v3398 = vmul.f32 %v3358, %v1599
        %v3399 = vmul.f32 %v3390, %v1603
        %v3400 = vmul.f32 %v3359, %v1599
        %v3401 = vmul.f32 %v3391, %v1603
        %v3402 = vmul.f32 %v3360, %v1599
        %v3403 = vmul.f32 %v3392, %v1603
        %v3404 = vmul.f32 %v3361, %v1599
        %v3405 = vmul.f32 %v3393, %v1603
        %v3406 = vmul.f32 %v3362, %v1599
        %v3407 = vmul.f32 %v3394, %v1603
        %v3408 = vmul.f32 %v3363, %v1599
        %v3409 = vmul.f32 %v3395, %v1603
        %v3410 = vmul.f32 %v3364, %v1599
        %v3411 = vmul.f32 %v3396, %v1603
        %v3412 = vmul.f32 %v3365, %v1599
        %v3413 = vmul.f32 %v3397, %v1603
        %v3414 = vpack.c.bf16 %v3400, %v3398
        %v3415 = vpack.c.bf16 %v3401, %v3399
        %v3416 = vpack.c.bf16 %v3404, %v3402
        %v3417 = vpack.c.bf16 %v3405, %v3403
        %v3418 = vpack.c.bf16 %v3408, %v3406
        %v3419 = vpack.c.bf16 %v3409, %v3407
        %v3420 = vpack.c.bf16 %v3412, %v3410
        %v3421 = vpack.c.bf16 %v3413, %v3411
        %s3422 = scalar_lea.vmem %s5, 10
        %v3423 = vld [vmem:[%s3422] sm:$0x3]
        %v3425 = vsel %vm624, %v3423, 0
        %3427 = vmatprep.subr.bf16.mxu0 %v3415
        %3428 = vmatpush1.bf16.msra.mxu0 %v3414
        %3429 = vmatprep.subr.bf16.mxu0 %v3417
        %3430 = vmatpush1.bf16.msra.mxu0 %v3416
        %3431 = vmatprep.subr.bf16.mxu0 %v3419
        %3432 = vmatpush1.bf16.msra.mxu0 %v3418
        %3433 = vmatprep.subr.bf16.mxu0 %v3421
        %3434 = vmatpush1.bf16.msra.mxu0 %v3420
        %3435 = vmatprep.subr.bf16.mxu0 0
        %3436 = vmatpush1.bf16.msra.mxu0 0
        %3437 = vmatprep.subr.bf16.mxu0 0
        %3438 = vmatpush1.bf16.msra.mxu0 0
        %3439 = vmatprep.subr.bf16.mxu0 0
        %3440 = vmatpush1.bf16.msra.mxu0 0
        %3441 = vmatprep.subr.bf16.mxu0 0
        %3442 = vmatpush1.bf16.msra.mxu0 0
        %3443 = vmatprep.subr.bf16.mxu0 0
        %3444 = vmatpush1.bf16.msra.mxu0 0
        %3445 = vmatprep.subr.bf16.mxu0 0
        %3446 = vmatpush1.bf16.msra.mxu0 0
        %3447 = vmatprep.subr.bf16.mxu0 0
        %3448 = vmatpush1.bf16.msra.mxu0 0
        %3449 = vmatprep.subr.bf16.mxu0 0
        %3450 = vmatpush1.bf16.msra.mxu0 0
        %3451 = vmatprep.subr.bf16.mxu0 0
        %3452 = vmatpush1.bf16.msra.mxu0 0
        %3453 = vmatprep.subr.bf16.mxu0 0
        %3454 = vmatpush1.bf16.msra.mxu0 0
        %3455 = vmatprep.subr.bf16.mxu0 0
        %3456 = vmatpush1.bf16.msra.mxu0 0
        %3457 = vmatprep.subr.bf16.mxu0 0
        %3458 = vmatpush1.bf16.msra.mxu0 0
        %3459 = vmatprep.mubr.bf16.mxu0 0
        %3460 = vmatmul.mubr.bf16.gmra.mrb[0].mxu0 %v3425
        %v3461 = vpop.f32.mrb[0].mxu0
        %v3462 = vadd.f32 0.0, %v3461
        %v3463 = vpop.f32.mrb[0].mxu0
        %v3464 = vadd.f32 0.0, %v3463
        %v3465 = vpop.f32.mrb[0].mxu0
        %v3466 = vpop.f32.mrb[0].mxu0
        %3467 = vdwg.mxu0
        %v3468 = vadd.f32 %v3324, %v3462
        %v3469 = vadd.f32 %v3325, %v3464
        %3470 = vrot.lane.b32.xlu0 %v2651, 113
        %v3471 = vpop.permute.xlu0 %3470
        %3472 = vrot.lane.b32.xlu0 %v2652, 113
        %v3473 = vpop.permute.xlu0 %3472
        %3474 = vrot.lane.b32.xlu0 %v2653, 113
        %v3475 = vpop.permute.xlu0 %3474
        %3476 = vrot.lane.b32.xlu0 %v2654, 113
        %v3477 = vpop.permute.xlu0 %3476
        %3478 = vrot.lane.b32.xlu0 %v2655, 113
        %v3479 = vpop.permute.xlu0 %3478
        %3480 = vrot.lane.b32.xlu0 %v2656, 113
        %v3481 = vpop.permute.xlu0 %3480
        %3482 = vrot.lane.b32.xlu0 %v2657, 113
        %v3483 = vpop.permute.xlu0 %3482
        %3484 = vrot.lane.b32.xlu0 %v2658, 113
        %v3485 = vpop.permute.xlu0 %3484
        %3486 = vrot.lane.b32.xlu0 %v2659, 113
        %v3487 = vpop.permute.xlu0 %3486
        %3488 = vrot.lane.b32.xlu0 %v2660, 113
        %v3489 = vpop.permute.xlu0 %3488
        %3490 = vrot.lane.b32.xlu0 %v2661, 113
        %v3491 = vpop.permute.xlu0 %3490
        %3492 = vrot.lane.b32.xlu0 %v2662, 113
        %v3493 = vpop.permute.xlu0 %3492
        %3494 = vrot.lane.b32.xlu0 %v2663, 113
        %v3495 = vpop.permute.xlu0 %3494
        %3496 = vrot.lane.b32.xlu0 %v2664, 113
        %v3497 = vpop.permute.xlu0 %3496
        %3498 = vrot.lane.b32.xlu0 %v2665, 113
        %v3499 = vpop.permute.xlu0 %3498
        %3500 = vrot.lane.b32.xlu0 %v2666, 113
        %v3501 = vpop.permute.xlu0 %3500
        %v3502 = vsel %vm1807, %v3471, %v3473
        %v3503 = vsel %vm1807, %v3475, %v3477
        %v3504 = vsel %vm1807, %v3479, %v3481
        %v3505 = vsel %vm1807, %v3483, %v3485
        %v3506 = vsel %vm1807, %v3487, %v3489
        %v3507 = vsel %vm1807, %v3491, %v3493
        %v3508 = vsel %vm1807, %v3495, %v3497
        %v3509 = vsel %vm1807, %v3499, %v3501
        %v3534 = vsel %vm1807, %v3473, %v3471
        %v3535 = vsel %vm1807, %v3477, %v3475
        %v3536 = vsel %vm1807, %v3481, %v3479
        %v3537 = vsel %vm1807, %v3485, %v3483
        %v3538 = vsel %vm1807, %v3489, %v3487
        %v3539 = vsel %vm1807, %v3493, %v3491
        %v3540 = vsel %vm1807, %v3497, %v3495
        %v3541 = vsel %vm1807, %v3501, %v3499
        %v3542 = vmul.f32 %v3502, %v1851
        %v3543 = vmul.f32 %v3534, %v1855
        %v3544 = vmul.f32 %v3503, %v1851
        %v3545 = vmul.f32 %v3535, %v1855
        %v3546 = vmul.f32 %v3504, %v1851
        %v3547 = vmul.f32 %v3536, %v1855
        %v3548 = vmul.f32 %v3505, %v1851
        %v3549 = vmul.f32 %v3537, %v1855
        %v3550 = vmul.f32 %v3506, %v1851
        %v3551 = vmul.f32 %v3538, %v1855
        %v3552 = vmul.f32 %v3507, %v1851
        %v3553 = vmul.f32 %v3539, %v1855
        %v3554 = vmul.f32 %v3508, %v1851
        %v3555 = vmul.f32 %v3540, %v1855
        %v3556 = vmul.f32 %v3509, %v1851
        %v3557 = vmul.f32 %v3541, %v1855
        %v3558 = vpack.c.bf16 %v3544, %v3542
        %v3559 = vpack.c.bf16 %v3545, %v3543
        %v3560 = vpack.c.bf16 %v3548, %v3546
        %v3561 = vpack.c.bf16 %v3549, %v3547
        %v3562 = vpack.c.bf16 %v3552, %v3550
        %v3563 = vpack.c.bf16 %v3553, %v3551
        %v3564 = vpack.c.bf16 %v3556, %v3554
        %v3565 = vpack.c.bf16 %v3557, %v3555
        %s3566 = scalar_lea.vmem %s5, 12
        %v3567 = vld [vmem:[%s3566] sm:$0x3]
        %v3569 = vsel %vm624, %v3567, 0
        %3571 = vmatprep.subr.bf16.mxu0 %v3559
        %3572 = vmatpush1.bf16.msra.mxu0 %v3558
        %3573 = vmatprep.subr.bf16.mxu0 %v3561
        %3574 = vmatpush1.bf16.msra.mxu0 %v3560
        %3575 = vmatprep.subr.bf16.mxu0 %v3563
        %3576 = vmatpush1.bf16.msra.mxu0 %v3562
        %3577 = vmatprep.subr.bf16.mxu0 %v3565
        %3578 = vmatpush1.bf16.msra.mxu0 %v3564
        %3579 = vmatprep.subr.bf16.mxu0 0
        %3580 = vmatpush1.bf16.msra.mxu0 0
        %3581 = vmatprep.subr.bf16.mxu0 0
        %3582 = vmatpush1.bf16.msra.mxu0 0
        %3583 = vmatprep.subr.bf16.mxu0 0
        %3584 = vmatpush1.bf16.msra.mxu0 0
        %3585 = vmatprep.subr.bf16.mxu0 0
        %3586 = vmatpush1.bf16.msra.mxu0 0
        %3587 = vmatprep.subr.bf16.mxu0 0
        %3588 = vmatpush1.bf16.msra.mxu0 0
        %3589 = vmatprep.subr.bf16.mxu0 0
        %3590 = vmatpush1.bf16.msra.mxu0 0
        %3591 = vmatprep.subr.bf16.mxu0 0
        %3592 = vmatpush1.bf16.msra.mxu0 0
        %3593 = vmatprep.subr.bf16.mxu0 0
        %3594 = vmatpush1.bf16.msra.mxu0 0
        %3595 = vmatprep.subr.bf16.mxu0 0
        %3596 = vmatpush1.bf16.msra.mxu0 0
        %3597 = vmatprep.subr.bf16.mxu0 0
        %3598 = vmatpush1.bf16.msra.mxu0 0
        %3599 = vmatprep.subr.bf16.mxu0 0
        %3600 = vmatpush1.bf16.msra.mxu0 0
        %3601 = vmatprep.subr.bf16.mxu0 0
        %3602 = vmatpush1.bf16.msra.mxu0 0
        %3603 = vmatprep.mubr.bf16.mxu0 0
        %3604 = vmatmul.mubr.bf16.gmra.mrb[0].mxu0 %v3569
        %v3605 = vpop.f32.mrb[0].mxu0
        %v3606 = vadd.f32 0.0, %v3605
        %v3607 = vpop.f32.mrb[0].mxu0
        %v3608 = vadd.f32 0.0, %v3607
        %v3609 = vpop.f32.mrb[0].mxu0
        %v3610 = vpop.f32.mrb[0].mxu0
        %3611 = vdwg.mxu0
        %v3612 = vadd.f32 %v3468, %v3606
        %v3613 = vadd.f32 %v3469, %v3608
        %3614 = vrot.lane.b32.xlu0 %v2651, 112
        %v3615 = vpop.permute.xlu0 %3614
        %3616 = vrot.lane.b32.xlu0 %v2652, 112
        %v3617 = vpop.permute.xlu0 %3616
        %3618 = vrot.lane.b32.xlu0 %v2653, 112
        %v3619 = vpop.permute.xlu0 %3618
        %3620 = vrot.lane.b32.xlu0 %v2654, 112
        %v3621 = vpop.permute.xlu0 %3620
        %3622 = vrot.lane.b32.xlu0 %v2655, 112
        %v3623 = vpop.permute.xlu0 %3622
        %3624 = vrot.lane.b32.xlu0 %v2656, 112
        %v3625 = vpop.permute.xlu0 %3624
        %3626 = vrot.lane.b32.xlu0 %v2657, 112
        %v3627 = vpop.permute.xlu0 %3626
        %3628 = vrot.lane.b32.xlu0 %v2658, 112
        %v3629 = vpop.permute.xlu0 %3628
        %3630 = vrot.lane.b32.xlu0 %v2659, 112
        %v3631 = vpop.permute.xlu0 %3630
        %3632 = vrot.lane.b32.xlu0 %v2660, 112
        %v3633 = vpop.permute.xlu0 %3632
        %3634 = vrot.lane.b32.xlu0 %v2661, 112
        %v3635 = vpop.permute.xlu0 %3634
        %3636 = vrot.lane.b32.xlu0 %v2662, 112
        %v3637 = vpop.permute.xlu0 %3636
        %3638 = vrot.lane.b32.xlu0 %v2663, 112
        %v3639 = vpop.permute.xlu0 %3638
        %3640 = vrot.lane.b32.xlu0 %v2664, 112
        %v3641 = vpop.permute.xlu0 %3640
        %3642 = vrot.lane.b32.xlu0 %v2665, 112
        %v3643 = vpop.permute.xlu0 %3642
        %3644 = vrot.lane.b32.xlu0 %v2666, 112
        %v3645 = vpop.permute.xlu0 %3644
        %v3646 = vsel %vm2059, %v3615, %v3617
        %v3647 = vsel %vm2059, %v3619, %v3621
        %v3648 = vsel %vm2059, %v3623, %v3625
        %v3649 = vsel %vm2059, %v3627, %v3629
        %v3650 = vsel %vm2059, %v3631, %v3633
        %v3651 = vsel %vm2059, %v3635, %v3637
        %v3652 = vsel %vm2059, %v3639, %v3641
        %v3653 = vsel %vm2059, %v3643, %v3645
        %v3678 = vsel %vm2059, %v3617, %v3615
        %v3679 = vsel %vm2059, %v3621, %v3619
        %v3680 = vsel %vm2059, %v3625, %v3623
        %v3681 = vsel %vm2059, %v3629, %v3627
        %v3682 = vsel %vm2059, %v3633, %v3631
        %v3683 = vsel %vm2059, %v3637, %v3635
        %v3684 = vsel %vm2059, %v3641, %v3639
        %v3685 = vsel %vm2059, %v3645, %v3643
        %v3686 = vmul.f32 %v3646, %v2103
        %v3687 = vmul.f32 %v3678, %v2107
        %v3688 = vmul.f32 %v3647, %v2103
        %v3689 = vmul.f32 %v3679, %v2107
        %v3690 = vmul.f32 %v3648, %v2103
        %v3691 = vmul.f32 %v3680, %v2107
        %v3692 = vmul.f32 %v3649, %v2103
        %v3693 = vmul.f32 %v3681, %v2107
        %v3694 = vmul.f32 %v3650, %v2103
        %v3695 = vmul.f32 %v3682, %v2107
        %v3696 = vmul.f32 %v3651, %v2103
        %v3697 = vmul.f32 %v3683, %v2107
        %v3698 = vmul.f32 %v3652, %v2103
        %v3699 = vmul.f32 %v3684, %v2107
        %v3700 = vmul.f32 %v3653, %v2103
        %v3701 = vmul.f32 %v3685, %v2107
        %v3702 = vpack.c.bf16 %v3688, %v3686
        %v3703 = vpack.c.bf16 %v3689, %v3687
        %v3704 = vpack.c.bf16 %v3692, %v3690
        %v3705 = vpack.c.bf16 %v3693, %v3691
        %v3706 = vpack.c.bf16 %v3696, %v3694
        %v3707 = vpack.c.bf16 %v3697, %v3695
        %v3708 = vpack.c.bf16 %v3700, %v3698
        %v3709 = vpack.c.bf16 %v3701, %v3699
        %s3710 = scalar_lea.vmem %s5, 14
        %v3711 = vld [vmem:[%s3710] sm:$0x3]
        %v3713 = vsel %vm624, %v3711, 0
        %3715 = vmatprep.subr.bf16.mxu0 %v3703
        %3716 = vmatpush1.bf16.msra.mxu0 %v3702
        %3717 = vmatprep.subr.bf16.mxu0 %v3705
        %3718 = vmatpush1.bf16.msra.mxu0 %v3704
        %3719 = vmatprep.subr.bf16.mxu0 %v3707
        %3720 = vmatpush1.bf16.msra.mxu0 %v3706
        %3721 = vmatprep.subr.bf16.mxu0 %v3709
        %3722 = vmatpush1.bf16.msra.mxu0 %v3708
        %3723 = vmatprep.subr.bf16.mxu0 0
        %3724 = vmatpush1.bf16.msra.mxu0 0
        %3725 = vmatprep.subr.bf16.mxu0 0
        %3726 = vmatpush1.bf16.msra.mxu0 0
        %3727 = vmatprep.subr.bf16.mxu0 0
        %3728 = vmatpush1.bf16.msra.mxu0 0
        %3729 = vmatprep.subr.bf16.mxu0 0
        %3730 = vmatpush1.bf16.msra.mxu0 0
        %3731 = vmatprep.subr.bf16.mxu0 0
        %3732 = vmatpush1.bf16.msra.mxu0 0
        %3733 = vmatprep.subr.bf16.mxu0 0
        %3734 = vmatpush1.bf16.msra.mxu0 0
        %3735 = vmatprep.subr.bf16.mxu0 0
        %3736 = vmatpush1.bf16.msra.mxu0 0
        %3737 = vmatprep.subr.bf16.mxu0 0
        %3738 = vmatpush1.bf16.msra.mxu0 0
        %3739 = vmatprep.subr.bf16.mxu0 0
        %3740 = vmatpush1.bf16.msra.mxu0 0
        %3741 = vmatprep.subr.bf16.mxu0 0
        %3742 = vmatpush1.bf16.msra.mxu0 0
        %3743 = vmatprep.subr.bf16.mxu0 0
        %3744 = vmatpush1.bf16.msra.mxu0 0
        %3745 = vmatprep.subr.bf16.mxu0 0
        %3746 = vmatpush1.bf16.msra.mxu0 0
        %3747 = vmatprep.mubr.bf16.mxu0 0
        %3748 = vmatmul.mubr.bf16.gmra.mrb[0].mxu0 %v3713
        %v3749 = vpop.f32.mrb[0].mxu0
        %v3750 = vadd.f32 0.0, %v3749
        %v3751 = vpop.f32.mrb[0].mxu0
        %v3752 = vadd.f32 0.0, %v3751
        %v3753 = vpop.f32.mrb[0].mxu0
        %v3754 = vpop.f32.mrb[0].mxu0
        %3755 = vdwg.mxu0
        %v3756 = vadd.f32 %v3612, %v3750
        %v3757 = vadd.f32 %v3613, %v3752
        %3758 = vrot.lane.b32.xlu0 %v2651, 111
        %v3759 = vpop.permute.xlu0 %3758
        %3760 = vrot.lane.b32.xlu0 %v2652, 111
        %v3761 = vpop.permute.xlu0 %3760
        %3762 = vrot.lane.b32.xlu0 %v2653, 111
        %v3763 = vpop.permute.xlu0 %3762
        %3764 = vrot.lane.b32.xlu0 %v2654, 111
        %v3765 = vpop.permute.xlu0 %3764
        %3766 = vrot.lane.b32.xlu0 %v2655, 111
        %v3767 = vpop.permute.xlu0 %3766
        %3768 = vrot.lane.b32.xlu0 %v2656, 111
        %v3769 = vpop.permute.xlu0 %3768
        %3770 = vrot.lane.b32.xlu0 %v2657, 111
        %v3771 = vpop.permute.xlu0 %3770
        %3772 = vrot.lane.b32.xlu0 %v2658, 111
        %v3773 = vpop.permute.xlu0 %3772
        %3774 = vrot.lane.b32.xlu0 %v2659, 111
        %v3775 = vpop.permute.xlu0 %3774
        %3776 = vrot.lane.b32.xlu0 %v2660, 111
        %v3777 = vpop.permute.xlu0 %3776
        %3778 = vrot.lane.b32.xlu0 %v2661, 111
        %v3779 = vpop.permute.xlu0 %3778
        %3780 = vrot.lane.b32.xlu0 %v2662, 111
        %v3781 = vpop.permute.xlu0 %3780
        %3782 = vrot.lane.b32.xlu0 %v2663, 111
        %v3783 = vpop.permute.xlu0 %3782
        %3784 = vrot.lane.b32.xlu0 %v2664, 111
        %v3785 = vpop.permute.xlu0 %3784
        %3786 = vrot.lane.b32.xlu0 %v2665, 111
        %v3787 = vpop.permute.xlu0 %3786
        %3788 = vrot.lane.b32.xlu0 %v2666, 111
        %v3789 = vpop.permute.xlu0 %3788
        %v3790 = vsel %vm2311, %v3759, %v3761
        %v3791 = vsel %vm2311, %v3763, %v3765
        %v3792 = vsel %vm2311, %v3767, %v3769
        %v3793 = vsel %vm2311, %v3771, %v3773
        %v3794 = vsel %vm2311, %v3775, %v3777
        %v3795 = vsel %vm2311, %v3779, %v3781
        %v3796 = vsel %vm2311, %v3783, %v3785
        %v3797 = vsel %vm2311, %v3787, %v3789
        %v3822 = vsel %vm2311, %v3761, %v3759
        %v3823 = vsel %vm2311, %v3765, %v3763
        %v3824 = vsel %vm2311, %v3769, %v3767
        %v3825 = vsel %vm2311, %v3773, %v3771
        %v3826 = vsel %vm2311, %v3777, %v3775
        %v3827 = vsel %vm2311, %v3781, %v3779
        %v3828 = vsel %vm2311, %v3785, %v3783
        %v3829 = vsel %vm2311, %v3789, %v3787
        %v3830 = vmul.f32 %v3790, %v2355
        %v3831 = vmul.f32 %v3822, %v2359
        %v3832 = vmul.f32 %v3791, %v2355
        %v3833 = vmul.f32 %v3823, %v2359
        %v3834 = vmul.f32 %v3792, %v2355
        %v3835 = vmul.f32 %v3824, %v2359
        %v3836 = vmul.f32 %v3793, %v2355
        %v3837 = vmul.f32 %v3825, %v2359
        %v3838 = vmul.f32 %v3794, %v2355
        %v3839 = vmul.f32 %v3826, %v2359
        %v3840 = vmul.f32 %v3795, %v2355
        %v3841 = vmul.f32 %v3827, %v2359
        %v3842 = vmul.f32 %v3796, %v2355
        %v3843 = vmul.f32 %v3828, %v2359
        %v3844 = vmul.f32 %v3797, %v2355
        %v3845 = vmul.f32 %v3829, %v2359
        %v3846 = vpack.c.bf16 %v3832, %v3830
        %v3847 = vpack.c.bf16 %v3833, %v3831
        %v3848 = vpack.c.bf16 %v3836, %v3834
        %v3849 = vpack.c.bf16 %v3837, %v3835
        %v3850 = vpack.c.bf16 %v3840, %v3838
        %v3851 = vpack.c.bf16 %v3841, %v3839
        %v3852 = vpack.c.bf16 %v3844, %v3842
        %v3853 = vpack.c.bf16 %v3845, %v3843
        %s3854 = scalar_lea.vmem %s5, 16
        %v3855 = vld [vmem:[%s3854] sm:$0x3]
        %v3857 = vsel %vm624, %v3855, 0
        %3859 = vmatprep.subr.bf16.mxu0 %v3847
        %3860 = vmatpush1.bf16.msra.mxu0 %v3846
        %3861 = vmatprep.subr.bf16.mxu0 %v3849
        %3862 = vmatpush1.bf16.msra.mxu0 %v3848
        %3863 = vmatprep.subr.bf16.mxu0 %v3851
        %3864 = vmatpush1.bf16.msra.mxu0 %v3850
        %3865 = vmatprep.subr.bf16.mxu0 %v3853
        %3866 = vmatpush1.bf16.msra.mxu0 %v3852
        %3867 = vmatprep.subr.bf16.mxu0 0
        %3868 = vmatpush1.bf16.msra.mxu0 0
        %3869 = vmatprep.subr.bf16.mxu0 0
        %3870 = vmatpush1.bf16.msra.mxu0 0
        %3871 = vmatprep.subr.bf16.mxu0 0
        %3872 = vmatpush1.bf16.msra.mxu0 0
        %3873 = vmatprep.subr.bf16.mxu0 0
        %3874 = vmatpush1.bf16.msra.mxu0 0
        %3875 = vmatprep.subr.bf16.mxu0 0
        %3876 = vmatpush1.bf16.msra.mxu0 0
        %3877 = vmatprep.subr.bf16.mxu0 0
        %3878 = vmatpush1.bf16.msra.mxu0 0
        %3879 = vmatprep.subr.bf16.mxu0 0
        %3880 = vmatpush1.bf16.msra.mxu0 0
        %3881 = vmatprep.subr.bf16.mxu0 0
        %3882 = vmatpush1.bf16.msra.mxu0 0
        %3883 = vmatprep.subr.bf16.mxu0 0
        %3884 = vmatpush1.bf16.msra.mxu0 0
        %3885 = vmatprep.subr.bf16.mxu0 0
        %3886 = vmatpush1.bf16.msra.mxu0 0
        %3887 = vmatprep.subr.bf16.mxu0 0
        %3888 = vmatpush1.bf16.msra.mxu0 0
        %3889 = vmatprep.subr.bf16.mxu0 0
        %3890 = vmatpush1.bf16.msra.mxu0 0
        %3891 = vmatprep.mubr.bf16.mxu0 0
        %3892 = vmatmul.mubr.bf16.gmra.mrb[0].mxu0 %v3857
        %v3893 = vpop.f32.mrb[0].mxu0
        %v3894 = vadd.f32 0.0, %v3893
        %v3895 = vpop.f32.mrb[0].mxu0
        %v3896 = vadd.f32 0.0, %v3895
        %v3897 = vpop.f32.mrb[0].mxu0
        %v3898 = vpop.f32.mrb[0].mxu0
        %3899 = vdwg.mxu0
        %v3900 = vadd.f32 %v3756, %v3894
        %v3901 = vadd.f32 %v3757, %v3896
        %v3902 = vld [vmem:[%s6] sm:$0xf]
        %v3903 = vadd.f32 %v2529, %v3900
        %v3904 = vadd.f32 %v2530, %v3901
        %3906 = vset.pattern.permute.xlu0 0
        %3907 = vperm.xlu0 %3906, %v3902
        %v3908 = vpop.permute.xlu0 %3907
        %v3910 = vadd.f32 %v3903, %v3908
        %v3911 = vadd.f32 %v3904, %v3908
        %v3912 = vlaneseq
        %v3913 = vshrl.u32 %v3912, 7
        %v3914 = vsub.s32 0, %v3913
        %v3915 = vrot.slane %v3910, %v3914
        %v3916 = vlaneseq
        %v3917 = vshrl.u32 %v3916, 7
        %v3918 = vsub.s32 0, %v3917
        %v3919 = vrot.slane %v3911, %v3918
        %v3920 = vmul.f32 %v336, %v3915
        %v3921 = vmul.f32 %v337, %v3919
        %v3922 = vmul.f32 %v338, %v3915
        %v3923 = vmul.f32 %v339, %v3919
        %v3924 = vmul.f32 %v340, %v3915
        %v3925 = vmul.f32 %v341, %v3919
        %v3926 = vmul.f32 %v342, %v3915
        %v3927 = vmul.f32 %v343, %v3919
        %v3928 = vlaneseq
        %v3929 = vshrl.u32 %v3928, 7
        %v3930 = vsub.s32 1, %v3929
        %v3931 = vrot.slane %v3910, %v3930
        %v3932 = vlaneseq
        %v3933 = vshrl.u32 %v3932, 7
        %v3934 = vsub.s32 1, %v3933
        %v3935 = vrot.slane %v3911, %v3934
        %v3936 = vmul.f32 %v2651, %v3931
        %v3937 = vmul.f32 %v2652, %v3935
        %v3938 = vmul.f32 %v2653, %v3931
        %v3939 = vmul.f32 %v2654, %v3935
        %v3940 = vmul.f32 %v2655, %v3931
        %v3941 = vmul.f32 %v2656, %v3935
        %v3942 = vmul.f32 %v2657, %v3931
        %v3943 = vmul.f32 %v2658, %v3935
        %v3944 = vadd.f32 %v3920, %v3936
        %v3945 = vadd.f32 %v3921, %v3937
        %v3946 = vadd.f32 %v3922, %v3938
        %v3947 = vadd.f32 %v3923, %v3939
        %v3948 = vadd.f32 %v3924, %v3940
        %v3949 = vadd.f32 %v3925, %v3941
        %v3950 = vadd.f32 %v3926, %v3942
        %v3951 = vadd.f32 %v3927, %v3943
        %3952 = vst [vmem:[%s317] sm:$0xff] %v3944
        %3953 = vst [vmem:[%s317 + $0x8] sm:$0xff] %v3945
        %3954 = vst [vmem:[%s317 + $0x10] sm:$0xff] %v3946
        %3955 = vst [vmem:[%s317 + $0x18] sm:$0xff] %v3947
        %3956 = vst [vmem:[%s317 + $0x20] sm:$0xff] %v3948
        %3957 = vst [vmem:[%s317 + $0x28] sm:$0xff] %v3949
        %3958 = vst [vmem:[%s317 + $0x30] sm:$0xff] %v3950
        %3959 = vst [vmem:[%s317 + $0x38] sm:$0xff] %v3951
        %v3960 = vlaneseq
        %v3961 = vshrl.u32 %v3960, 7
        %v3962 = vsub.s32 2, %v3961
        %v3963 = vrot.slane %v3910, %v3962
        %v3964 = vlaneseq
        %v3965 = vshrl.u32 %v3964, 7
        %v3966 = vsub.s32 2, %v3965
        %v3967 = vrot.slane %v3911, %v3966
        %v3968 = vmul.f32 %v344, %v3963
        %v3969 = vmul.f32 %v345, %v3967
        %v3970 = vmul.f32 %v346, %v3963
        %v3971 = vmul.f32 %v347, %v3967
        %v3972 = vmul.f32 %v348, %v3963
        %v3973 = vmul.f32 %v349, %v3967
        %v3974 = vmul.f32 %v350, %v3963
        %v3975 = vmul.f32 %v351, %v3967
        %v3976 = vlaneseq
        %v3977 = vshrl.u32 %v3976, 7
        %v3978 = vsub.s32 3, %v3977
        %v3979 = vrot.slane %v3910, %v3978
        %v3980 = vlaneseq
        %v3981 = vshrl.u32 %v3980, 7
        %v3982 = vsub.s32 3, %v3981
        %v3983 = vrot.slane %v3911, %v3982
        %v3984 = vmul.f32 %v2659, %v3979
        %v3985 = vmul.f32 %v2660, %v3983
        %v3986 = vmul.f32 %v2661, %v3979
        %v3987 = vmul.f32 %v2662, %v3983
        %v3988 = vmul.f32 %v2663, %v3979
        %v3989 = vmul.f32 %v2664, %v3983
        %v3990 = vmul.f32 %v2665, %v3979
        %v3991 = vmul.f32 %v2666, %v3983
        %v3992 = vadd.f32 %v3968, %v3984
        %v3993 = vadd.f32 %v3969, %v3985
        %v3994 = vadd.f32 %v3970, %v3986
        %v3995 = vadd.f32 %v3971, %v3987
        %v3996 = vadd.f32 %v3972, %v3988
        %v3997 = vadd.f32 %v3973, %v3989
        %v3998 = vadd.f32 %v3974, %v3990
        %v3999 = vadd.f32 %v3975, %v3991
        %4000 = vst [vmem:[%s324] sm:$0xff] %v3992
        %4001 = vst [vmem:[%s324 + $0x8] sm:$0xff] %v3993
        %4002 = vst [vmem:[%s324 + $0x10] sm:$0xff] %v3994
        %4003 = vst [vmem:[%s324 + $0x18] sm:$0xff] %v3995
        %4004 = vst [vmem:[%s324 + $0x20] sm:$0xff] %v3996
        %4005 = vst [vmem:[%s324 + $0x28] sm:$0xff] %v3997
        %4006 = vst [vmem:[%s324 + $0x30] sm:$0xff] %v3998
        %4007 = vst [vmem:[%s324 + $0x38] sm:$0xff] %v3999
        %s4008 = sand.u32 %s191, 1
        %s4009 = scalar_lea.sflag [#allocation3], %s4008
        %s4010 = sand.u32 %s191, 1
        %s4011 = smul.addr %s4010, 64
        %s4012 = scalar_lea.vmem [#allocation2], %s4011
        %s4013 = sand.u32 %s217, 1
        %s4014 = scalar_lea.sflag [#allocation5], %s4013
        %s4015 = sand.u32 %s217, 1
        %s4016 = smul.addr %s4015, 64
        %s4017 = scalar_lea.vmem [#allocation4], %s4016
        // Predicated region
        $region49: #{tpu_custom_call.1} parent=47 // pred_check
          %p4018 = pneg %p201
        $region50: #{tpu_custom_call.1} parent=47 // pred_check_branch
          %4020 = sbr.rel (%p4018) target = $region52
        $region51: #{tpu_custom_call.1} parent=47 // pred_region
          %s4022 = ssub.s32 1024, 1024
          %4023 = vsyncadd %s4009, %s4022
          %s4024 = smul.addr %s26, 8
          %s4025 = smul.addr %s4024, 128
          %s4026 = scalar_lea.hbm %s7, %s4025
          %s4027 = sshll.u32 %s4012, 4
          %s4028 = int_to_ptr.vmem [resolvable:$true] %s4027
          %4033 = dma.vmem_to_hbm [thread:$0]  %s4028, 1024, %s4026, %s4009, 256, 256, 16
        $region52: #{tpu_custom_call.1} parent=47 // pred_fallthru
          _
        // Predicated region
        $region53: #{tpu_custom_call.1} parent=47 // pred_check
          %p4034 = pneg %p227
        $region54: #{tpu_custom_call.1} parent=47 // pred_check_branch
          %4036 = sbr.rel (%p4034) target = $region56
        $region55: #{tpu_custom_call.1} parent=47 // pred_region
          %s4038 = ssub.s32 1024, 1024
          %4039 = vsyncadd %s4014, %s4038
          %s4040 = smul.addr %s26, 8
          %s4041 = smul.addr %s4040, 128
          %s4042 = scalar_lea.hbm %s8, %s4041
          %s4043 = sshll.u32 %s4017, 4
          %s4044 = int_to_ptr.vmem [resolvable:$true] %s4043
          %4049 = dma.vmem_to_hbm [thread:$0]  %s4044, 1024, %s4042, %s4014, 256, 256, 16
        $region56: #{tpu_custom_call.1} parent=47 // pred_fallthru
          _
      $region48: #{tpu_custom_call.1} parent=5 // pred_fallthru
        _
      %p4050 = scmp.le.s32.totalorder 2, %s21
      // Predicated region
      $region57: #{tpu_custom_call.1} parent=5 // pred_check
        %p4051 = pneg %p4050
      $region58: #{tpu_custom_call.1} parent=5 // pred_check_branch
        %4053 = sbr.rel (%p4051) target = $region60
      $region59: #{tpu_custom_call.1} parent=5 // pred_region
        %s4054 = ssub.s32 %s21, 2
        // Predicated region
        $region61: #{tpu_custom_call.1} parent=59 // pred_check
          %p4055 = pneg %p207
        $region62: #{tpu_custom_call.1} parent=59 // pred_check_branch
          %4057 = sbr.rel (%p4055) target = $region64
        $region63: #{tpu_custom_call.1} parent=59 // pred_region
          %s4058 = sand.u32 %s192, 1
          %s4059 = scalar_lea.sflag [#allocation3], %s4058
          %s4060 = sand.u32 %s192, 1
          %s4061 = smul.addr %s4060, 64
          %s4062 = scalar_lea.vmem [#allocation2], %s4061
          %4063 = dma.done %s4059, 1024
        $region64: #{tpu_custom_call.1} parent=59 // pred_fallthru
          _
        // Predicated region
        $region65: #{tpu_custom_call.1} parent=59 // pred_check
          %p4064 = pneg %p233
        $region66: #{tpu_custom_call.1} parent=59 // pred_check_branch
          %4066 = sbr.rel (%p4064) target = $region68
        $region67: #{tpu_custom_call.1} parent=59 // pred_region
          %s4067 = sand.u32 %s218, 1
          %s4068 = scalar_lea.sflag [#allocation5], %s4067
          %s4069 = sand.u32 %s218, 1
          %s4070 = smul.addr %s4069, 64
          %s4071 = scalar_lea.vmem [#allocation4], %s4070
          %4072 = dma.done %s4068, 1024
        $region68: #{tpu_custom_call.1} parent=59 // pred_fallthru
          _
      $region60: #{tpu_custom_call.1} parent=5 // pred_fallthru
        _
    $region6: #{tpu_custom_call.1} parent=1 // loop_footer
      %s25 = sadd.s32 1, %s21
    $region7: #{tpu_custom_call.1} parent=1 // loop_footer_branch
      %20 = sbr.rel target = $region3
    $region8: #{tpu_custom_call.1} parent=1 // loop_exit
      _
    %4073 = vsyncpa [#allocation3], 1
    %s4074 = scalar_lea.sflag [#allocation3], 1
    %4075 = vsyncpa %s4074, 1
    %4076 = vsyncpa [#allocation5], 1
    %s4077 = scalar_lea.sflag [#allocation5], 1
    %4078 = vsyncpa %s4077, 1

</llo_original>
